<compile_context>
chip_gen: v6e
topology: v6e:2x2x1
jax: 0.10.0
libtpu: 0.0.40
codegen_flags: <defaults>
</compile_context>

<pallas_src>
import jax
import jax.numpy as jnp
from jax.experimental import pallas as pl
from jax.experimental.pallas import tpu as pltpu

D = 512           # feature width (fixed by the module)
TB = 512          # max batch tile (MXU-filling, sublane-aligned)


def _gen_feat_kernel(x_ref, w1_ref, w2_ref, w3_ref, b_ref, o_ref):
    # Weights arrive pre-transposed to (in, out) and pre-cast to bf16.
    # Activations are cast to bf16 just before each MXU matmul; accumulation,
    # bias add and the nonlinearity run in f32 on the VPU.
    x = x_ref[...].astype(jnp.bfloat16)

    # Layer 1: Linear + LeakyReLU(0.2)
    h = jnp.dot(x, w1_ref[...], preferred_element_type=jnp.float32)
    h = h + b_ref[0:1, :]
    h = jnp.where(h >= 0, h, 0.2 * h)

    # Layer 2: Linear + LeakyReLU(0.2)
    h = jnp.dot(h.astype(jnp.bfloat16), w2_ref[...],
                preferred_element_type=jnp.float32)
    h = h + b_ref[1:2, :]
    h = jnp.where(h >= 0, h, 0.2 * h)

    # Layer 3: Linear + ReLU
    h = jnp.dot(h.astype(jnp.bfloat16), w3_ref[...],
                preferred_element_type=jnp.float32)
    h = h + b_ref[2:3, :]
    o_ref[...] = jnp.maximum(h, 0.0).astype(o_ref.dtype)


def prepare_params(params):
    """One-time glue OUTSIDE the hot path: transpose PyTorch (out,in) weights
    to (in,out), cast them to bf16 for the MXU, and stack the biases into a
    single (3, D) f32 block (one DMA instead of three tiny ones)."""
    w1 = params["w1"].T.astype(jnp.bfloat16)
    w2 = params["w2"].T.astype(jnp.bfloat16)
    w3 = params["w3"].T.astype(jnp.bfloat16)
    b = jnp.stack([params["b1"], params["b2"], params["b3"]], axis=0)
    return w1, w2, w3, b.astype(jnp.float32)


def _round_up(a, m):
    return -(-a // m) * m


def _pick_tile(B, tb_max):
    """Batch tile: multiple of 8 (f32 sublane), capped at tb_max, and chosen
    so there are >=2 grid steps whenever the batch allows it (keeps both
    TensorCores of a dual-TC chip busy on the 'parallel' batch axis)."""
    if B <= 8:
        return B                       # single full-extent block, no padding
    if B <= tb_max:
        half = -(-B // 2)              # ceil(B / 2)
        return min(tb_max, _round_up(half, 8))
    return tb_max


def generator_feature(x, prepared, *, tb_max=TB):
    """x: (B, 512) float32.  prepared: output of prepare_params()."""
    w1, w2, w3, b = prepared
    B, Din = x.shape
    assert Din == D

    tb = _pick_tile(B, tb_max)
    grid_b = pl.cdiv(B, tb)            # ragged tail handled by partial block

    out_bytes = jnp.dtype(x.dtype).itemsize
    cost = pl.CostEstimate(
        flops=6 * B * D * D,                                   # 3 matmuls
        transcendentals=0,
        bytes_accessed=B * D * (jnp.dtype(x.dtype).itemsize + out_bytes)
        + 3 * D * D * jnp.dtype(w1.dtype).itemsize
        + 3 * D * 4,
    )

    def run(single_buffer_invariants):
        extra = {}
        if single_buffer_invariants:
            # Grid-invariant blocks (index_map always (0,0)) don't need
            # double buffering.
            extra["pipeline_mode"] = pl.Buffered(1)
        full = lambda i: (0, 0)
        w_spec = pl.BlockSpec((D, D), full, **extra)
        b_spec = pl.BlockSpec((3, D), full, **extra)

        return pl.pallas_call(
            _gen_feat_kernel,
            out_shape=jax.ShapeDtypeStruct((B, D), x.dtype),
            grid_spec=pltpu.PrefetchScalarGridSpec(
                num_scalar_prefetch=0,
                grid=(grid_b,),
                in_specs=[
                    pl.BlockSpec((tb, D), lambda i: (i, 0)),   # x tile
                    w_spec, w_spec, w_spec,                    # W1^T, W2^T, W3^T
                    b_spec,                                    # stacked biases
                ],
                out_specs=pl.BlockSpec((tb, D), lambda i: (i, 0)),
            ),
            compiler_params=pltpu.CompilerParams(
                dimension_semantics=("parallel",)),
            cost_estimate=cost,
        )(x, w1, w2, w3, b)

    try:
        return run(True)
    except Exception:
        # Fallback for jax versions that reject pl.Buffered(1): identical
        # semantics, just default double-buffered weight/bias blocks.
        return run(False)


def _reference(x, params):
    """Pure-JAX f32 reference mirroring the PyTorch forward."""
    h = x @ params["w1"].T + params["b1"]
    h = jnp.where(h >= 0, h, 0.2 * h)
    h = h @ params["w2"].T + params["b2"]
    h = jnp.where(h >= 0, h, 0.2 * h)
    h = h @ params["w3"].T + params["b3"]
    return jnp.maximum(h, 0.0)


if __name__ == "__main__":
    key = jax.random.PRNGKey(0)
    keys = jax.random.split(key, 8)

    # Deterministic synthetic params, PyTorch Linear layout: W (out,in), b (out,)
    scale = 1.0 / jnp.sqrt(jnp.float32(D))
    params = {
        "w1": jax.random.uniform(keys[1], (D, D), jnp.float32, -scale, scale),
        "b1": jax.random.uniform(keys[2], (D,), jnp.float32, -scale, scale),
        "w2": jax.random.uniform(keys[3], (D, D), jnp.float32, -scale, scale),
        "b2": jax.random.uniform(keys[4], (D,), jnp.float32, -scale, scale),
        "w3": jax.random.uniform(keys[5], (D, D), jnp.float32, -scale, scale),
        "b3": jax.random.uniform(keys[6], (D,), jnp.float32, -scale, scale),
    }
    prepared = prepare_params(params)          # one-time, outside hot path

    # Case 1: small batch that exactly fits one tile (B=8, single grid step).
    B1 = 8
    x1 = jax.random.normal(keys[0], (B1, D), dtype=jnp.float32)
    out1 = jax.block_until_ready(generator_feature(x1, prepared))
    ref1 = _reference(x1, params)
    assert out1.shape == (B1, D)
    err1 = float(jnp.max(jnp.abs(out1 - ref1)))
    assert jnp.allclose(out1, ref1, atol=5e-2, rtol=5e-2), err1

    # Case 2: small ragged batch (B=20 -> 2 grid steps, partial tail block,
    # no padding copies of x).
    B2 = 20
    x2 = jax.random.normal(keys[7], (B2, D), dtype=jnp.float32)
    out2 = jax.block_until_ready(generator_feature(x2, prepared))
    ref2 = _reference(x2, params)
    assert out2.shape == (B2, D)
    err2 = float(jnp.max(jnp.abs(out2 - ref2)))
    assert jnp.allclose(out2, ref2, atol=5e-2, rtol=5e-2), err2

    print("KERNEL_OK")
</pallas_src>

<mosaic_0001>
module attributes {stable_mosaic.version = 11 : i64} {
  func.func @_gen_feat_kernel(%arg0: i32, %arg1: memref<8x512xf32, #tpu.memory_space<vmem>>, %arg2: memref<512x512xbf16, #tpu.memory_space<vmem>>, %arg3: memref<512x512xbf16, #tpu.memory_space<vmem>>, %arg4: memref<512x512xbf16, #tpu.memory_space<vmem>>, %arg5: memref<3x512xf32, #tpu.memory_space<vmem>>, %arg6: memref<8x512xf32, #tpu.memory_space<vmem>>) attributes {dimension_semantics = [#tpu.dimension_semantics<parallel>], iteration_bounds = array<i64: 1>, scalar_prefetch = 0 : i64, scratch_operands = 0 : i64, tpu.core_type = #tpu.core_type<tc>, window_params = [{transform_indices = @transform_0, window_bounds = array<i64: 8, 512>}, {pipeline_mode = #tpu.pipeline_mode<synchronous>, transform_indices = @transform_1, window_bounds = array<i64: 512, 512>}, {pipeline_mode = #tpu.pipeline_mode<synchronous>, transform_indices = @transform_2, window_bounds = array<i64: 512, 512>}, {pipeline_mode = #tpu.pipeline_mode<synchronous>, transform_indices = @transform_3, window_bounds = array<i64: 512, 512>}, {pipeline_mode = #tpu.pipeline_mode<synchronous>, transform_indices = @transform_4, window_bounds = array<i64: 3, 512>}, {transform_indices = @transform_5, window_bounds = array<i64: 8, 512>}]} {
    %c0 = arith.constant 0 : index
    %c0_0 = arith.constant 0 : index
    %0 = vector.load %arg1[%c0, %c0_0] : memref<8x512xf32, #tpu.memory_space<vmem>>, vector<8x512xf32>
    %1 = arith.truncf %0 : vector<8x512xf32> to vector<8x512xbf16>
    %c0_1 = arith.constant 0 : index
    %c0_2 = arith.constant 0 : index
    %2 = vector.load %arg2[%c0_1, %c0_2] : memref<512x512xbf16, #tpu.memory_space<vmem>>, vector<512x512xbf16>
    %cst = arith.constant dense<0.000000e+00> : vector<8x512xf32>
    %3 = tpu.matmul %1, %2, %cst {dimension_numbers = #tpu.dot_dimension_numbers<[1], [0], [0], [1], [0, 0, 1, 1], [], []>} : vector<8x512xbf16>, vector<512x512xbf16>, vector<8x512xf32> -> vector<8x512xf32>
    %c0_3 = arith.constant 0 : index
    %c0_4 = arith.constant 0 : index
    %4 = vector.load %arg5[%c0_3, %c0_4] : memref<3x512xf32, #tpu.memory_space<vmem>>, vector<1x512xf32>
    %5 = vector.broadcast %4 : vector<1x512xf32> to vector<8x512xf32>
    %6 = arith.addf %3, %5 : vector<8x512xf32>
    %cst_5 = arith.constant 0.000000e+00 : f32
    %7 = vector.broadcast %cst_5 : f32 to vector<8x512xf32>
    %8 = arith.cmpf oge, %6, %7 : vector<8x512xf32>
    %cst_6 = arith.constant 2.000000e-01 : f32
    %9 = vector.broadcast %cst_6 : f32 to vector<8x512xf32>
    %10 = arith.mulf %9, %6 : vector<8x512xf32>
    %11 = arith.select %8, %6, %10 : vector<8x512xi1>, vector<8x512xf32>
    %12 = arith.truncf %11 : vector<8x512xf32> to vector<8x512xbf16>
    %c0_7 = arith.constant 0 : index
    %c0_8 = arith.constant 0 : index
    %13 = vector.load %arg3[%c0_7, %c0_8] : memref<512x512xbf16, #tpu.memory_space<vmem>>, vector<512x512xbf16>
    %cst_9 = arith.constant dense<0.000000e+00> : vector<8x512xf32>
    %14 = tpu.matmul %12, %13, %cst_9 {dimension_numbers = #tpu.dot_dimension_numbers<[1], [0], [0], [1], [0, 0, 1, 1], [], []>} : vector<8x512xbf16>, vector<512x512xbf16>, vector<8x512xf32> -> vector<8x512xf32>
    %c1 = arith.constant 1 : index
    %c0_10 = arith.constant 0 : index
    %15 = vector.load %arg5[%c1, %c0_10] : memref<3x512xf32, #tpu.memory_space<vmem>>, vector<1x512xf32>
    %16 = vector.broadcast %15 : vector<1x512xf32> to vector<8x512xf32>
    %17 = arith.addf %14, %16 : vector<8x512xf32>
    %cst_11 = arith.constant 0.000000e+00 : f32
    %18 = vector.broadcast %cst_11 : f32 to vector<8x512xf32>
    %19 = arith.cmpf oge, %17, %18 : vector<8x512xf32>
    %cst_12 = arith.constant 2.000000e-01 : f32
    %20 = vector.broadcast %cst_12 : f32 to vector<8x512xf32>
    %21 = arith.mulf %20, %17 : vector<8x512xf32>
    %22 = arith.select %19, %17, %21 : vector<8x512xi1>, vector<8x512xf32>
    %23 = arith.truncf %22 : vector<8x512xf32> to vector<8x512xbf16>
    %c0_13 = arith.constant 0 : index
    %c0_14 = arith.constant 0 : index
    %24 = vector.load %arg4[%c0_13, %c0_14] : memref<512x512xbf16, #tpu.memory_space<vmem>>, vector<512x512xbf16>
    %cst_15 = arith.constant dense<0.000000e+00> : vector<8x512xf32>
    %25 = tpu.matmul %23, %24, %cst_15 {dimension_numbers = #tpu.dot_dimension_numbers<[1], [0], [0], [1], [0, 0, 1, 1], [], []>} : vector<8x512xbf16>, vector<512x512xbf16>, vector<8x512xf32> -> vector<8x512xf32>
    %c2 = arith.constant 2 : index
    %c0_16 = arith.constant 0 : index
    %26 = vector.load %arg5[%c2, %c0_16] : memref<3x512xf32, #tpu.memory_space<vmem>>, vector<1x512xf32>
    %27 = vector.broadcast %26 : vector<1x512xf32> to vector<8x512xf32>
    %28 = arith.addf %25, %27 : vector<8x512xf32>
    %cst_17 = arith.constant 0.000000e+00 : f32
    %29 = vector.broadcast %cst_17 : f32 to vector<8x512xf32>
    %30 = arith.maximumf %28, %29 : vector<8x512xf32>
    %c0_18 = arith.constant 0 : index
    %c0_19 = arith.constant 0 : index
    %31 = vector.load %arg6[%c0_18, %c0_19] : memref<8x512xf32, #tpu.memory_space<vmem>>, vector<8x512xf32>
    tpu.vector_store %arg6[%c0_18, %c0_19], %30 {strides = array<i32>} : memref<8x512xf32, #tpu.memory_space<vmem>>, vector<8x512xf32>,
    return
  }
  func.func @transform_0(%arg0: i32) -> (i32, i32) {
    %c0_i32 = arith.constant 0 : i32
    %c0_i32_0 = arith.constant 0 : i32
    return %arg0, %c0_i32 : i32, i32
  }
  func.func @transform_1(%arg0: i32) -> (i32, i32) {
    %c0_i32 = arith.constant 0 : i32
    %c0_i32_0 = arith.constant 0 : i32
    %c0_i32_1 = arith.constant 0 : i32
    return %c0_i32, %c0_i32_0 : i32, i32
  }
  func.func @transform_2(%arg0: i32) -> (i32, i32) {
    %c0_i32 = arith.constant 0 : i32
    %c0_i32_0 = arith.constant 0 : i32
    %c0_i32_1 = arith.constant 0 : i32
    return %c0_i32, %c0_i32_0 : i32, i32
  }
  func.func @transform_3(%arg0: i32) -> (i32, i32) {
    %c0_i32 = arith.constant 0 : i32
    %c0_i32_0 = arith.constant 0 : i32
    %c0_i32_1 = arith.constant 0 : i32
    return %c0_i32, %c0_i32_0 : i32, i32
  }
  func.func @transform_4(%arg0: i32) -> (i32, i32) {
    %c0_i32 = arith.constant 0 : i32
    %c0_i32_0 = arith.constant 0 : i32
    %c0_i32_1 = arith.constant 0 : i32
    return %c0_i32, %c0_i32_0 : i32, i32
  }
  func.func @transform_5(%arg0: i32) -> (i32, i32) {
    %c0_i32 = arith.constant 0 : i32
    %c0_i32_0 = arith.constant 0 : i32
    return %arg0, %c0_i32 : i32, i32
  }
}

module attributes {stable_mosaic.version = 11 : i64} {
  func.func @_gen_feat_kernel(%arg0: i32, %arg1: memref<8x512xf32, #tpu.memory_space<vmem>>, %arg2: memref<512x512xbf16, #tpu.memory_space<vmem>>, %arg3: memref<512x512xbf16, #tpu.memory_space<vmem>>, %arg4: memref<512x512xbf16, #tpu.memory_space<vmem>>, %arg5: memref<3x512xf32, #tpu.memory_space<vmem>>, %arg6: memref<8x512xf32, #tpu.memory_space<vmem>>) attributes {dimension_semantics = [#tpu.dimension_semantics<parallel>], iteration_bounds = array<i64: 1>, scalar_prefetch = 0 : i64, scratch_operands = 0 : i64, tpu.core_type = #tpu.core_type<tc>, window_params = [{transform_indices = @transform_0, window_bounds = array<i64: 8, 512>}, {pipeline_mode = #tpu.pipeline_mode<synchronous>, transform_indices = @transform_1, window_bounds = array<i64: 512, 512>}, {pipeline_mode = #tpu.pipeline_mode<synchronous>, transform_indices = @transform_2, window_bounds = array<i64: 512, 512>}, {pipeline_mode = #tpu.pipeline_mode<synchronous>, transform_indices = @transform_3, window_bounds = array<i64: 512, 512>}, {pipeline_mode = #tpu.pipeline_mode<synchronous>, transform_indices = @transform_4, window_bounds = array<i64: 3, 512>}, {transform_indices = @transform_5, window_bounds = array<i64: 8, 512>}]} {
    %c0 = arith.constant 0 : index
    %c0_0 = arith.constant 0 : index
    %0 = vector.load %arg1[%c0, %c0_0] : memref<8x512xf32, #tpu.memory_space<vmem>>, vector<8x512xf32>
    %1 = arith.truncf %0 : vector<8x512xf32> to vector<8x512xbf16>
    %c0_1 = arith.constant 0 : index
    %c0_2 = arith.constant 0 : index
    %2 = vector.load %arg2[%c0_1, %c0_2] : memref<512x512xbf16, #tpu.memory_space<vmem>>, vector<512x512xbf16>
    %cst = arith.constant dense<0.000000e+00> : vector<8x512xf32>
    %3 = tpu.matmul %1, %2, %cst {dimension_numbers = #tpu.dot_dimension_numbers<[1], [0], [0], [1], [0, 0, 1, 1], [], []>} : vector<8x512xbf16>, vector<512x512xbf16>, vector<8x512xf32> -> vector<8x512xf32>
    %c0_3 = arith.constant 0 : index
    %c0_4 = arith.constant 0 : index
    %4 = vector.load %arg5[%c0_3, %c0_4] : memref<3x512xf32, #tpu.memory_space<vmem>>, vector<1x512xf32>
    %5 = vector.broadcast %4 : vector<1x512xf32> to vector<8x512xf32>
    %6 = arith.addf %3, %5 : vector<8x512xf32>
    %cst_5 = arith.constant 0.000000e+00 : f32
    %7 = vector.broadcast %cst_5 : f32 to vector<8x512xf32>
    %8 = arith.cmpf oge, %6, %7 : vector<8x512xf32>
    %cst_6 = arith.constant 2.000000e-01 : f32
    %9 = vector.broadcast %cst_6 : f32 to vector<8x512xf32>
    %10 = arith.mulf %9, %6 : vector<8x512xf32>
    %11 = arith.select %8, %6, %10 : vector<8x512xi1>, vector<8x512xf32>
    %12 = arith.truncf %11 : vector<8x512xf32> to vector<8x512xbf16>
    %c0_7 = arith.constant 0 : index
    %c0_8 = arith.constant 0 : index
    %13 = vector.load %arg3[%c0_7, %c0_8] : memref<512x512xbf16, #tpu.memory_space<vmem>>, vector<512x512xbf16>
    %cst_9 = arith.constant dense<0.000000e+00> : vector<8x512xf32>
    %14 = tpu.matmul %12, %13, %cst_9 {dimension_numbers = #tpu.dot_dimension_numbers<[1], [0], [0], [1], [0, 0, 1, 1], [], []>} : vector<8x512xbf16>, vector<512x512xbf16>, vector<8x512xf32> -> vector<8x512xf32>
    %c1 = arith.constant 1 : index
    %c0_10 = arith.constant 0 : index
    %15 = vector.load %arg5[%c1, %c0_10] : memref<3x512xf32, #tpu.memory_space<vmem>>, vector<1x512xf32>
    %16 = vector.broadcast %15 : vector<1x512xf32> to vector<8x512xf32>
    %17 = arith.addf %14, %16 : vector<8x512xf32>
    %cst_11 = arith.constant 0.000000e+00 : f32
    %18 = vector.broadcast %cst_11 : f32 to vector<8x512xf32>
    %19 = arith.cmpf oge, %17, %18 : vector<8x512xf32>
    %cst_12 = arith.constant 2.000000e-01 : f32
    %20 = vector.broadcast %cst_12 : f32 to vector<8x512xf32>
    %21 = arith.mulf %20, %17 : vector<8x512xf32>
    %22 = arith.select %19, %17, %21 : vector<8x512xi1>, vector<8x512xf32>
    %23 = arith.truncf %22 : vector<8x512xf32> to vector<8x512xbf16>
    %c0_13 = arith.constant 0 : index
    %c0_14 = arith.constant 0 : index
    %24 = vector.load %arg4[%c0_13, %c0_14] : memref<512x512xbf16, #tpu.memory_space<vmem>>, vector<512x512xbf16>
    %cst_15 = arith.constant dense<0.000000e+00> : vector<8x512xf32>
    %25 = tpu.matmul %23, %24, %cst_15 {dimension_numbers = #tpu.dot_dimension_numbers<[1], [0], [0], [1], [0, 0, 1, 1], [], []>} : vector<8x512xbf16>, vector<512x512xbf16>, vector<8x512xf32> -> vector<8x512xf32>
    %c2 = arith.constant 2 : index
    %c0_16 = arith.constant 0 : index
    %26 = vector.load %arg5[%c2, %c0_16] : memref<3x512xf32, #tpu.memory_space<vmem>>, vector<1x512xf32>
    %27 = vector.broadcast %26 : vector<1x512xf32> to vector<8x512xf32>
    %28 = arith.addf %25, %27 : vector<8x512xf32>
    %cst_17 = arith.constant 0.000000e+00 : f32
    %29 = vector.broadcast %cst_17 : f32 to vector<8x512xf32>
    %30 = arith.maximumf %28, %29 : vector<8x512xf32>
    %c0_18 = arith.constant 0 : index
    %c0_19 = arith.constant 0 : index
    %31 = vector.load %arg6[%c0_18, %c0_19] : memref<8x512xf32, #tpu.memory_space<vmem>>, vector<8x512xf32>
    tpu.vector_store %arg6[%c0_18, %c0_19], %30 {strides = array<i32>} : memref<8x512xf32, #tpu.memory_space<vmem>>, vector<8x512xf32>,
    return
  }
  func.func @transform_0(%arg0: i32) -> (i32, i32) {
    %c0_i32 = arith.constant 0 : i32
    %c0_i32_0 = arith.constant 0 : i32
    return %arg0, %c0_i32 : i32, i32
  }
  func.func @transform_1(%arg0: i32) -> (i32, i32) {
    %c0_i32 = arith.constant 0 : i32
    %c0_i32_0 = arith.constant 0 : i32
    %c0_i32_1 = arith.constant 0 : i32
    return %c0_i32, %c0_i32_0 : i32, i32
  }
  func.func @transform_2(%arg0: i32) -> (i32, i32) {
    %c0_i32 = arith.constant 0 : i32
    %c0_i32_0 = arith.constant 0 : i32
    %c0_i32_1 = arith.constant 0 : i32
    return %c0_i32, %c0_i32_0 : i32, i32
  }
  func.func @transform_3(%arg0: i32) -> (i32, i32) {
    %c0_i32 = arith.constant 0 : i32
    %c0_i32_0 = arith.constant 0 : i32
    %c0_i32_1 = arith.constant 0 : i32
    return %c0_i32, %c0_i32_0 : i32, i32
  }
  func.func @transform_4(%arg0: i32) -> (i32, i32) {
    %c0_i32 = arith.constant 0 : i32
    %c0_i32_0 = arith.constant 0 : i32
    %c0_i32_1 = arith.constant 0 : i32
    return %c0_i32, %c0_i32_0 : i32, i32
  }
  func.func @transform_5(%arg0: i32) -> (i32, i32) {
    %c0_i32 = arith.constant 0 : i32
    %c0_i32_0 = arith.constant 0 : i32
    return %arg0, %c0_i32 : i32, i32
  }
}

</mosaic_0001>

<llo_original>
// kernel: tpu_custom_call.1
$region0: #{tpu_custom_call.1}
  #allocation0 [shape = 'u32[]', space=smem, size = 0x4, offset = 0x4, fixed_abs, tag = 'smem constant byte address 0x4 - core index']
  #allocation1 [shape = 'u32[144,128]{1,0:T(1,128)}', space=vmem, size = 0x12000, scoped, tag = 'internal scratch']
  %s0 = inlined_call_operand.hbm [shape: f32[8,512], index: 0, kind: input, shape index: {}]
  %s1 = inlined_call_operand.hbm [shape: bf16[512,512], index: 1, kind: input, shape index: {}]
  %s2 = inlined_call_operand.hbm [shape: bf16[512,512], index: 2, kind: input, shape index: {}]
  %s3 = inlined_call_operand.hbm [shape: bf16[512,512], index: 3, kind: input, shape index: {}]
  %s4 = inlined_call_operand.hbm [shape: f32[3,512], index: 4, kind: input, shape index: {}]
  %s5 = inlined_call_operand.hbm [shape: f32[8,512], index: 5, kind: output, shape index: {}]
  %s6 = sld [smem:[#allocation0]]
  $region50: #{tpu_custom_call.1} parent=0
    _
  %s8 = ssub.s32 1, %s6
  %s9 = scalar_select 0, %s8, %s6
  $region1: #{tpu_custom_call.1} parent=0
    #allocation2 [shape = 'u8[16384]{0}', space=vmem, size = 0x4000, scoped, tag = 'input window, operand 0, single buffered']
    #allocation3 [shape = 's32[1]{0}', space=sflag, size = 0x4, scoped, tag = 'scoped memory for tpu_custom_call.1']
    #allocation4 [shape = 's32[1]{0}', space=sflag, size = 0x4, scoped, tag = 'scoped memory for tpu_custom_call.1']
    #allocation5 [shape = 'u8[524288]{0}', space=vmem, size = 0x80000, scoped, tag = 'input window, operand 1, single buffered']
    #allocation6 [shape = 's32[1]{0}', space=sflag, size = 0x4, scoped, tag = 'scoped memory for tpu_custom_call.1']
    #allocation7 [shape = 'u8[524288]{0}', space=vmem, size = 0x80000, scoped, tag = 'input window, operand 2, single buffered']
    #allocation8 [shape = 'u8[524288]{0}', space=vmem, size = 0x80000, scoped, tag = 'input window, operand 3, single buffered']
    #allocation9 [shape = 's32[1]{0}', space=sflag, size = 0x4, scoped, tag = 'scoped memory for tpu_custom_call.1']
    #allocation10 [shape = 'u8[8192]{0}', space=vmem, size = 0x2000, scoped, tag = 'input window, operand 4, single buffered']
    #allocation11 [shape = 'u8[16384]{0}', space=vmem, size = 0x4000, scoped, tag = 'output window, operand 0, single buffered']
    %10 = vsyncpa [#allocation3], 0
    %11 = vsyncpa [#allocation6], 0
    %12 = vsyncpa [#allocation9], 0
    %13 = vsyncpa [#allocation4], 0
    // Predicated region
    $region2: #{tpu_custom_call.1} parent=1 // pred_check
      _
    $region3: #{tpu_custom_call.1} parent=1 // pred_check_branch
      %15 = sbr.rel (0) target = $region5
    $region4: #{tpu_custom_call.1} parent=1 // pred_region
      %s17 = ssub.s32 512, 512
      %18 = vsyncadd [#allocation3], %s17
      %s20 = sshll.u32 [#allocation2], 4
      %s21 = int_to_ptr.vmem [resolvable:$true] %s20
      %23 = dma.hbm_to_vmem [thread:$0]  %s0, 512, %s21, [#allocation3]
    $region5: #{tpu_custom_call.1} parent=1 // pred_fallthru
      _
    // Predicated region
    $region6: #{tpu_custom_call.1} parent=1 // pred_check
      _
    $region7: #{tpu_custom_call.1} parent=1 // pred_check_branch
      %25 = sbr.rel (0) target = $region9
    $region8: #{tpu_custom_call.1} parent=1 // pred_region
      %s27 = ssub.s32 16384, 16384
      %28 = vsyncadd [#allocation6], %s27
      %s29 = sshll.u32 [#allocation5], 4
      %s30 = int_to_ptr.vmem [resolvable:$true] %s29
      %35 = dma.hbm_to_vmem [thread:$0]  %s1, 16384, %s30, [#allocation6], 256, 256, 16
    $region9: #{tpu_custom_call.1} parent=1 // pred_fallthru
      _
    // Predicated region
    $region10: #{tpu_custom_call.1} parent=1 // pred_check
      _
    $region11: #{tpu_custom_call.1} parent=1 // pred_check_branch
      %37 = sbr.rel (0) target = $region13
    $region12: #{tpu_custom_call.1} parent=1 // pred_region
      %s39 = ssub.s32 16384, 16384
      %40 = vsyncadd [#allocation6], %s39
      %s41 = sshll.u32 [#allocation7], 4
      %s42 = int_to_ptr.vmem [resolvable:$true] %s41
      %47 = dma.hbm_to_vmem [thread:$0]  %s2, 16384, %s42, [#allocation6], 256, 256, 16
    $region13: #{tpu_custom_call.1} parent=1 // pred_fallthru
      _
    // Predicated region
    $region14: #{tpu_custom_call.1} parent=1 // pred_check
      _
    $region15: #{tpu_custom_call.1} parent=1 // pred_check_branch
      %49 = sbr.rel (0) target = $region17
    $region16: #{tpu_custom_call.1} parent=1 // pred_region
      %s51 = ssub.s32 16384, 16384
      %52 = vsyncadd [#allocation9], %s51
      %s53 = sshll.u32 [#allocation8], 4
      %s54 = int_to_ptr.vmem [resolvable:$true] %s53
      %59 = dma.hbm_to_vmem [thread:$0]  %s3, 16384, %s54, [#allocation9], 256, 256, 16
    $region17: #{tpu_custom_call.1} parent=1 // pred_fallthru
      _
    // Predicated region
    $region18: #{tpu_custom_call.1} parent=1 // pred_check
      _
    $region19: #{tpu_custom_call.1} parent=1 // pred_check_branch
      %61 = sbr.rel (0) target = $region21
    $region20: #{tpu_custom_call.1} parent=1 // pred_region
      %s63 = ssub.s32 256, 256
      %64 = vsyncadd [#allocation9], %s63
      %s66 = sshll.u32 [#allocation10], 4
      %s67 = int_to_ptr.vmem [resolvable:$true] %s66
      %69 = dma.hbm_to_vmem [thread:$0]  %s4, 256, %s67, [#allocation9]
    $region21: #{tpu_custom_call.1} parent=1 // pred_fallthru
      _
    // Predicated region
    $region22: #{tpu_custom_call.1} parent=1 // pred_check
      _
    $region23: #{tpu_custom_call.1} parent=1 // pred_check_branch
      %71 = sbr.rel (0) target = $region25
    $region24: #{tpu_custom_call.1} parent=1 // pred_region
      %72 = dma.done [#allocation3], 512
    $region25: #{tpu_custom_call.1} parent=1 // pred_fallthru
      _
    // Predicated region
    $region26: #{tpu_custom_call.1} parent=1 // pred_check
      _
    $region27: #{tpu_custom_call.1} parent=1 // pred_check_branch
      %74 = sbr.rel (0) target = $region29
    $region28: #{tpu_custom_call.1} parent=1 // pred_region
      %75 = dma.done [#allocation6], 16384
    $region29: #{tpu_custom_call.1} parent=1 // pred_fallthru
      _
    // Predicated region
    $region30: #{tpu_custom_call.1} parent=1 // pred_check
      _
    $region31: #{tpu_custom_call.1} parent=1 // pred_check_branch
      %77 = sbr.rel (0) target = $region33
    $region32: #{tpu_custom_call.1} parent=1 // pred_region
      %78 = dma.done [#allocation6], 16384
    $region33: #{tpu_custom_call.1} parent=1 // pred_fallthru
      _
    // Predicated region
    $region34: #{tpu_custom_call.1} parent=1 // pred_check
      _
    $region35: #{tpu_custom_call.1} parent=1 // pred_check_branch
      %80 = sbr.rel (0) target = $region37
    $region36: #{tpu_custom_call.1} parent=1 // pred_region
      %81 = dma.done [#allocation9], 16384
    $region37: #{tpu_custom_call.1} parent=1 // pred_fallthru
      _
    // Predicated region
    $region38: #{tpu_custom_call.1} parent=1 // pred_check
      _
    $region39: #{tpu_custom_call.1} parent=1 // pred_check_branch
      %83 = sbr.rel (0) target = $region41
    $region40: #{tpu_custom_call.1} parent=1 // pred_region
      %84 = dma.done [#allocation9], 256
    $region41: #{tpu_custom_call.1} parent=1 // pred_fallthru
      _
    %v85 = vld [vmem:[#allocation2] sm:$0xff]
    %v86 = vld [vmem:[#allocation2 + $0x8] sm:$0xff]
    %v87 = vld [vmem:[#allocation2 + $0x10] sm:$0xff]
    %v88 = vld [vmem:[#allocation2 + $0x18] sm:$0xff]
    %v89 = vpack.c.bf16 %v85, %v85
    %v90 = vpack.c.bf16 %v86, %v86
    %v91 = vpack.c.bf16 %v87, %v87
    %v92 = vpack.c.bf16 %v88, %v88
    %v93 = vld [vmem:[#allocation5] sm:$0xff]
    %v94 = vld [vmem:[#allocation5 + $0x8] sm:$0xff]
    %v95 = vld [vmem:[#allocation5 + $0x10] sm:$0xff]
    %v96 = vld [vmem:[#allocation5 + $0x18] sm:$0xff]
    %v97 = vld [vmem:[#allocation5 + $0x20] sm:$0xff]
    %v98 = vld [vmem:[#allocation5 + $0x28] sm:$0xff]
    %v99 = vld [vmem:[#allocation5 + $0x30] sm:$0xff]
    %v100 = vld [vmem:[#allocation5 + $0x38] sm:$0xff]
    %v101 = vld [vmem:[#allocation5 + $0x40] sm:$0xff]
    %v102 = vld [vmem:[#allocation5 + $0x48] sm:$0xff]
    %v103 = vld [vmem:[#allocation5 + $0x50] sm:$0xff]
    %v104 = vld [vmem:[#allocation5 + $0x58] sm:$0xff]
    %v105 = vld [vmem:[#allocation5 + $0x60] sm:$0xff]
    %v106 = vld [vmem:[#allocation5 + $0x68] sm:$0xff]
    %v107 = vld [vmem:[#allocation5 + $0x70] sm:$0xff]
    %v108 = vld [vmem:[#allocation5 + $0x78] sm:$0xff]
    %v109 = vld [vmem:[#allocation5 + $0x80] sm:$0xff]
    %v110 = vld [vmem:[#allocation5 + $0x88] sm:$0xff]
    %v111 = vld [vmem:[#allocation5 + $0x90] sm:$0xff]
    %v112 = vld [vmem:[#allocation5 + $0x98] sm:$0xff]
    %v113 = vld [vmem:[#allocation5 + $0xa0] sm:$0xff]
    %v114 = vld [vmem:[#allocation5 + $0xa8] sm:$0xff]
    %v115 = vld [vmem:[#allocation5 + $0xb0] sm:$0xff]
    %v116 = vld [vmem:[#allocation5 + $0xb8] sm:$0xff]
    %v117 = vld [vmem:[#allocation5 + $0xc0] sm:$0xff]
    %v118 = vld [vmem:[#allocation5 + $0xc8] sm:$0xff]
    %v119 = vld [vmem:[#allocation5 + $0xd0] sm:$0xff]
    %v120 = vld [vmem:[#allocation5 + $0xd8] sm:$0xff]
    %v121 = vld [vmem:[#allocation5 + $0xe0] sm:$0xff]
    %v122 = vld [vmem:[#allocation5 + $0xe8] sm:$0xff]
    %v123 = vld [vmem:[#allocation5 + $0xf0] sm:$0xff]
    %v124 = vld [vmem:[#allocation5 + $0xf8] sm:$0xff]
    %v125 = vld [vmem:[#allocation5 + $0x100] sm:$0xff]
    %v126 = vld [vmem:[#allocation5 + $0x108] sm:$0xff]
    %v127 = vld [vmem:[#allocation5 + $0x110] sm:$0xff]
    %v128 = vld [vmem:[#allocation5 + $0x118] sm:$0xff]
    %v129 = vld [vmem:[#allocation5 + $0x120] sm:$0xff]
    %v130 = vld [vmem:[#allocation5 + $0x128] sm:$0xff]
    %v131 = vld [vmem:[#allocation5 + $0x130] sm:$0xff]
    %v132 = vld [vmem:[#allocation5 + $0x138] sm:$0xff]
    %v133 = vld [vmem:[#allocation5 + $0x140] sm:$0xff]
    %v134 = vld [vmem:[#allocation5 + $0x148] sm:$0xff]
    %v135 = vld [vmem:[#allocation5 + $0x150] sm:$0xff]
    %v136 = vld [vmem:[#allocation5 + $0x158] sm:$0xff]
    %v137 = vld [vmem:[#allocation5 + $0x160] sm:$0xff]
    %v138 = vld [vmem:[#allocation5 + $0x168] sm:$0xff]
    %v139 = vld [vmem:[#allocation5 + $0x170] sm:$0xff]
    %v140 = vld [vmem:[#allocation5 + $0x178] sm:$0xff]
    %v141 = vld [vmem:[#allocation5 + $0x180] sm:$0xff]
    %v142 = vld [vmem:[#allocation5 + $0x188] sm:$0xff]
    %v143 = vld [vmem:[#allocation5 + $0x190] sm:$0xff]
    %v144 = vld [vmem:[#allocation5 + $0x198] sm:$0xff]
    %v145 = vld [vmem:[#allocation5 + $0x1a0] sm:$0xff]
    %v146 = vld [vmem:[#allocation5 + $0x1a8] sm:$0xff]
    %v147 = vld [vmem:[#allocation5 + $0x1b0] sm:$0xff]
    %v148 = vld [vmem:[#allocation5 + $0x1b8] sm:$0xff]
    %v149 = vld [vmem:[#allocation5 + $0x1c0] sm:$0xff]
    %v150 = vld [vmem:[#allocation5 + $0x1c8] sm:$0xff]
    %v151 = vld [vmem:[#allocation5 + $0x1d0] sm:$0xff]
    %v152 = vld [vmem:[#allocation5 + $0x1d8] sm:$0xff]
    %v153 = vld [vmem:[#allocation5 + $0x1e0] sm:$0xff]
    %v154 = vld [vmem:[#allocation5 + $0x1e8] sm:$0xff]
    %v155 = vld [vmem:[#allocation5 + $0x1f0] sm:$0xff]
    %v156 = vld [vmem:[#allocation5 + $0x1f8] sm:$0xff]
    %v157 = vld [vmem:[#allocation5 + $0x200] sm:$0xff]
    %v158 = vld [vmem:[#allocation5 + $0x208] sm:$0xff]
    %v159 = vld [vmem:[#allocation5 + $0x210] sm:$0xff]
    %v160 = vld [vmem:[#allocation5 + $0x218] sm:$0xff]
    %v161 = vld [vmem:[#allocation5 + $0x220] sm:$0xff]
    %v162 = vld [vmem:[#allocation5 + $0x228] sm:$0xff]
    %v163 = vld [vmem:[#allocation5 + $0x230] sm:$0xff]
    %v164 = vld [vmem:[#allocation5 + $0x238] sm:$0xff]
    %v165 = vld [vmem:[#allocation5 + $0x240] sm:$0xff]
    %v166 = vld [vmem:[#allocation5 + $0x248] sm:$0xff]
    %v167 = vld [vmem:[#allocation5 + $0x250] sm:$0xff]
    %v168 = vld [vmem:[#allocation5 + $0x258] sm:$0xff]
    %v169 = vld [vmem:[#allocation5 + $0x260] sm:$0xff]
    %v170 = vld [vmem:[#allocation5 + $0x268] sm:$0xff]
    %v171 = vld [vmem:[#allocation5 + $0x270] sm:$0xff]
    %v172 = vld [vmem:[#allocation5 + $0x278] sm:$0xff]
    %v173 = vld [vmem:[#allocation5 + $0x280] sm:$0xff]
    %v174 = vld [vmem:[#allocation5 + $0x288] sm:$0xff]
    %v175 = vld [vmem:[#allocation5 + $0x290] sm:$0xff]
    %v176 = vld [vmem:[#allocation5 + $0x298] sm:$0xff]
    %v177 = vld [vmem:[#allocation5 + $0x2a0] sm:$0xff]
    %v178 = vld [vmem:[#allocation5 + $0x2a8] sm:$0xff]
    %v179 = vld [vmem:[#allocation5 + $0x2b0] sm:$0xff]
    %v180 = vld [vmem:[#allocation5 + $0x2b8] sm:$0xff]
    %v181 = vld [vmem:[#allocation5 + $0x2c0] sm:$0xff]
    %v182 = vld [vmem:[#allocation5 + $0x2c8] sm:$0xff]
    %v183 = vld [vmem:[#allocation5 + $0x2d0] sm:$0xff]
    %v184 = vld [vmem:[#allocation5 + $0x2d8] sm:$0xff]
    %v185 = vld [vmem:[#allocation5 + $0x2e0] sm:$0xff]
    %v186 = vld [vmem:[#allocation5 + $0x2e8] sm:$0xff]
    %v187 = vld [vmem:[#allocation5 + $0x2f0] sm:$0xff]
    %v188 = vld [vmem:[#allocation5 + $0x2f8] sm:$0xff]
    %v189 = vld [vmem:[#allocation5 + $0x300] sm:$0xff]
    %v190 = vld [vmem:[#allocation5 + $0x308] sm:$0xff]
    %v191 = vld [vmem:[#allocation5 + $0x310] sm:$0xff]
    %v192 = vld [vmem:[#allocation5 + $0x318] sm:$0xff]
    %v193 = vld [vmem:[#allocation5 + $0x320] sm:$0xff]
    %v194 = vld [vmem:[#allocation5 + $0x328] sm:$0xff]
    %v195 = vld [vmem:[#allocation5 + $0x330] sm:$0xff]
    %v196 = vld [vmem:[#allocation5 + $0x338] sm:$0xff]
    %v197 = vld [vmem:[#allocation5 + $0x340] sm:$0xff]
    %v198 = vld [vmem:[#allocation5 + $0x348] sm:$0xff]
    %v199 = vld [vmem:[#allocation5 + $0x350] sm:$0xff]
    %v200 = vld [vmem:[#allocation5 + $0x358] sm:$0xff]
    %v201 = vld [vmem:[#allocation5 + $0x360] sm:$0xff]
    %v202 = vld [vmem:[#allocation5 + $0x368] sm:$0xff]
    %v203 = vld [vmem:[#allocation5 + $0x370] sm:$0xff]
    %v204 = vld [vmem:[#allocation5 + $0x378] sm:$0xff]
    %v205 = vld [vmem:[#allocation5 + $0x380] sm:$0xff]
    %v206 = vld [vmem:[#allocation5 + $0x388] sm:$0xff]
    %v207 = vld [vmem:[#allocation5 + $0x390] sm:$0xff]
    %v208 = vld [vmem:[#allocation5 + $0x398] sm:$0xff]
    %v209 = vld [vmem:[#allocation5 + $0x3a0] sm:$0xff]
    %v210 = vld [vmem:[#allocation5 + $0x3a8] sm:$0xff]
    %v211 = vld [vmem:[#allocation5 + $0x3b0] sm:$0xff]
    %v212 = vld [vmem:[#allocation5 + $0x3b8] sm:$0xff]
    %v213 = vld [vmem:[#allocation5 + $0x3c0] sm:$0xff]
    %v214 = vld [vmem:[#allocation5 + $0x3c8] sm:$0xff]
    %v215 = vld [vmem:[#allocation5 + $0x3d0] sm:$0xff]
    %v216 = vld [vmem:[#allocation5 + $0x3d8] sm:$0xff]
    %v217 = vld [vmem:[#allocation5 + $0x3e0] sm:$0xff]
    %v218 = vld [vmem:[#allocation5 + $0x3e8] sm:$0xff]
    %v219 = vld [vmem:[#allocation5 + $0x3f0] sm:$0xff]
    %v220 = vld [vmem:[#allocation5 + $0x3f8] sm:$0xff]
    %v221 = vld [vmem:[#allocation10] ss:$4 sm:$0xf]
    %v223 = vlaneseq
    %v224 = vshrl.u32 %v223, 7
    %v225 = vsub.s32 0, %v224
    %v226 = vrot.slane %v221, %v225
    %v227 = vlaneseq
    %v228 = vshrl.u32 %v227, 7
    %v229 = vsub.s32 1, %v228
    %v230 = vrot.slane %v221, %v229
    %v231 = vlaneseq
    %v232 = vshrl.u32 %v231, 7
    %v233 = vsub.s32 2, %v232
    %v234 = vrot.slane %v221, %v233
    %v235 = vlaneseq
    %v236 = vshrl.u32 %v235, 7
    %v237 = vsub.s32 3, %v236
    %v238 = vrot.slane %v221, %v237
    %v371 = vunpack.c.l.b16 %v93
    %v372 = vunpack.c.h.b16 %v93
    %v373 = vunpack.c.l.b16 %v94
    %v374 = vunpack.c.h.b16 %v94
    %v375 = vunpack.c.l.b16 %v95
    %v376 = vunpack.c.h.b16 %v95
    %v377 = vunpack.c.l.b16 %v96
    %v378 = vunpack.c.h.b16 %v96
    %v379 = vunpack.c.l.b16 %v97
    %v380 = vunpack.c.h.b16 %v97
    %v381 = vunpack.c.l.b16 %v98
    %v382 = vunpack.c.h.b16 %v98
    %v383 = vunpack.c.l.b16 %v99
    %v384 = vunpack.c.h.b16 %v99
    %v385 = vunpack.c.l.b16 %v100
    %v386 = vunpack.c.h.b16 %v100
    %v387 = vunpack.c.l.b16 %v101
    %v388 = vunpack.c.h.b16 %v101
    %v389 = vunpack.c.l.b16 %v102
    %v390 = vunpack.c.h.b16 %v102
    %v391 = vunpack.c.l.b16 %v103
    %v392 = vunpack.c.h.b16 %v103
    %v393 = vunpack.c.l.b16 %v104
    %v394 = vunpack.c.h.b16 %v104
    %v395 = vunpack.c.l.b16 %v105
    %v396 = vunpack.c.h.b16 %v105
    %v397 = vunpack.c.l.b16 %v106
    %v398 = vunpack.c.h.b16 %v106
    %v399 = vunpack.c.l.b16 %v107
    %v400 = vunpack.c.h.b16 %v107
    %v401 = vunpack.c.l.b16 %v108
    %v402 = vunpack.c.h.b16 %v108
    %v403 = vunpack.c.l.b16 %v109
    %v404 = vunpack.c.h.b16 %v109
    %v405 = vunpack.c.l.b16 %v110
    %v406 = vunpack.c.h.b16 %v110
    %v407 = vunpack.c.l.b16 %v111
    %v408 = vunpack.c.h.b16 %v111
    %v409 = vunpack.c.l.b16 %v112
    %v410 = vunpack.c.h.b16 %v112
    %v411 = vunpack.c.l.b16 %v113
    %v412 = vunpack.c.h.b16 %v113
    %v413 = vunpack.c.l.b16 %v114
    %v414 = vunpack.c.h.b16 %v114
    %v415 = vunpack.c.l.b16 %v115
    %v416 = vunpack.c.h.b16 %v115
    %v417 = vunpack.c.l.b16 %v116
    %v418 = vunpack.c.h.b16 %v116
    %v419 = vunpack.c.l.b16 %v117
    %v420 = vunpack.c.h.b16 %v117
    %v421 = vunpack.c.l.b16 %v118
    %v422 = vunpack.c.h.b16 %v118
    %v423 = vunpack.c.l.b16 %v119
    %v424 = vunpack.c.h.b16 %v119
    %v425 = vunpack.c.l.b16 %v120
    %v426 = vunpack.c.h.b16 %v120
    %v427 = vunpack.c.l.b16 %v121
    %v428 = vunpack.c.h.b16 %v121
    %v429 = vunpack.c.l.b16 %v122
    %v430 = vunpack.c.h.b16 %v122
    %v431 = vunpack.c.l.b16 %v123
    %v432 = vunpack.c.h.b16 %v123
    %v433 = vunpack.c.l.b16 %v124
    %v434 = vunpack.c.h.b16 %v124
    %v435 = vunpack.c.l.b16 %v125
    %v436 = vunpack.c.h.b16 %v125
    %v437 = vunpack.c.l.b16 %v126
    %v438 = vunpack.c.h.b16 %v126
    %v439 = vunpack.c.l.b16 %v127
    %v440 = vunpack.c.h.b16 %v127
    %v441 = vunpack.c.l.b16 %v128
    %v442 = vunpack.c.h.b16 %v128
    %v443 = vunpack.c.l.b16 %v129
    %v444 = vunpack.c.h.b16 %v129
    %v445 = vunpack.c.l.b16 %v130
    %v446 = vunpack.c.h.b16 %v130
    %v447 = vunpack.c.l.b16 %v131
    %v448 = vunpack.c.h.b16 %v131
    %v449 = vunpack.c.l.b16 %v132
    %v450 = vunpack.c.h.b16 %v132
    %v451 = vunpack.c.l.b16 %v133
    %v452 = vunpack.c.h.b16 %v133
    %v453 = vunpack.c.l.b16 %v134
    %v454 = vunpack.c.h.b16 %v134
    %v455 = vunpack.c.l.b16 %v135
    %v456 = vunpack.c.h.b16 %v135
    %v457 = vunpack.c.l.b16 %v136
    %v458 = vunpack.c.h.b16 %v136
    %v459 = vunpack.c.l.b16 %v137
    %v460 = vunpack.c.h.b16 %v137
    %v461 = vunpack.c.l.b16 %v138
    %v462 = vunpack.c.h.b16 %v138
    %v463 = vunpack.c.l.b16 %v139
    %v464 = vunpack.c.h.b16 %v139
    %v465 = vunpack.c.l.b16 %v140
    %v466 = vunpack.c.h.b16 %v140
    %v467 = vunpack.c.l.b16 %v141
    %v468 = vunpack.c.h.b16 %v141
    %v469 = vunpack.c.l.b16 %v142
    %v470 = vunpack.c.h.b16 %v142
    %v471 = vunpack.c.l.b16 %v143
    %v472 = vunpack.c.h.b16 %v143
    %v473 = vunpack.c.l.b16 %v144
    %v474 = vunpack.c.h.b16 %v144
    %v475 = vunpack.c.l.b16 %v145
    %v476 = vunpack.c.h.b16 %v145
    %v477 = vunpack.c.l.b16 %v146
    %v478 = vunpack.c.h.b16 %v146
    %v479 = vunpack.c.l.b16 %v147
    %v480 = vunpack.c.h.b16 %v147
    %v481 = vunpack.c.l.b16 %v148
    %v482 = vunpack.c.h.b16 %v148
    %v483 = vunpack.c.l.b16 %v149
    %v484 = vunpack.c.h.b16 %v149
    %v485 = vunpack.c.l.b16 %v150
    %v486 = vunpack.c.h.b16 %v150
    %v487 = vunpack.c.l.b16 %v151
    %v488 = vunpack.c.h.b16 %v151
    %v489 = vunpack.c.l.b16 %v152
    %v490 = vunpack.c.h.b16 %v152
    %v491 = vunpack.c.l.b16 %v153
    %v492 = vunpack.c.h.b16 %v153
    %v493 = vunpack.c.l.b16 %v154
    %v494 = vunpack.c.h.b16 %v154
    %v495 = vunpack.c.l.b16 %v155
    %v496 = vunpack.c.h.b16 %v155
    %v497 = vunpack.c.l.b16 %v156
    %v498 = vunpack.c.h.b16 %v156
    %v499 = vunpack.c.l.b16 %v157
    %v500 = vunpack.c.h.b16 %v157
    %v501 = vunpack.c.l.b16 %v158
    %v502 = vunpack.c.h.b16 %v158
    %v503 = vunpack.c.l.b16 %v159
    %v504 = vunpack.c.h.b16 %v159
    %v505 = vunpack.c.l.b16 %v160
    %v506 = vunpack.c.h.b16 %v160
    %v507 = vunpack.c.l.b16 %v161
    %v508 = vunpack.c.h.b16 %v161
    %v509 = vunpack.c.l.b16 %v162
    %v510 = vunpack.c.h.b16 %v162
    %v511 = vunpack.c.l.b16 %v163
    %v512 = vunpack.c.h.b16 %v163
    %v513 = vunpack.c.l.b16 %v164
    %v514 = vunpack.c.h.b16 %v164
    %v515 = vunpack.c.l.b16 %v165
    %v516 = vunpack.c.h.b16 %v165
    %v517 = vunpack.c.l.b16 %v166
    %v518 = vunpack.c.h.b16 %v166
    %v519 = vunpack.c.l.b16 %v167
    %v520 = vunpack.c.h.b16 %v167
    %v521 = vunpack.c.l.b16 %v168
    %v522 = vunpack.c.h.b16 %v168
    %v523 = vunpack.c.l.b16 %v169
    %v524 = vunpack.c.h.b16 %v169
    %v525 = vunpack.c.l.b16 %v170
    %v526 = vunpack.c.h.b16 %v170
    %v527 = vunpack.c.l.b16 %v171
    %v528 = vunpack.c.h.b16 %v171
    %v529 = vunpack.c.l.b16 %v172
    %v530 = vunpack.c.h.b16 %v172
    %v531 = vunpack.c.l.b16 %v173
    %v532 = vunpack.c.h.b16 %v173
    %v533 = vunpack.c.l.b16 %v174
    %v534 = vunpack.c.h.b16 %v174
    %v535 = vunpack.c.l.b16 %v175
    %v536 = vunpack.c.h.b16 %v175
    %v537 = vunpack.c.l.b16 %v176
    %v538 = vunpack.c.h.b16 %v176
    %v539 = vunpack.c.l.b16 %v177
    %v540 = vunpack.c.h.b16 %v177
    %v541 = vunpack.c.l.b16 %v178
    %v542 = vunpack.c.h.b16 %v178
    %v543 = vunpack.c.l.b16 %v179
    %v544 = vunpack.c.h.b16 %v179
    %v545 = vunpack.c.l.b16 %v180
    %v546 = vunpack.c.h.b16 %v180
    %v547 = vunpack.c.l.b16 %v181
    %v548 = vunpack.c.h.b16 %v181
    %v549 = vunpack.c.l.b16 %v182
    %v550 = vunpack.c.h.b16 %v182
    %v551 = vunpack.c.l.b16 %v183
    %v552 = vunpack.c.h.b16 %v183
    %v553 = vunpack.c.l.b16 %v184
    %v554 = vunpack.c.h.b16 %v184
    %v555 = vunpack.c.l.b16 %v185
    %v556 = vunpack.c.h.b16 %v185
    %v557 = vunpack.c.l.b16 %v186
    %v558 = vunpack.c.h.b16 %v186
    %v559 = vunpack.c.l.b16 %v187
    %v560 = vunpack.c.h.b16 %v187
    %v561 = vunpack.c.l.b16 %v188
    %v562 = vunpack.c.h.b16 %v188
    %v563 = vunpack.c.l.b16 %v189
    %v564 = vunpack.c.h.b16 %v189
    %v565 = vunpack.c.l.b16 %v190
    %v566 = vunpack.c.h.b16 %v190
    %v567 = vunpack.c.l.b16 %v191
    %v568 = vunpack.c.h.b16 %v191
    %v569 = vunpack.c.l.b16 %v192
    %v570 = vunpack.c.h.b16 %v192
    %v571 = vunpack.c.l.b16 %v193
    %v572 = vunpack.c.h.b16 %v193
    %v573 = vunpack.c.l.b16 %v194
    %v574 = vunpack.c.h.b16 %v194
    %v575 = vunpack.c.l.b16 %v195
    %v576 = vunpack.c.h.b16 %v195
    %v577 = vunpack.c.l.b16 %v196
    %v578 = vunpack.c.h.b16 %v196
    %v579 = vunpack.c.l.b16 %v197
    %v580 = vunpack.c.h.b16 %v197
    %v581 = vunpack.c.l.b16 %v198
    %v582 = vunpack.c.h.b16 %v198
    %v583 = vunpack.c.l.b16 %v199
    %v584 = vunpack.c.h.b16 %v199
    %v585 = vunpack.c.l.b16 %v200
    %v586 = vunpack.c.h.b16 %v200
    %v587 = vunpack.c.l.b16 %v201
    %v588 = vunpack.c.h.b16 %v201
    %v589 = vunpack.c.l.b16 %v202
    %v590 = vunpack.c.h.b16 %v202
    %v591 = vunpack.c.l.b16 %v203
    %v592 = vunpack.c.h.b16 %v203
    %v593 = vunpack.c.l.b16 %v204
    %v594 = vunpack.c.h.b16 %v204
    %v595 = vunpack.c.l.b16 %v205
    %v596 = vunpack.c.h.b16 %v205
    %v597 = vunpack.c.l.b16 %v206
    %v598 = vunpack.c.h.b16 %v206
    %v599 = vunpack.c.l.b16 %v207
    %v600 = vunpack.c.h.b16 %v207
    %v601 = vunpack.c.l.b16 %v208
    %v602 = vunpack.c.h.b16 %v208
    %v603 = vunpack.c.l.b16 %v209
    %v604 = vunpack.c.h.b16 %v209
    %v605 = vunpack.c.l.b16 %v210
    %v606 = vunpack.c.h.b16 %v210
    %v607 = vunpack.c.l.b16 %v211
    %v608 = vunpack.c.h.b16 %v211
    %v609 = vunpack.c.l.b16 %v212
    %v610 = vunpack.c.h.b16 %v212
    %v611 = vunpack.c.l.b16 %v213
    %v612 = vunpack.c.h.b16 %v213
    %v613 = vunpack.c.l.b16 %v214
    %v614 = vunpack.c.h.b16 %v214
    %v615 = vunpack.c.l.b16 %v215
    %v616 = vunpack.c.h.b16 %v215
    %v617 = vunpack.c.l.b16 %v216
    %v618 = vunpack.c.h.b16 %v216
    %v619 = vunpack.c.l.b16 %v217
    %v620 = vunpack.c.h.b16 %v217
    %v621 = vunpack.c.l.b16 %v218
    %v622 = vunpack.c.h.b16 %v218
    %v623 = vunpack.c.l.b16 %v219
    %v624 = vunpack.c.h.b16 %v219
    %v625 = vunpack.c.l.b16 %v220
    %v626 = vunpack.c.h.b16 %v220
    %v627 = vpack.c.b16 %v375, %v371
    %v628 = vpack.c.b16 %v376, %v372
    %v629 = vpack.c.b16 %v377, %v373
    %v630 = vpack.c.b16 %v378, %v374
    %v631 = vpack.c.b16 %v383, %v379
    %v632 = vpack.c.b16 %v384, %v380
    %v633 = vpack.c.b16 %v385, %v381
    %v634 = vpack.c.b16 %v386, %v382
    %v635 = vpack.c.b16 %v391, %v387
    %v636 = vpack.c.b16 %v392, %v388
    %v637 = vpack.c.b16 %v393, %v389
    %v638 = vpack.c.b16 %v394, %v390
    %v639 = vpack.c.b16 %v399, %v395
    %v640 = vpack.c.b16 %v400, %v396
    %v641 = vpack.c.b16 %v401, %v397
    %v642 = vpack.c.b16 %v402, %v398
    %v643 = vpack.c.b16 %v407, %v403
    %v644 = vpack.c.b16 %v408, %v404
    %v645 = vpack.c.b16 %v409, %v405
    %v646 = vpack.c.b16 %v410, %v406
    %v647 = vpack.c.b16 %v415, %v411
    %v648 = vpack.c.b16 %v416, %v412
    %v649 = vpack.c.b16 %v417, %v413
    %v650 = vpack.c.b16 %v418, %v414
    %v651 = vpack.c.b16 %v423, %v419
    %v652 = vpack.c.b16 %v424, %v420
    %v653 = vpack.c.b16 %v425, %v421
    %v654 = vpack.c.b16 %v426, %v422
    %v655 = vpack.c.b16 %v431, %v427
    %v656 = vpack.c.b16 %v432, %v428
    %v657 = vpack.c.b16 %v433, %v429
    %v658 = vpack.c.b16 %v434, %v430
    %v659 = vpack.c.b16 %v439, %v435
    %v660 = vpack.c.b16 %v440, %v436
    %v661 = vpack.c.b16 %v441, %v437
    %v662 = vpack.c.b16 %v442, %v438
    %v663 = vpack.c.b16 %v447, %v443
    %v664 = vpack.c.b16 %v448, %v444
    %v665 = vpack.c.b16 %v449, %v445
    %v666 = vpack.c.b16 %v450, %v446
    %v667 = vpack.c.b16 %v455, %v451
    %v668 = vpack.c.b16 %v456, %v452
    %v669 = vpack.c.b16 %v457, %v453
    %v670 = vpack.c.b16 %v458, %v454
    %v671 = vpack.c.b16 %v463, %v459
    %v672 = vpack.c.b16 %v464, %v460
    %v673 = vpack.c.b16 %v465, %v461
    %v674 = vpack.c.b16 %v466, %v462
    %v675 = vpack.c.b16 %v471, %v467
    %v676 = vpack.c.b16 %v472, %v468
    %v677 = vpack.c.b16 %v473, %v469
    %v678 = vpack.c.b16 %v474, %v470
    %v679 = vpack.c.b16 %v479, %v475
    %v680 = vpack.c.b16 %v480, %v476
    %v681 = vpack.c.b16 %v481, %v477
    %v682 = vpack.c.b16 %v482, %v478
    %v683 = vpack.c.b16 %v487, %v483
    %v684 = vpack.c.b16 %v488, %v484
    %v685 = vpack.c.b16 %v489, %v485
    %v686 = vpack.c.b16 %v490, %v486
    %v687 = vpack.c.b16 %v495, %v491
    %v688 = vpack.c.b16 %v496, %v492
    %v689 = vpack.c.b16 %v497, %v493
    %v690 = vpack.c.b16 %v498, %v494
    %v691 = vpack.c.b16 %v503, %v499
    %v692 = vpack.c.b16 %v504, %v500
    %v693 = vpack.c.b16 %v505, %v501
    %v694 = vpack.c.b16 %v506, %v502
    %v695 = vpack.c.b16 %v511, %v507
    %v696 = vpack.c.b16 %v512, %v508
    %v697 = vpack.c.b16 %v513, %v509
    %v698 = vpack.c.b16 %v514, %v510
    %v699 = vpack.c.b16 %v519, %v515
    %v700 = vpack.c.b16 %v520, %v516
    %v701 = vpack.c.b16 %v521, %v517
    %v702 = vpack.c.b16 %v522, %v518
    %v703 = vpack.c.b16 %v527, %v523
    %v704 = vpack.c.b16 %v528, %v524
    %v705 = vpack.c.b16 %v529, %v525
    %v706 = vpack.c.b16 %v530, %v526
    %v707 = vpack.c.b16 %v535, %v531
    %v708 = vpack.c.b16 %v536, %v532
    %v709 = vpack.c.b16 %v537, %v533
    %v710 = vpack.c.b16 %v538, %v534
    %v711 = vpack.c.b16 %v543, %v539
    %v712 = vpack.c.b16 %v544, %v540
    %v713 = vpack.c.b16 %v545, %v541
    %v714 = vpack.c.b16 %v546, %v542
    %v715 = vpack.c.b16 %v551, %v547
    %v716 = vpack.c.b16 %v552, %v548
    %v717 = vpack.c.b16 %v553, %v549
    %v718 = vpack.c.b16 %v554, %v550
    %v719 = vpack.c.b16 %v559, %v555
    %v720 = vpack.c.b16 %v560, %v556
    %v721 = vpack.c.b16 %v561, %v557
    %v722 = vpack.c.b16 %v562, %v558
    %v723 = vpack.c.b16 %v567, %v563
    %v724 = vpack.c.b16 %v568, %v564
    %v725 = vpack.c.b16 %v569, %v565
    %v726 = vpack.c.b16 %v570, %v566
    %v727 = vpack.c.b16 %v575, %v571
    %v728 = vpack.c.b16 %v576, %v572
    %v729 = vpack.c.b16 %v577, %v573
    %v730 = vpack.c.b16 %v578, %v574
    %v731 = vpack.c.b16 %v583, %v579
    %v732 = vpack.c.b16 %v584, %v580
    %v733 = vpack.c.b16 %v585, %v581
    %v734 = vpack.c.b16 %v586, %v582
    %v735 = vpack.c.b16 %v591, %v587
    %v736 = vpack.c.b16 %v592, %v588
    %v737 = vpack.c.b16 %v593, %v589
    %v738 = vpack.c.b16 %v594, %v590
    %v739 = vpack.c.b16 %v599, %v595
    %v740 = vpack.c.b16 %v600, %v596
    %v741 = vpack.c.b16 %v601, %v597
    %v742 = vpack.c.b16 %v602, %v598
    %v743 = vpack.c.b16 %v607, %v603
    %v744 = vpack.c.b16 %v608, %v604
    %v745 = vpack.c.b16 %v609, %v605
    %v746 = vpack.c.b16 %v610, %v606
    %v747 = vpack.c.b16 %v615, %v611
    %v748 = vpack.c.b16 %v616, %v612
    %v749 = vpack.c.b16 %v617, %v613
    %v750 = vpack.c.b16 %v618, %v614
    %v751 = vpack.c.b16 %v623, %v619
    %v752 = vpack.c.b16 %v624, %v620
    %v753 = vpack.c.b16 %v625, %v621
    %v754 = vpack.c.b16 %v626, %v622
    %883 = vmatprep.subr.bf16.mxu0 %v656
    %884 = vmatpush1.bf16.msra.mxu0 %v655
    %885 = vmatprep.subr.bf16.mxu0 %v652
    %886 = vmatpush1.bf16.msra.mxu0 %v651
    %887 = vmatprep.subr.bf16.mxu0 %v648
    %888 = vmatpush1.bf16.msra.mxu0 %v647
    %889 = vmatprep.subr.bf16.mxu0 %v644
    %890 = vmatpush1.bf16.msra.mxu0 %v643
    %891 = vmatprep.subr.bf16.mxu0 %v640
    %892 = vmatpush1.bf16.msra.mxu0 %v639
    %893 = vmatprep.subr.bf16.mxu0 %v636
    %894 = vmatpush1.bf16.msra.mxu0 %v635
    %895 = vmatprep.subr.bf16.mxu0 %v632
    %896 = vmatpush1.bf16.msra.mxu0 %v631
    %897 = vmatprep.subr.bf16.mxu0 %v628
    %898 = vmatpush1.bf16.msra.mxu0 %v627
    %899 = vmatprep.subr.bf16.mxu0 %v688
    %900 = vmatpush2.bf16.msra.mxu0 %v687
    %901 = vmatprep.subr.bf16.mxu0 %v684
    %902 = vmatpush2.bf16.msra.mxu0 %v683
    %903 = vmatprep.subr.bf16.mxu0 %v680
    %904 = vmatpush2.bf16.msra.mxu0 %v679
    %905 = vmatprep.subr.bf16.mxu0 %v676
    %906 = vmatpush2.bf16.msra.mxu0 %v675
    %907 = vmatprep.subr.bf16.mxu0 %v672
    %908 = vmatpush2.bf16.msra.mxu0 %v671
    %909 = vmatprep.subr.bf16.mxu0 %v668
    %910 = vmatpush2.bf16.msra.mxu0 %v667
    %911 = vmatprep.subr.bf16.mxu0 %v664
    %912 = vmatpush2.bf16.msra.mxu0 %v663
    %913 = vmatprep.subr.bf16.mxu0 %v660
    %914 = vmatpush2.bf16.msra.mxu0 %v659
    %915 = vmatprep.mubr.bf16.mxu0 %v90
    %916 = vmatmul.mubr.bf16.gmra.mxu0 %v89
    %v917 = vpop.f32.mrf.mxu0
    %v918 = vadd.f32 %v226, %v917
    %v919 = vpop.f32.mrf.mxu0
    %v920 = vadd.f32 %v230, %v919
    %v921 = vpop.f32.mrf.mxu0
    %v922 = vpop.f32.mrf.mxu0
    %923 = vdwg.mxu0
    %924 = vmatprep.subr.bf16.mxu0 %v720
    %925 = vmatpush1.bf16.msra.mxu0 %v719
    %926 = vmatprep.subr.bf16.mxu0 %v716
    %927 = vmatpush1.bf16.msra.mxu0 %v715
    %928 = vmatprep.subr.bf16.mxu0 %v712
    %929 = vmatpush1.bf16.msra.mxu0 %v711
    %930 = vmatprep.subr.bf16.mxu0 %v708
    %931 = vmatpush1.bf16.msra.mxu0 %v707
    %932 = vmatprep.subr.bf16.mxu0 %v704
    %933 = vmatpush1.bf16.msra.mxu0 %v703
    %934 = vmatprep.subr.bf16.mxu0 %v700
    %935 = vmatpush1.bf16.msra.mxu0 %v699
    %936 = vmatprep.subr.bf16.mxu0 %v696
    %937 = vmatpush1.bf16.msra.mxu0 %v695
    %938 = vmatprep.subr.bf16.mxu0 %v692
    %939 = vmatpush1.bf16.msra.mxu0 %v691
    %940 = vmatprep.subr.bf16.mxu0 %v752
    %941 = vmatpush2.bf16.msra.mxu0 %v751
    %942 = vmatprep.subr.bf16.mxu0 %v748
    %943 = vmatpush2.bf16.msra.mxu0 %v747
    %944 = vmatprep.subr.bf16.mxu0 %v744
    %945 = vmatpush2.bf16.msra.mxu0 %v743
    %946 = vmatprep.subr.bf16.mxu0 %v740
    %947 = vmatpush2.bf16.msra.mxu0 %v739
    %948 = vmatprep.subr.bf16.mxu0 %v736
    %949 = vmatpush2.bf16.msra.mxu0 %v735
    %950 = vmatprep.subr.bf16.mxu0 %v732
    %951 = vmatpush2.bf16.msra.mxu0 %v731
    %952 = vmatprep.subr.bf16.mxu0 %v728
    %953 = vmatpush2.bf16.msra.mxu0 %v727
    %954 = vmatprep.subr.bf16.mxu0 %v724
    %955 = vmatpush2.bf16.msra.mxu0 %v723
    %956 = vmatprep.mubr.bf16.mxu0 %v92
    %957 = vmatmul.mubr.bf16.gmra.mxu0 %v91
    %v958 = vpop.f32.mrf.mxu0
    %v959 = vadd.f32 %v918, %v958
    %v960 = vpop.f32.mrf.mxu0
    %v961 = vadd.f32 %v920, %v960
    %v962 = vpop.f32.mrf.mxu0
    %v963 = vpop.f32.mrf.mxu0
    %964 = vdwg.mxu0
    %965 = vmatprep.subr.bf16.mxu0 %v658
    %966 = vmatpush1.bf16.msra.mxu0 %v657
    %967 = vmatprep.subr.bf16.mxu0 %v654
    %968 = vmatpush1.bf16.msra.mxu0 %v653
    %969 = vmatprep.subr.bf16.mxu0 %v650
    %970 = vmatpush1.bf16.msra.mxu0 %v649
    %971 = vmatprep.subr.bf16.mxu0 %v646
    %972 = vmatpush1.bf16.msra.mxu0 %v645
    %973 = vmatprep.subr.bf16.mxu0 %v642
    %974 = vmatpush1.bf16.msra.mxu0 %v641
    %975 = vmatprep.subr.bf16.mxu0 %v638
    %976 = vmatpush1.bf16.msra.mxu0 %v637
    %977 = vmatprep.subr.bf16.mxu0 %v634
    %978 = vmatpush1.bf16.msra.mxu0 %v633
    %979 = vmatprep.subr.bf16.mxu0 %v630
    %980 = vmatpush1.bf16.msra.mxu0 %v629
    %981 = vmatprep.subr.bf16.mxu0 %v690
    %982 = vmatpush2.bf16.msra.mxu0 %v689
    %983 = vmatprep.subr.bf16.mxu0 %v686
    %984 = vmatpush2.bf16.msra.mxu0 %v685
    %985 = vmatprep.subr.bf16.mxu0 %v682
    %986 = vmatpush2.bf16.msra.mxu0 %v681
    %987 = vmatprep.subr.bf16.mxu0 %v678
    %988 = vmatpush2.bf16.msra.mxu0 %v677
    %989 = vmatprep.subr.bf16.mxu0 %v674
    %990 = vmatpush2.bf16.msra.mxu0 %v673
    %991 = vmatprep.subr.bf16.mxu0 %v670
    %992 = vmatpush2.bf16.msra.mxu0 %v669
    %993 = vmatprep.subr.bf16.mxu0 %v666
    %994 = vmatpush2.bf16.msra.mxu0 %v665
    %995 = vmatprep.subr.bf16.mxu0 %v662
    %996 = vmatpush2.bf16.msra.mxu0 %v661
    %997 = vmatprep.mubr.bf16.mxu0 %v90
    %998 = vmatmul.mubr.bf16.gmra.mxu0 %v89
    %v999 = vpop.f32.mrf.mxu0
    %v1000 = vadd.f32 %v234, %v999
    %v1001 = vpop.f32.mrf.mxu0
    %v1002 = vadd.f32 %v238, %v1001
    %v1003 = vpop.f32.mrf.mxu0
    %v1004 = vpop.f32.mrf.mxu0
    %1005 = vdwg.mxu0
    %1006 = vmatprep.subr.bf16.mxu0 %v722
    %1007 = vmatpush1.bf16.msra.mxu0 %v721
    %1008 = vmatprep.subr.bf16.mxu0 %v718
    %1009 = vmatpush1.bf16.msra.mxu0 %v717
    %1010 = vmatprep.subr.bf16.mxu0 %v714
    %1011 = vmatpush1.bf16.msra.mxu0 %v713
    %1012 = vmatprep.subr.bf16.mxu0 %v710
    %1013 = vmatpush1.bf16.msra.mxu0 %v709
    %1014 = vmatprep.subr.bf16.mxu0 %v706
    %1015 = vmatpush1.bf16.msra.mxu0 %v705
    %1016 = vmatprep.subr.bf16.mxu0 %v702
    %1017 = vmatpush1.bf16.msra.mxu0 %v701
    %1018 = vmatprep.subr.bf16.mxu0 %v698
    %1019 = vmatpush1.bf16.msra.mxu0 %v697
    %1020 = vmatprep.subr.bf16.mxu0 %v694
    %1021 = vmatpush1.bf16.msra.mxu0 %v693
    %1022 = vmatprep.subr.bf16.mxu0 %v754
    %1023 = vmatpush2.bf16.msra.mxu0 %v753
    %1024 = vmatprep.subr.bf16.mxu0 %v750
    %1025 = vmatpush2.bf16.msra.mxu0 %v749
    %1026 = vmatprep.subr.bf16.mxu0 %v746
    %1027 = vmatpush2.bf16.msra.mxu0 %v745
    %1028 = vmatprep.subr.bf16.mxu0 %v742
    %1029 = vmatpush2.bf16.msra.mxu0 %v741
    %1030 = vmatprep.subr.bf16.mxu0 %v738
    %1031 = vmatpush2.bf16.msra.mxu0 %v737
    %1032 = vmatprep.subr.bf16.mxu0 %v734
    %1033 = vmatpush2.bf16.msra.mxu0 %v733
    %1034 = vmatprep.subr.bf16.mxu0 %v730
    %1035 = vmatpush2.bf16.msra.mxu0 %v729
    %1036 = vmatprep.subr.bf16.mxu0 %v726
    %1037 = vmatpush2.bf16.msra.mxu0 %v725
    %1038 = vmatprep.mubr.bf16.mxu0 %v92
    %1039 = vmatmul.mubr.bf16.gmra.mxu0 %v91
    %v1040 = vpop.f32.mrf.mxu0
    %v1041 = vadd.f32 %v1000, %v1040
    %v1042 = vpop.f32.mrf.mxu0
    %v1043 = vadd.f32 %v1002, %v1042
    %v1044 = vpop.f32.mrf.mxu0
    %v1045 = vpop.f32.mrf.mxu0
    %1046 = vdwg.mxu0
    %vm1047 = vcmp.ge.f32.partialorder %v959, 0.0
    %vm1048 = vcmp.ge.f32.partialorder %v961, 0.0
    %vm1049 = vcmp.ge.f32.partialorder %v1041, 0.0
    %vm1050 = vcmp.ge.f32.partialorder %v1043, 0.0
    %v1051 = vmul.f32 %v959, 0.2
    %v1052 = vmul.f32 %v961, 0.2
    %v1053 = vmul.f32 %v1041, 0.2
    %v1054 = vmul.f32 %v1043, 0.2
    %v1055 = vsel %vm1047, %v959, %v1051
    %v1056 = vsel %vm1048, %v961, %v1052
    %v1057 = vsel %vm1049, %v1041, %v1053
    %v1058 = vsel %vm1050, %v1043, %v1054
    %v1059 = vpack.c.bf16 %v1055, %v1055
    %v1060 = vpack.c.bf16 %v1056, %v1056
    %v1061 = vpack.c.bf16 %v1057, %v1057
    %v1062 = vpack.c.bf16 %v1058, %v1058
    %v1063 = vld [vmem:[#allocation7] sm:$0xff]
    %v1064 = vld [vmem:[#allocation7 + $0x8] sm:$0xff]
    %v1065 = vld [vmem:[#allocation7 + $0x10] sm:$0xff]
    %v1066 = vld [vmem:[#allocation7 + $0x18] sm:$0xff]
    %v1067 = vld [vmem:[#allocation7 + $0x20] sm:$0xff]
    %v1068 = vld [vmem:[#allocation7 + $0x28] sm:$0xff]
    %v1069 = vld [vmem:[#allocation7 + $0x30] sm:$0xff]
    %v1070 = vld [vmem:[#allocation7 + $0x38] sm:$0xff]
    %v1071 = vld [vmem:[#allocation7 + $0x40] sm:$0xff]
    %v1072 = vld [vmem:[#allocation7 + $0x48] sm:$0xff]
    %v1073 = vld [vmem:[#allocation7 + $0x50] sm:$0xff]
    %v1074 = vld [vmem:[#allocation7 + $0x58] sm:$0xff]
    %v1075 = vld [vmem:[#allocation7 + $0x60] sm:$0xff]
    %v1076 = vld [vmem:[#allocation7 + $0x68] sm:$0xff]
    %v1077 = vld [vmem:[#allocation7 + $0x70] sm:$0xff]
    %v1078 = vld [vmem:[#allocation7 + $0x78] sm:$0xff]
    %v1079 = vld [vmem:[#allocation7 + $0x80] sm:$0xff]
    %v1080 = vld [vmem:[#allocation7 + $0x88] sm:$0xff]
    %v1081 = vld [vmem:[#allocation7 + $0x90] sm:$0xff]
    %v1082 = vld [vmem:[#allocation7 + $0x98] sm:$0xff]
    %v1083 = vld [vmem:[#allocation7 + $0xa0] sm:$0xff]
    %v1084 = vld [vmem:[#allocation7 + $0xa8] sm:$0xff]
    %v1085 = vld [vmem:[#allocation7 + $0xb0] sm:$0xff]
    %v1086 = vld [vmem:[#allocation7 + $0xb8] sm:$0xff]
    %v1087 = vld [vmem:[#allocation7 + $0xc0] sm:$0xff]
    %v1088 = vld [vmem:[#allocation7 + $0xc8] sm:$0xff]
    %v1089 = vld [vmem:[#allocation7 + $0xd0] sm:$0xff]
    %v1090 = vld [vmem:[#allocation7 + $0xd8] sm:$0xff]
    %v1091 = vld [vmem:[#allocation7 + $0xe0] sm:$0xff]
    %v1092 = vld [vmem:[#allocation7 + $0xe8] sm:$0xff]
    %v1093 = vld [vmem:[#allocation7 + $0xf0] sm:$0xff]
    %v1094 = vld [vmem:[#allocation7 + $0xf8] sm:$0xff]
    %v1095 = vld [vmem:[#allocation7 + $0x100] sm:$0xff]
    %v1096 = vld [vmem:[#allocation7 + $0x108] sm:$0xff]
    %v1097 = vld [vmem:[#allocation7 + $0x110] sm:$0xff]
    %v1098 = vld [vmem:[#allocation7 + $0x118] sm:$0xff]
    %v1099 = vld [vmem:[#allocation7 + $0x120] sm:$0xff]
    %v1100 = vld [vmem:[#allocation7 + $0x128] sm:$0xff]
    %v1101 = vld [vmem:[#allocation7 + $0x130] sm:$0xff]
    %v1102 = vld [vmem:[#allocation7 + $0x138] sm:$0xff]
    %v1103 = vld [vmem:[#allocation7 + $0x140] sm:$0xff]
    %v1104 = vld [vmem:[#allocation7 + $0x148] sm:$0xff]
    %v1105 = vld [vmem:[#allocation7 + $0x150] sm:$0xff]
    %v1106 = vld [vmem:[#allocation7 + $0x158] sm:$0xff]
    %v1107 = vld [vmem:[#allocation7 + $0x160] sm:$0xff]
    %v1108 = vld [vmem:[#allocation7 + $0x168] sm:$0xff]
    %v1109 = vld [vmem:[#allocation7 + $0x170] sm:$0xff]
    %v1110 = vld [vmem:[#allocation7 + $0x178] sm:$0xff]
    %v1111 = vld [vmem:[#allocation7 + $0x180] sm:$0xff]
    %v1112 = vld [vmem:[#allocation7 + $0x188] sm:$0xff]
    %v1113 = vld [vmem:[#allocation7 + $0x190] sm:$0xff]
    %v1114 = vld [vmem:[#allocation7 + $0x198] sm:$0xff]
    %v1115 = vld [vmem:[#allocation7 + $0x1a0] sm:$0xff]
    %v1116 = vld [vmem:[#allocation7 + $0x1a8] sm:$0xff]
    %v1117 = vld [vmem:[#allocation7 + $0x1b0] sm:$0xff]
    %v1118 = vld [vmem:[#allocation7 + $0x1b8] sm:$0xff]
    %v1119 = vld [vmem:[#allocation7 + $0x1c0] sm:$0xff]
    %v1120 = vld [vmem:[#allocation7 + $0x1c8] sm:$0xff]
    %v1121 = vld [vmem:[#allocation7 + $0x1d0] sm:$0xff]
    %v1122 = vld [vmem:[#allocation7 + $0x1d8] sm:$0xff]
    %v1123 = vld [vmem:[#allocation7 + $0x1e0] sm:$0xff]
    %v1124 = vld [vmem:[#allocation7 + $0x1e8] sm:$0xff]
    %v1125 = vld [vmem:[#allocation7 + $0x1f0] sm:$0xff]
    %v1126 = vld [vmem:[#allocation7 + $0x1f8] sm:$0xff]
    %v1127 = vld [vmem:[#allocation7 + $0x200] sm:$0xff]
    %v1128 = vld [vmem:[#allocation7 + $0x208] sm:$0xff]
    %v1129 = vld [vmem:[#allocation7 + $0x210] sm:$0xff]
    %v1130 = vld [vmem:[#allocation7 + $0x218] sm:$0xff]
    %v1131 = vld [vmem:[#allocation7 + $0x220] sm:$0xff]
    %v1132 = vld [vmem:[#allocation7 + $0x228] sm:$0xff]
    %v1133 = vld [vmem:[#allocation7 + $0x230] sm:$0xff]
    %v1134 = vld [vmem:[#allocation7 + $0x238] sm:$0xff]
    %v1135 = vld [vmem:[#allocation7 + $0x240] sm:$0xff]
    %v1136 = vld [vmem:[#allocation7 + $0x248] sm:$0xff]
    %v1137 = vld [vmem:[#allocation7 + $0x250] sm:$0xff]
    %v1138 = vld [vmem:[#allocation7 + $0x258] sm:$0xff]
    %v1139 = vld [vmem:[#allocation7 + $0x260] sm:$0xff]
    %v1140 = vld [vmem:[#allocation7 + $0x268] sm:$0xff]
    %v1141 = vld [vmem:[#allocation7 + $0x270] sm:$0xff]
    %v1142 = vld [vmem:[#allocation7 + $0x278] sm:$0xff]
    %v1143 = vld [vmem:[#allocation7 + $0x280] sm:$0xff]
    %v1144 = vld [vmem:[#allocation7 + $0x288] sm:$0xff]
    %v1145 = vld [vmem:[#allocation7 + $0x290] sm:$0xff]
    %v1146 = vld [vmem:[#allocation7 + $0x298] sm:$0xff]
    %v1147 = vld [vmem:[#allocation7 + $0x2a0] sm:$0xff]
    %v1148 = vld [vmem:[#allocation7 + $0x2a8] sm:$0xff]
    %v1149 = vld [vmem:[#allocation7 + $0x2b0] sm:$0xff]
    %v1150 = vld [vmem:[#allocation7 + $0x2b8] sm:$0xff]
    %v1151 = vld [vmem:[#allocation7 + $0x2c0] sm:$0xff]
    %v1152 = vld [vmem:[#allocation7 + $0x2c8] sm:$0xff]
    %v1153 = vld [vmem:[#allocation7 + $0x2d0] sm:$0xff]
    %v1154 = vld [vmem:[#allocation7 + $0x2d8] sm:$0xff]
    %v1155 = vld [vmem:[#allocation7 + $0x2e0] sm:$0xff]
    %v1156 = vld [vmem:[#allocation7 + $0x2e8] sm:$0xff]
    %v1157 = vld [vmem:[#allocation7 + $0x2f0] sm:$0xff]
    %v1158 = vld [vmem:[#allocation7 + $0x2f8] sm:$0xff]
    %v1159 = vld [vmem:[#allocation7 + $0x300] sm:$0xff]
    %v1160 = vld [vmem:[#allocation7 + $0x308] sm:$0xff]
    %v1161 = vld [vmem:[#allocation7 + $0x310] sm:$0xff]
    %v1162 = vld [vmem:[#allocation7 + $0x318] sm:$0xff]
    %v1163 = vld [vmem:[#allocation7 + $0x320] sm:$0xff]
    %v1164 = vld [vmem:[#allocation7 + $0x328] sm:$0xff]
    %v1165 = vld [vmem:[#allocation7 + $0x330] sm:$0xff]
    %v1166 = vld [vmem:[#allocation7 + $0x338] sm:$0xff]
    %v1167 = vld [vmem:[#allocation7 + $0x340] sm:$0xff]
    %v1168 = vld [vmem:[#allocation7 + $0x348] sm:$0xff]
    %v1169 = vld [vmem:[#allocation7 + $0x350] sm:$0xff]
    %v1170 = vld [vmem:[#allocation7 + $0x358] sm:$0xff]
    %v1171 = vld [vmem:[#allocation7 + $0x360] sm:$0xff]
    %v1172 = vld [vmem:[#allocation7 + $0x368] sm:$0xff]
    %v1173 = vld [vmem:[#allocation7 + $0x370] sm:$0xff]
    %v1174 = vld [vmem:[#allocation7 + $0x378] sm:$0xff]
    %v1175 = vld [vmem:[#allocation7 + $0x380] sm:$0xff]
    %v1176 = vld [vmem:[#allocation7 + $0x388] sm:$0xff]
    %v1177 = vld [vmem:[#allocation7 + $0x390] sm:$0xff]
    %v1178 = vld [vmem:[#allocation7 + $0x398] sm:$0xff]
    %v1179 = vld [vmem:[#allocation7 + $0x3a0] sm:$0xff]
    %v1180 = vld [vmem:[#allocation7 + $0x3a8] sm:$0xff]
    %v1181 = vld [vmem:[#allocation7 + $0x3b0] sm:$0xff]
    %v1182 = vld [vmem:[#allocation7 + $0x3b8] sm:$0xff]
    %v1183 = vld [vmem:[#allocation7 + $0x3c0] sm:$0xff]
    %v1184 = vld [vmem:[#allocation7 + $0x3c8] sm:$0xff]
    %v1185 = vld [vmem:[#allocation7 + $0x3d0] sm:$0xff]
    %v1186 = vld [vmem:[#allocation7 + $0x3d8] sm:$0xff]
    %v1187 = vld [vmem:[#allocation7 + $0x3e0] sm:$0xff]
    %v1188 = vld [vmem:[#allocation7 + $0x3e8] sm:$0xff]
    %v1189 = vld [vmem:[#allocation7 + $0x3f0] sm:$0xff]
    %v1190 = vld [vmem:[#allocation7 + $0x3f8] sm:$0xff]
    %s1191 = scalar_lea.vmem [#allocation10], 1
    %v1192 = vld [vmem:[%s1191] ss:$4 sm:$0xf]
    %v1194 = vlaneseq
    %v1195 = vshrl.u32 %v1194, 7
    %v1196 = vsub.s32 0, %v1195
    %v1197 = vrot.slane %v1192, %v1196
    %v1198 = vlaneseq
    %v1199 = vshrl.u32 %v1198, 7
    %v1200 = vsub.s32 1, %v1199
    %v1201 = vrot.slane %v1192, %v1200
    %v1202 = vlaneseq
    %v1203 = vshrl.u32 %v1202, 7
    %v1204 = vsub.s32 2, %v1203
    %v1205 = vrot.slane %v1192, %v1204
    %v1206 = vlaneseq
    %v1207 = vshrl.u32 %v1206, 7
    %v1208 = vsub.s32 3, %v1207
    %v1209 = vrot.slane %v1192, %v1208
    %v1342 = vunpack.c.l.b16 %v1063
    %v1343 = vunpack.c.h.b16 %v1063
    %v1344 = vunpack.c.l.b16 %v1064
    %v1345 = vunpack.c.h.b16 %v1064
    %v1346 = vunpack.c.l.b16 %v1065
    %v1347 = vunpack.c.h.b16 %v1065
    %v1348 = vunpack.c.l.b16 %v1066
    %v1349 = vunpack.c.h.b16 %v1066
    %v1350 = vunpack.c.l.b16 %v1067
    %v1351 = vunpack.c.h.b16 %v1067
    %v1352 = vunpack.c.l.b16 %v1068
    %v1353 = vunpack.c.h.b16 %v1068
    %v1354 = vunpack.c.l.b16 %v1069
    %v1355 = vunpack.c.h.b16 %v1069
    %v1356 = vunpack.c.l.b16 %v1070
    %v1357 = vunpack.c.h.b16 %v1070
    %v1358 = vunpack.c.l.b16 %v1071
    %v1359 = vunpack.c.h.b16 %v1071
    %v1360 = vunpack.c.l.b16 %v1072
    %v1361 = vunpack.c.h.b16 %v1072
    %v1362 = vunpack.c.l.b16 %v1073
    %v1363 = vunpack.c.h.b16 %v1073
    %v1364 = vunpack.c.l.b16 %v1074
    %v1365 = vunpack.c.h.b16 %v1074
    %v1366 = vunpack.c.l.b16 %v1075
    %v1367 = vunpack.c.h.b16 %v1075
    %v1368 = vunpack.c.l.b16 %v1076
    %v1369 = vunpack.c.h.b16 %v1076
    %v1370 = vunpack.c.l.b16 %v1077
    %v1371 = vunpack.c.h.b16 %v1077
    %v1372 = vunpack.c.l.b16 %v1078
    %v1373 = vunpack.c.h.b16 %v1078
    %v1374 = vunpack.c.l.b16 %v1079
    %v1375 = vunpack.c.h.b16 %v1079
    %v1376 = vunpack.c.l.b16 %v1080
    %v1377 = vunpack.c.h.b16 %v1080
    %v1378 = vunpack.c.l.b16 %v1081
    %v1379 = vunpack.c.h.b16 %v1081
    %v1380 = vunpack.c.l.b16 %v1082
    %v1381 = vunpack.c.h.b16 %v1082
    %v1382 = vunpack.c.l.b16 %v1083
    %v1383 = vunpack.c.h.b16 %v1083
    %v1384 = vunpack.c.l.b16 %v1084
    %v1385 = vunpack.c.h.b16 %v1084
    %v1386 = vunpack.c.l.b16 %v1085
    %v1387 = vunpack.c.h.b16 %v1085
    %v1388 = vunpack.c.l.b16 %v1086
    %v1389 = vunpack.c.h.b16 %v1086
    %v1390 = vunpack.c.l.b16 %v1087
    %v1391 = vunpack.c.h.b16 %v1087
    %v1392 = vunpack.c.l.b16 %v1088
    %v1393 = vunpack.c.h.b16 %v1088
    %v1394 = vunpack.c.l.b16 %v1089
    %v1395 = vunpack.c.h.b16 %v1089
    %v1396 = vunpack.c.l.b16 %v1090
    %v1397 = vunpack.c.h.b16 %v1090
    %v1398 = vunpack.c.l.b16 %v1091
    %v1399 = vunpack.c.h.b16 %v1091
    %v1400 = vunpack.c.l.b16 %v1092
    %v1401 = vunpack.c.h.b16 %v1092
    %v1402 = vunpack.c.l.b16 %v1093
    %v1403 = vunpack.c.h.b16 %v1093
    %v1404 = vunpack.c.l.b16 %v1094
    %v1405 = vunpack.c.h.b16 %v1094
    %v1406 = vunpack.c.l.b16 %v1095
    %v1407 = vunpack.c.h.b16 %v1095
    %v1408 = vunpack.c.l.b16 %v1096
    %v1409 = vunpack.c.h.b16 %v1096
    %v1410 = vunpack.c.l.b16 %v1097
    %v1411 = vunpack.c.h.b16 %v1097
    %v1412 = vunpack.c.l.b16 %v1098
    %v1413 = vunpack.c.h.b16 %v1098
    %v1414 = vunpack.c.l.b16 %v1099
    %v1415 = vunpack.c.h.b16 %v1099
    %v1416 = vunpack.c.l.b16 %v1100
    %v1417 = vunpack.c.h.b16 %v1100
    %v1418 = vunpack.c.l.b16 %v1101
    %v1419 = vunpack.c.h.b16 %v1101
    %v1420 = vunpack.c.l.b16 %v1102
    %v1421 = vunpack.c.h.b16 %v1102
    %v1422 = vunpack.c.l.b16 %v1103
    %v1423 = vunpack.c.h.b16 %v1103
    %v1424 = vunpack.c.l.b16 %v1104
    %v1425 = vunpack.c.h.b16 %v1104
    %v1426 = vunpack.c.l.b16 %v1105
    %v1427 = vunpack.c.h.b16 %v1105
    %v1428 = vunpack.c.l.b16 %v1106
    %v1429 = vunpack.c.h.b16 %v1106
    %v1430 = vunpack.c.l.b16 %v1107
    %v1431 = vunpack.c.h.b16 %v1107
    %v1432 = vunpack.c.l.b16 %v1108
    %v1433 = vunpack.c.h.b16 %v1108
    %v1434 = vunpack.c.l.b16 %v1109
    %v1435 = vunpack.c.h.b16 %v1109
    %v1436 = vunpack.c.l.b16 %v1110
    %v1437 = vunpack.c.h.b16 %v1110
    %v1438 = vunpack.c.l.b16 %v1111
    %v1439 = vunpack.c.h.b16 %v1111
    %v1440 = vunpack.c.l.b16 %v1112
    %v1441 = vunpack.c.h.b16 %v1112
    %v1442 = vunpack.c.l.b16 %v1113
    %v1443 = vunpack.c.h.b16 %v1113
    %v1444 = vunpack.c.l.b16 %v1114
    %v1445 = vunpack.c.h.b16 %v1114
    %v1446 = vunpack.c.l.b16 %v1115
    %v1447 = vunpack.c.h.b16 %v1115
    %v1448 = vunpack.c.l.b16 %v1116
    %v1449 = vunpack.c.h.b16 %v1116
    %v1450 = vunpack.c.l.b16 %v1117
    %v1451 = vunpack.c.h.b16 %v1117
    %v1452 = vunpack.c.l.b16 %v1118
    %v1453 = vunpack.c.h.b16 %v1118
    %v1454 = vunpack.c.l.b16 %v1119
    %v1455 = vunpack.c.h.b16 %v1119
    %v1456 = vunpack.c.l.b16 %v1120
    %v1457 = vunpack.c.h.b16 %v1120
    %v1458 = vunpack.c.l.b16 %v1121
    %v1459 = vunpack.c.h.b16 %v1121
    %v1460 = vunpack.c.l.b16 %v1122
    %v1461 = vunpack.c.h.b16 %v1122
    %v1462 = vunpack.c.l.b16 %v1123
    %v1463 = vunpack.c.h.b16 %v1123
    %v1464 = vunpack.c.l.b16 %v1124
    %v1465 = vunpack.c.h.b16 %v1124
    %v1466 = vunpack.c.l.b16 %v1125
    %v1467 = vunpack.c.h.b16 %v1125
    %v1468 = vunpack.c.l.b16 %v1126
    %v1469 = vunpack.c.h.b16 %v1126
    %v1470 = vunpack.c.l.b16 %v1127
    %v1471 = vunpack.c.h.b16 %v1127
    %v1472 = vunpack.c.l.b16 %v1128
    %v1473 = vunpack.c.h.b16 %v1128
    %v1474 = vunpack.c.l.b16 %v1129
    %v1475 = vunpack.c.h.b16 %v1129
    %v1476 = vunpack.c.l.b16 %v1130
    %v1477 = vunpack.c.h.b16 %v1130
    %v1478 = vunpack.c.l.b16 %v1131
    %v1479 = vunpack.c.h.b16 %v1131
    %v1480 = vunpack.c.l.b16 %v1132
    %v1481 = vunpack.c.h.b16 %v1132
    %v1482 = vunpack.c.l.b16 %v1133
    %v1483 = vunpack.c.h.b16 %v1133
    %v1484 = vunpack.c.l.b16 %v1134
    %v1485 = vunpack.c.h.b16 %v1134
    %v1486 = vunpack.c.l.b16 %v1135
    %v1487 = vunpack.c.h.b16 %v1135
    %v1488 = vunpack.c.l.b16 %v1136
    %v1489 = vunpack.c.h.b16 %v1136
    %v1490 = vunpack.c.l.b16 %v1137
    %v1491 = vunpack.c.h.b16 %v1137
    %v1492 = vunpack.c.l.b16 %v1138
    %v1493 = vunpack.c.h.b16 %v1138
    %v1494 = vunpack.c.l.b16 %v1139
    %v1495 = vunpack.c.h.b16 %v1139
    %v1496 = vunpack.c.l.b16 %v1140
    %v1497 = vunpack.c.h.b16 %v1140
    %v1498 = vunpack.c.l.b16 %v1141
    %v1499 = vunpack.c.h.b16 %v1141
    %v1500 = vunpack.c.l.b16 %v1142
    %v1501 = vunpack.c.h.b16 %v1142
    %v1502 = vunpack.c.l.b16 %v1143
    %v1503 = vunpack.c.h.b16 %v1143
    %v1504 = vunpack.c.l.b16 %v1144
    %v1505 = vunpack.c.h.b16 %v1144
    %v1506 = vunpack.c.l.b16 %v1145
    %v1507 = vunpack.c.h.b16 %v1145
    %v1508 = vunpack.c.l.b16 %v1146
    %v1509 = vunpack.c.h.b16 %v1146
    %v1510 = vunpack.c.l.b16 %v1147
    %v1511 = vunpack.c.h.b16 %v1147
    %v1512 = vunpack.c.l.b16 %v1148
    %v1513 = vunpack.c.h.b16 %v1148
    %v1514 = vunpack.c.l.b16 %v1149
    %v1515 = vunpack.c.h.b16 %v1149
    %v1516 = vunpack.c.l.b16 %v1150
    %v1517 = vunpack.c.h.b16 %v1150
    %v1518 = vunpack.c.l.b16 %v1151
    %v1519 = vunpack.c.h.b16 %v1151
    %v1520 = vunpack.c.l.b16 %v1152
    %v1521 = vunpack.c.h.b16 %v1152
    %v1522 = vunpack.c.l.b16 %v1153
    %v1523 = vunpack.c.h.b16 %v1153
    %v1524 = vunpack.c.l.b16 %v1154
    %v1525 = vunpack.c.h.b16 %v1154
    %v1526 = vunpack.c.l.b16 %v1155
    %v1527 = vunpack.c.h.b16 %v1155
    %v1528 = vunpack.c.l.b16 %v1156
    %v1529 = vunpack.c.h.b16 %v1156
    %v1530 = vunpack.c.l.b16 %v1157
    %v1531 = vunpack.c.h.b16 %v1157
    %v1532 = vunpack.c.l.b16 %v1158
    %v1533 = vunpack.c.h.b16 %v1158
    %v1534 = vunpack.c.l.b16 %v1159
    %v1535 = vunpack.c.h.b16 %v1159
    %v1536 = vunpack.c.l.b16 %v1160
    %v1537 = vunpack.c.h.b16 %v1160
    %v1538 = vunpack.c.l.b16 %v1161
    %v1539 = vunpack.c.h.b16 %v1161
    %v1540 = vunpack.c.l.b16 %v1162
    %v1541 = vunpack.c.h.b16 %v1162
    %v1542 = vunpack.c.l.b16 %v1163
    %v1543 = vunpack.c.h.b16 %v1163
    %v1544 = vunpack.c.l.b16 %v1164
    %v1545 = vunpack.c.h.b16 %v1164
    %v1546 = vunpack.c.l.b16 %v1165
    %v1547 = vunpack.c.h.b16 %v1165
    %v1548 = vunpack.c.l.b16 %v1166
    %v1549 = vunpack.c.h.b16 %v1166
    %v1550 = vunpack.c.l.b16 %v1167
    %v1551 = vunpack.c.h.b16 %v1167
    %v1552 = vunpack.c.l.b16 %v1168
    %v1553 = vunpack.c.h.b16 %v1168
    %v1554 = vunpack.c.l.b16 %v1169
    %v1555 = vunpack.c.h.b16 %v1169
    %v1556 = vunpack.c.l.b16 %v1170
    %v1557 = vunpack.c.h.b16 %v1170
    %v1558 = vunpack.c.l.b16 %v1171
    %v1559 = vunpack.c.h.b16 %v1171
    %v1560 = vunpack.c.l.b16 %v1172
    %v1561 = vunpack.c.h.b16 %v1172
    %v1562 = vunpack.c.l.b16 %v1173
    %v1563 = vunpack.c.h.b16 %v1173
    %v1564 = vunpack.c.l.b16 %v1174
    %v1565 = vunpack.c.h.b16 %v1174
    %v1566 = vunpack.c.l.b16 %v1175
    %v1567 = vunpack.c.h.b16 %v1175
    %v1568 = vunpack.c.l.b16 %v1176
    %v1569 = vunpack.c.h.b16 %v1176
    %v1570 = vunpack.c.l.b16 %v1177
    %v1571 = vunpack.c.h.b16 %v1177
    %v1572 = vunpack.c.l.b16 %v1178
    %v1573 = vunpack.c.h.b16 %v1178
    %v1574 = vunpack.c.l.b16 %v1179
    %v1575 = vunpack.c.h.b16 %v1179
    %v1576 = vunpack.c.l.b16 %v1180
    %v1577 = vunpack.c.h.b16 %v1180
    %v1578 = vunpack.c.l.b16 %v1181
    %v1579 = vunpack.c.h.b16 %v1181
    %v1580 = vunpack.c.l.b16 %v1182
    %v1581 = vunpack.c.h.b16 %v1182
    %v1582 = vunpack.c.l.b16 %v1183
    %v1583 = vunpack.c.h.b16 %v1183
    %v1584 = vunpack.c.l.b16 %v1184
    %v1585 = vunpack.c.h.b16 %v1184
    %v1586 = vunpack.c.l.b16 %v1185
    %v1587 = vunpack.c.h.b16 %v1185
    %v1588 = vunpack.c.l.b16 %v1186
    %v1589 = vunpack.c.h.b16 %v1186
    %v1590 = vunpack.c.l.b16 %v1187
    %v1591 = vunpack.c.h.b16 %v1187
    %v1592 = vunpack.c.l.b16 %v1188
    %v1593 = vunpack.c.h.b16 %v1188
    %v1594 = vunpack.c.l.b16 %v1189
    %v1595 = vunpack.c.h.b16 %v1189
    %v1596 = vunpack.c.l.b16 %v1190
    %v1597 = vunpack.c.h.b16 %v1190
    %v1598 = vpack.c.b16 %v1346, %v1342
    %v1599 = vpack.c.b16 %v1347, %v1343
    %v1600 = vpack.c.b16 %v1348, %v1344
    %v1601 = vpack.c.b16 %v1349, %v1345
    %v1602 = vpack.c.b16 %v1354, %v1350
    %v1603 = vpack.c.b16 %v1355, %v1351
    %v1604 = vpack.c.b16 %v1356, %v1352
    %v1605 = vpack.c.b16 %v1357, %v1353
    %v1606 = vpack.c.b16 %v1362, %v1358
    %v1607 = vpack.c.b16 %v1363, %v1359
    %v1608 = vpack.c.b16 %v1364, %v1360
    %v1609 = vpack.c.b16 %v1365, %v1361
    %v1610 = vpack.c.b16 %v1370, %v1366
    %v1611 = vpack.c.b16 %v1371, %v1367
    %v1612 = vpack.c.b16 %v1372, %v1368
    %v1613 = vpack.c.b16 %v1373, %v1369
    %v1614 = vpack.c.b16 %v1378, %v1374
    %v1615 = vpack.c.b16 %v1379, %v1375
    %v1616 = vpack.c.b16 %v1380, %v1376
    %v1617 = vpack.c.b16 %v1381, %v1377
    %v1618 = vpack.c.b16 %v1386, %v1382
    %v1619 = vpack.c.b16 %v1387, %v1383
    %v1620 = vpack.c.b16 %v1388, %v1384
    %v1621 = vpack.c.b16 %v1389, %v1385
    %v1622 = vpack.c.b16 %v1394, %v1390
    %v1623 = vpack.c.b16 %v1395, %v1391
    %v1624 = vpack.c.b16 %v1396, %v1392
    %v1625 = vpack.c.b16 %v1397, %v1393
    %v1626 = vpack.c.b16 %v1402, %v1398
    %v1627 = vpack.c.b16 %v1403, %v1399
    %v1628 = vpack.c.b16 %v1404, %v1400
    %v1629 = vpack.c.b16 %v1405, %v1401
    %v1630 = vpack.c.b16 %v1410, %v1406
    %v1631 = vpack.c.b16 %v1411, %v1407
    %v1632 = vpack.c.b16 %v1412, %v1408
    %v1633 = vpack.c.b16 %v1413, %v1409
    %v1634 = vpack.c.b16 %v1418, %v1414
    %v1635 = vpack.c.b16 %v1419, %v1415
    %v1636 = vpack.c.b16 %v1420, %v1416
    %v1637 = vpack.c.b16 %v1421, %v1417
    %v1638 = vpack.c.b16 %v1426, %v1422
    %v1639 = vpack.c.b16 %v1427, %v1423
    %v1640 = vpack.c.b16 %v1428, %v1424
    %v1641 = vpack.c.b16 %v1429, %v1425
    %v1642 = vpack.c.b16 %v1434, %v1430
    %v1643 = vpack.c.b16 %v1435, %v1431
    %v1644 = vpack.c.b16 %v1436, %v1432
    %v1645 = vpack.c.b16 %v1437, %v1433
    %v1646 = vpack.c.b16 %v1442, %v1438
    %v1647 = vpack.c.b16 %v1443, %v1439
    %v1648 = vpack.c.b16 %v1444, %v1440
    %v1649 = vpack.c.b16 %v1445, %v1441
    %v1650 = vpack.c.b16 %v1450, %v1446
    %v1651 = vpack.c.b16 %v1451, %v1447
    %v1652 = vpack.c.b16 %v1452, %v1448
    %v1653 = vpack.c.b16 %v1453, %v1449
    %v1654 = vpack.c.b16 %v1458, %v1454
    %v1655 = vpack.c.b16 %v1459, %v1455
    %v1656 = vpack.c.b16 %v1460, %v1456
    %v1657 = vpack.c.b16 %v1461, %v1457
    %v1658 = vpack.c.b16 %v1466, %v1462
    %v1659 = vpack.c.b16 %v1467, %v1463
    %v1660 = vpack.c.b16 %v1468, %v1464
    %v1661 = vpack.c.b16 %v1469, %v1465
    %v1662 = vpack.c.b16 %v1474, %v1470
    %v1663 = vpack.c.b16 %v1475, %v1471
    %v1664 = vpack.c.b16 %v1476, %v1472
    %v1665 = vpack.c.b16 %v1477, %v1473
    %v1666 = vpack.c.b16 %v1482, %v1478
    %v1667 = vpack.c.b16 %v1483, %v1479
    %v1668 = vpack.c.b16 %v1484, %v1480
    %v1669 = vpack.c.b16 %v1485, %v1481
    %v1670 = vpack.c.b16 %v1490, %v1486
    %v1671 = vpack.c.b16 %v1491, %v1487
    %v1672 = vpack.c.b16 %v1492, %v1488
    %v1673 = vpack.c.b16 %v1493, %v1489
    %v1674 = vpack.c.b16 %v1498, %v1494
    %v1675 = vpack.c.b16 %v1499, %v1495
    %v1676 = vpack.c.b16 %v1500, %v1496
    %v1677 = vpack.c.b16 %v1501, %v1497
    %v1678 = vpack.c.b16 %v1506, %v1502
    %v1679 = vpack.c.b16 %v1507, %v1503
    %v1680 = vpack.c.b16 %v1508, %v1504
    %v1681 = vpack.c.b16 %v1509, %v1505
    %v1682 = vpack.c.b16 %v1514, %v1510
    %v1683 = vpack.c.b16 %v1515, %v1511
    %v1684 = vpack.c.b16 %v1516, %v1512
    %v1685 = vpack.c.b16 %v1517, %v1513
    %v1686 = vpack.c.b16 %v1522, %v1518
    %v1687 = vpack.c.b16 %v1523, %v1519
    %v1688 = vpack.c.b16 %v1524, %v1520
    %v1689 = vpack.c.b16 %v1525, %v1521
    %v1690 = vpack.c.b16 %v1530, %v1526
    %v1691 = vpack.c.b16 %v1531, %v1527
    %v1692 = vpack.c.b16 %v1532, %v1528
    %v1693 = vpack.c.b16 %v1533, %v1529
    %v1694 = vpack.c.b16 %v1538, %v1534
    %v1695 = vpack.c.b16 %v1539, %v1535
    %v1696 = vpack.c.b16 %v1540, %v1536
    %v1697 = vpack.c.b16 %v1541, %v1537
    %v1698 = vpack.c.b16 %v1546, %v1542
    %v1699 = vpack.c.b16 %v1547, %v1543
    %v1700 = vpack.c.b16 %v1548, %v1544
    %v1701 = vpack.c.b16 %v1549, %v1545
    %v1702 = vpack.c.b16 %v1554, %v1550
    %v1703 = vpack.c.b16 %v1555, %v1551
    %v1704 = vpack.c.b16 %v1556, %v1552
    %v1705 = vpack.c.b16 %v1557, %v1553
    %v1706 = vpack.c.b16 %v1562, %v1558
    %v1707 = vpack.c.b16 %v1563, %v1559
    %v1708 = vpack.c.b16 %v1564, %v1560
    %v1709 = vpack.c.b16 %v1565, %v1561
    %v1710 = vpack.c.b16 %v1570, %v1566
    %v1711 = vpack.c.b16 %v1571, %v1567
    %v1712 = vpack.c.b16 %v1572, %v1568
    %v1713 = vpack.c.b16 %v1573, %v1569
    %v1714 = vpack.c.b16 %v1578, %v1574
    %v1715 = vpack.c.b16 %v1579, %v1575
    %v1716 = vpack.c.b16 %v1580, %v1576
    %v1717 = vpack.c.b16 %v1581, %v1577
    %v1718 = vpack.c.b16 %v1586, %v1582
    %v1719 = vpack.c.b16 %v1587, %v1583
    %v1720 = vpack.c.b16 %v1588, %v1584
    %v1721 = vpack.c.b16 %v1589, %v1585
    %v1722 = vpack.c.b16 %v1594, %v1590
    %v1723 = vpack.c.b16 %v1595, %v1591
    %v1724 = vpack.c.b16 %v1596, %v1592
    %v1725 = vpack.c.b16 %v1597, %v1593
    %1854 = vmatprep.subr.bf16.mxu0 %v1627
    %1855 = vmatpush1.bf16.msra.mxu0 %v1626
    %1856 = vmatprep.subr.bf16.mxu0 %v1623
    %1857 = vmatpush1.bf16.msra.mxu0 %v1622
    %1858 = vmatprep.subr.bf16.mxu0 %v1619
    %1859 = vmatpush1.bf16.msra.mxu0 %v1618
    %1860 = vmatprep.subr.bf16.mxu0 %v1615
    %1861 = vmatpush1.bf16.msra.mxu0 %v1614
    %1862 = vmatprep.subr.bf16.mxu0 %v1611
    %1863 = vmatpush1.bf16.msra.mxu0 %v1610
    %1864 = vmatprep.subr.bf16.mxu0 %v1607
    %1865 = vmatpush1.bf16.msra.mxu0 %v1606
    %1866 = vmatprep.subr.bf16.mxu0 %v1603
    %1867 = vmatpush1.bf16.msra.mxu0 %v1602
    %1868 = vmatprep.subr.bf16.mxu0 %v1599
    %1869 = vmatpush1.bf16.msra.mxu0 %v1598
    %1870 = vmatprep.subr.bf16.mxu0 %v1659
    %1871 = vmatpush2.bf16.msra.mxu0 %v1658
    %1872 = vmatprep.subr.bf16.mxu0 %v1655
    %1873 = vmatpush2.bf16.msra.mxu0 %v1654
    %1874 = vmatprep.subr.bf16.mxu0 %v1651
    %1875 = vmatpush2.bf16.msra.mxu0 %v1650
    %1876 = vmatprep.subr.bf16.mxu0 %v1647
    %1877 = vmatpush2.bf16.msra.mxu0 %v1646
    %1878 = vmatprep.subr.bf16.mxu0 %v1643
    %1879 = vmatpush2.bf16.msra.mxu0 %v1642
    %1880 = vmatprep.subr.bf16.mxu0 %v1639
    %1881 = vmatpush2.bf16.msra.mxu0 %v1638
    %1882 = vmatprep.subr.bf16.mxu0 %v1635
    %1883 = vmatpush2.bf16.msra.mxu0 %v1634
    %1884 = vmatprep.subr.bf16.mxu0 %v1631
    %1885 = vmatpush2.bf16.msra.mxu0 %v1630
    %1886 = vmatprep.mubr.bf16.mxu0 %v1060
    %1887 = vmatmul.mubr.bf16.gmra.mxu0 %v1059
    %v1888 = vpop.f32.mrf.mxu0
    %v1889 = vadd.f32 %v1197, %v1888
    %v1890 = vpop.f32.mrf.mxu0
    %v1891 = vadd.f32 %v1201, %v1890
    %v1892 = vpop.f32.mrf.mxu0
    %v1893 = vpop.f32.mrf.mxu0
    %1894 = vdwg.mxu0
    %1895 = vmatprep.subr.bf16.mxu0 %v1691
    %1896 = vmatpush1.bf16.msra.mxu0 %v1690
    %1897 = vmatprep.subr.bf16.mxu0 %v1687
    %1898 = vmatpush1.bf16.msra.mxu0 %v1686
    %1899 = vmatprep.subr.bf16.mxu0 %v1683
    %1900 = vmatpush1.bf16.msra.mxu0 %v1682
    %1901 = vmatprep.subr.bf16.mxu0 %v1679
    %1902 = vmatpush1.bf16.msra.mxu0 %v1678
    %1903 = vmatprep.subr.bf16.mxu0 %v1675
    %1904 = vmatpush1.bf16.msra.mxu0 %v1674
    %1905 = vmatprep.subr.bf16.mxu0 %v1671
    %1906 = vmatpush1.bf16.msra.mxu0 %v1670
    %1907 = vmatprep.subr.bf16.mxu0 %v1667
    %1908 = vmatpush1.bf16.msra.mxu0 %v1666
    %1909 = vmatprep.subr.bf16.mxu0 %v1663
    %1910 = vmatpush1.bf16.msra.mxu0 %v1662
    %1911 = vmatprep.subr.bf16.mxu0 %v1723
    %1912 = vmatpush2.bf16.msra.mxu0 %v1722
    %1913 = vmatprep.subr.bf16.mxu0 %v1719
    %1914 = vmatpush2.bf16.msra.mxu0 %v1718
    %1915 = vmatprep.subr.bf16.mxu0 %v1715
    %1916 = vmatpush2.bf16.msra.mxu0 %v1714
    %1917 = vmatprep.subr.bf16.mxu0 %v1711
    %1918 = vmatpush2.bf16.msra.mxu0 %v1710
    %1919 = vmatprep.subr.bf16.mxu0 %v1707
    %1920 = vmatpush2.bf16.msra.mxu0 %v1706
    %1921 = vmatprep.subr.bf16.mxu0 %v1703
    %1922 = vmatpush2.bf16.msra.mxu0 %v1702
    %1923 = vmatprep.subr.bf16.mxu0 %v1699
    %1924 = vmatpush2.bf16.msra.mxu0 %v1698
    %1925 = vmatprep.subr.bf16.mxu0 %v1695
    %1926 = vmatpush2.bf16.msra.mxu0 %v1694
    %1927 = vmatprep.mubr.bf16.mxu0 %v1062
    %1928 = vmatmul.mubr.bf16.gmra.mxu0 %v1061
    %v1929 = vpop.f32.mrf.mxu0
    %v1930 = vadd.f32 %v1889, %v1929
    %v1931 = vpop.f32.mrf.mxu0
    %v1932 = vadd.f32 %v1891, %v1931
    %v1933 = vpop.f32.mrf.mxu0
    %v1934 = vpop.f32.mrf.mxu0
    %1935 = vdwg.mxu0
    %1936 = vmatprep.subr.bf16.mxu0 %v1629
    %1937 = vmatpush1.bf16.msra.mxu0 %v1628
    %1938 = vmatprep.subr.bf16.mxu0 %v1625
    %1939 = vmatpush1.bf16.msra.mxu0 %v1624
    %1940 = vmatprep.subr.bf16.mxu0 %v1621
    %1941 = vmatpush1.bf16.msra.mxu0 %v1620
    %1942 = vmatprep.subr.bf16.mxu0 %v1617
    %1943 = vmatpush1.bf16.msra.mxu0 %v1616
    %1944 = vmatprep.subr.bf16.mxu0 %v1613
    %1945 = vmatpush1.bf16.msra.mxu0 %v1612
    %1946 = vmatprep.subr.bf16.mxu0 %v1609
    %1947 = vmatpush1.bf16.msra.mxu0 %v1608
    %1948 = vmatprep.subr.bf16.mxu0 %v1605
    %1949 = vmatpush1.bf16.msra.mxu0 %v1604
    %1950 = vmatprep.subr.bf16.mxu0 %v1601
    %1951 = vmatpush1.bf16.msra.mxu0 %v1600
    %1952 = vmatprep.subr.bf16.mxu0 %v1661
    %1953 = vmatpush2.bf16.msra.mxu0 %v1660
    %1954 = vmatprep.subr.bf16.mxu0 %v1657
    %1955 = vmatpush2.bf16.msra.mxu0 %v1656
    %1956 = vmatprep.subr.bf16.mxu0 %v1653
    %1957 = vmatpush2.bf16.msra.mxu0 %v1652
    %1958 = vmatprep.subr.bf16.mxu0 %v1649
    %1959 = vmatpush2.bf16.msra.mxu0 %v1648
    %1960 = vmatprep.subr.bf16.mxu0 %v1645
    %1961 = vmatpush2.bf16.msra.mxu0 %v1644
    %1962 = vmatprep.subr.bf16.mxu0 %v1641
    %1963 = vmatpush2.bf16.msra.mxu0 %v1640
    %1964 = vmatprep.subr.bf16.mxu0 %v1637
    %1965 = vmatpush2.bf16.msra.mxu0 %v1636
    %1966 = vmatprep.subr.bf16.mxu0 %v1633
    %1967 = vmatpush2.bf16.msra.mxu0 %v1632
    %1968 = vmatprep.mubr.bf16.mxu0 %v1060
    %1969 = vmatmul.mubr.bf16.gmra.mxu0 %v1059
    %v1970 = vpop.f32.mrf.mxu0
    %v1971 = vadd.f32 %v1205, %v1970
    %v1972 = vpop.f32.mrf.mxu0
    %v1973 = vadd.f32 %v1209, %v1972
    %v1974 = vpop.f32.mrf.mxu0
    %v1975 = vpop.f32.mrf.mxu0
    %1976 = vdwg.mxu0
    %1977 = vmatprep.subr.bf16.mxu0 %v1693
    %1978 = vmatpush1.bf16.msra.mxu0 %v1692
    %1979 = vmatprep.subr.bf16.mxu0 %v1689
    %1980 = vmatpush1.bf16.msra.mxu0 %v1688
    %1981 = vmatprep.subr.bf16.mxu0 %v1685
    %1982 = vmatpush1.bf16.msra.mxu0 %v1684
    %1983 = vmatprep.subr.bf16.mxu0 %v1681
    %1984 = vmatpush1.bf16.msra.mxu0 %v1680
    %1985 = vmatprep.subr.bf16.mxu0 %v1677
    %1986 = vmatpush1.bf16.msra.mxu0 %v1676
    %1987 = vmatprep.subr.bf16.mxu0 %v1673
    %1988 = vmatpush1.bf16.msra.mxu0 %v1672
    %1989 = vmatprep.subr.bf16.mxu0 %v1669
    %1990 = vmatpush1.bf16.msra.mxu0 %v1668
    %1991 = vmatprep.subr.bf16.mxu0 %v1665
    %1992 = vmatpush1.bf16.msra.mxu0 %v1664
    %1993 = vmatprep.subr.bf16.mxu0 %v1725
    %1994 = vmatpush2.bf16.msra.mxu0 %v1724
    %1995 = vmatprep.subr.bf16.mxu0 %v1721
    %1996 = vmatpush2.bf16.msra.mxu0 %v1720
    %1997 = vmatprep.subr.bf16.mxu0 %v1717
    %1998 = vmatpush2.bf16.msra.mxu0 %v1716
    %1999 = vmatprep.subr.bf16.mxu0 %v1713
    %2000 = vmatpush2.bf16.msra.mxu0 %v1712
    %2001 = vmatprep.subr.bf16.mxu0 %v1709
    %2002 = vmatpush2.bf16.msra.mxu0 %v1708
    %2003 = vmatprep.subr.bf16.mxu0 %v1705
    %2004 = vmatpush2.bf16.msra.mxu0 %v1704
    %2005 = vmatprep.subr.bf16.mxu0 %v1701
    %2006 = vmatpush2.bf16.msra.mxu0 %v1700
    %2007 = vmatprep.subr.bf16.mxu0 %v1697
    %2008 = vmatpush2.bf16.msra.mxu0 %v1696
    %2009 = vmatprep.mubr.bf16.mxu0 %v1062
    %2010 = vmatmul.mubr.bf16.gmra.mxu0 %v1061
    %v2011 = vpop.f32.mrf.mxu0
    %v2012 = vadd.f32 %v1971, %v2011
    %v2013 = vpop.f32.mrf.mxu0
    %v2014 = vadd.f32 %v1973, %v2013
    %v2015 = vpop.f32.mrf.mxu0
    %v2016 = vpop.f32.mrf.mxu0
    %2017 = vdwg.mxu0
    %vm2018 = vcmp.ge.f32.partialorder %v1930, 0.0
    %vm2019 = vcmp.ge.f32.partialorder %v1932, 0.0
    %vm2020 = vcmp.ge.f32.partialorder %v2012, 0.0
    %vm2021 = vcmp.ge.f32.partialorder %v2014, 0.0
    %v2022 = vmul.f32 %v1930, 0.2
    %v2023 = vmul.f32 %v1932, 0.2
    %v2024 = vmul.f32 %v2012, 0.2
    %v2025 = vmul.f32 %v2014, 0.2
    %v2026 = vsel %vm2018, %v1930, %v2022
    %v2027 = vsel %vm2019, %v1932, %v2023
    %v2028 = vsel %vm2020, %v2012, %v2024
    %v2029 = vsel %vm2021, %v2014, %v2025
    %v2030 = vpack.c.bf16 %v2026, %v2026
    %v2031 = vpack.c.bf16 %v2027, %v2027
    %v2032 = vpack.c.bf16 %v2028, %v2028
    %v2033 = vpack.c.bf16 %v2029, %v2029
    %v2034 = vld [vmem:[#allocation8] sm:$0xff]
    %v2035 = vld [vmem:[#allocation8 + $0x8] sm:$0xff]
    %v2036 = vld [vmem:[#allocation8 + $0x10] sm:$0xff]
    %v2037 = vld [vmem:[#allocation8 + $0x18] sm:$0xff]
    %v2038 = vld [vmem:[#allocation8 + $0x20] sm:$0xff]
    %v2039 = vld [vmem:[#allocation8 + $0x28] sm:$0xff]
    %v2040 = vld [vmem:[#allocation8 + $0x30] sm:$0xff]
    %v2041 = vld [vmem:[#allocation8 + $0x38] sm:$0xff]
    %v2042 = vld [vmem:[#allocation8 + $0x40] sm:$0xff]
    %v2043 = vld [vmem:[#allocation8 + $0x48] sm:$0xff]
    %v2044 = vld [vmem:[#allocation8 + $0x50] sm:$0xff]
    %v2045 = vld [vmem:[#allocation8 + $0x58] sm:$0xff]
    %v2046 = vld [vmem:[#allocation8 + $0x60] sm:$0xff]
    %v2047 = vld [vmem:[#allocation8 + $0x68] sm:$0xff]
    %v2048 = vld [vmem:[#allocation8 + $0x70] sm:$0xff]
    %v2049 = vld [vmem:[#allocation8 + $0x78] sm:$0xff]
    %v2050 = vld [vmem:[#allocation8 + $0x80] sm:$0xff]
    %v2051 = vld [vmem:[#allocation8 + $0x88] sm:$0xff]
    %v2052 = vld [vmem:[#allocation8 + $0x90] sm:$0xff]
    %v2053 = vld [vmem:[#allocation8 + $0x98] sm:$0xff]
    %v2054 = vld [vmem:[#allocation8 + $0xa0] sm:$0xff]
    %v2055 = vld [vmem:[#allocation8 + $0xa8] sm:$0xff]
    %v2056 = vld [vmem:[#allocation8 + $0xb0] sm:$0xff]
    %v2057 = vld [vmem:[#allocation8 + $0xb8] sm:$0xff]
    %v2058 = vld [vmem:[#allocation8 + $0xc0] sm:$0xff]
    %v2059 = vld [vmem:[#allocation8 + $0xc8] sm:$0xff]
    %v2060 = vld [vmem:[#allocation8 + $0xd0] sm:$0xff]
    %v2061 = vld [vmem:[#allocation8 + $0xd8] sm:$0xff]
    %v2062 = vld [vmem:[#allocation8 + $0xe0] sm:$0xff]
    %v2063 = vld [vmem:[#allocation8 + $0xe8] sm:$0xff]
    %v2064 = vld [vmem:[#allocation8 + $0xf0] sm:$0xff]
    %v2065 = vld [vmem:[#allocation8 + $0xf8] sm:$0xff]
    %v2066 = vld [vmem:[#allocation8 + $0x100] sm:$0xff]
    %v2067 = vld [vmem:[#allocation8 + $0x108] sm:$0xff]
    %v2068 = vld [vmem:[#allocation8 + $0x110] sm:$0xff]
    %v2069 = vld [vmem:[#allocation8 + $0x118] sm:$0xff]
    %v2070 = vld [vmem:[#allocation8 + $0x120] sm:$0xff]
    %v2071 = vld [vmem:[#allocation8 + $0x128] sm:$0xff]
    %v2072 = vld [vmem:[#allocation8 + $0x130] sm:$0xff]
    %v2073 = vld [vmem:[#allocation8 + $0x138] sm:$0xff]
    %v2074 = vld [vmem:[#allocation8 + $0x140] sm:$0xff]
    %v2075 = vld [vmem:[#allocation8 + $0x148] sm:$0xff]
    %v2076 = vld [vmem:[#allocation8 + $0x150] sm:$0xff]
    %v2077 = vld [vmem:[#allocation8 + $0x158] sm:$0xff]
    %v2078 = vld [vmem:[#allocation8 + $0x160] sm:$0xff]
    %v2079 = vld [vmem:[#allocation8 + $0x168] sm:$0xff]
    %v2080 = vld [vmem:[#allocation8 + $0x170] sm:$0xff]
    %v2081 = vld [vmem:[#allocation8 + $0x178] sm:$0xff]
    %v2082 = vld [vmem:[#allocation8 + $0x180] sm:$0xff]
    %v2083 = vld [vmem:[#allocation8 + $0x188] sm:$0xff]
    %v2084 = vld [vmem:[#allocation8 + $0x190] sm:$0xff]
    %v2085 = vld [vmem:[#allocation8 + $0x198] sm:$0xff]
    %v2086 = vld [vmem:[#allocation8 + $0x1a0] sm:$0xff]
    %v2087 = vld [vmem:[#allocation8 + $0x1a8] sm:$0xff]
    %v2088 = vld [vmem:[#allocation8 + $0x1b0] sm:$0xff]
    %v2089 = vld [vmem:[#allocation8 + $0x1b8] sm:$0xff]
    %v2090 = vld [vmem:[#allocation8 + $0x1c0] sm:$0xff]
    %v2091 = vld [vmem:[#allocation8 + $0x1c8] sm:$0xff]
    %v2092 = vld [vmem:[#allocation8 + $0x1d0] sm:$0xff]
    %v2093 = vld [vmem:[#allocation8 + $0x1d8] sm:$0xff]
    %v2094 = vld [vmem:[#allocation8 + $0x1e0] sm:$0xff]
    %v2095 = vld [vmem:[#allocation8 + $0x1e8] sm:$0xff]
    %v2096 = vld [vmem:[#allocation8 + $0x1f0] sm:$0xff]
    %v2097 = vld [vmem:[#allocation8 + $0x1f8] sm:$0xff]
    %v2098 = vld [vmem:[#allocation8 + $0x200] sm:$0xff]
    %v2099 = vld [vmem:[#allocation8 + $0x208] sm:$0xff]
    %v2100 = vld [vmem:[#allocation8 + $0x210] sm:$0xff]
    %v2101 = vld [vmem:[#allocation8 + $0x218] sm:$0xff]
    %v2102 = vld [vmem:[#allocation8 + $0x220] sm:$0xff]
    %v2103 = vld [vmem:[#allocation8 + $0x228] sm:$0xff]
    %v2104 = vld [vmem:[#allocation8 + $0x230] sm:$0xff]
    %v2105 = vld [vmem:[#allocation8 + $0x238] sm:$0xff]
    %v2106 = vld [vmem:[#allocation8 + $0x240] sm:$0xff]
    %v2107 = vld [vmem:[#allocation8 + $0x248] sm:$0xff]
    %v2108 = vld [vmem:[#allocation8 + $0x250] sm:$0xff]
    %v2109 = vld [vmem:[#allocation8 + $0x258] sm:$0xff]
    %v2110 = vld [vmem:[#allocation8 + $0x260] sm:$0xff]
    %v2111 = vld [vmem:[#allocation8 + $0x268] sm:$0xff]
    %v2112 = vld [vmem:[#allocation8 + $0x270] sm:$0xff]
    %v2113 = vld [vmem:[#allocation8 + $0x278] sm:$0xff]
    %v2114 = vld [vmem:[#allocation8 + $0x280] sm:$0xff]
    %v2115 = vld [vmem:[#allocation8 + $0x288] sm:$0xff]
    %v2116 = vld [vmem:[#allocation8 + $0x290] sm:$0xff]
    %v2117 = vld [vmem:[#allocation8 + $0x298] sm:$0xff]
    %v2118 = vld [vmem:[#allocation8 + $0x2a0] sm:$0xff]
    %v2119 = vld [vmem:[#allocation8 + $0x2a8] sm:$0xff]
    %v2120 = vld [vmem:[#allocation8 + $0x2b0] sm:$0xff]
    %v2121 = vld [vmem:[#allocation8 + $0x2b8] sm:$0xff]
    %v2122 = vld [vmem:[#allocation8 + $0x2c0] sm:$0xff]
    %v2123 = vld [vmem:[#allocation8 + $0x2c8] sm:$0xff]
    %v2124 = vld [vmem:[#allocation8 + $0x2d0] sm:$0xff]
    %v2125 = vld [vmem:[#allocation8 + $0x2d8] sm:$0xff]
    %v2126 = vld [vmem:[#allocation8 + $0x2e0] sm:$0xff]
    %v2127 = vld [vmem:[#allocation8 + $0x2e8] sm:$0xff]
    %v2128 = vld [vmem:[#allocation8 + $0x2f0] sm:$0xff]
    %v2129 = vld [vmem:[#allocation8 + $0x2f8] sm:$0xff]
    %v2130 = vld [vmem:[#allocation8 + $0x300] sm:$0xff]
    %v2131 = vld [vmem:[#allocation8 + $0x308] sm:$0xff]
    %v2132 = vld [vmem:[#allocation8 + $0x310] sm:$0xff]
    %v2133 = vld [vmem:[#allocation8 + $0x318] sm:$0xff]
    %v2134 = vld [vmem:[#allocation8 + $0x320] sm:$0xff]
    %v2135 = vld [vmem:[#allocation8 + $0x328] sm:$0xff]
    %v2136 = vld [vmem:[#allocation8 + $0x330] sm:$0xff]
    %v2137 = vld [vmem:[#allocation8 + $0x338] sm:$0xff]
    %v2138 = vld [vmem:[#allocation8 + $0x340] sm:$0xff]
    %v2139 = vld [vmem:[#allocation8 + $0x348] sm:$0xff]
    %v2140 = vld [vmem:[#allocation8 + $0x350] sm:$0xff]
    %v2141 = vld [vmem:[#allocation8 + $0x358] sm:$0xff]
    %v2142 = vld [vmem:[#allocation8 + $0x360] sm:$0xff]
    %v2143 = vld [vmem:[#allocation8 + $0x368] sm:$0xff]
    %v2144 = vld [vmem:[#allocation8 + $0x370] sm:$0xff]
    %v2145 = vld [vmem:[#allocation8 + $0x378] sm:$0xff]
    %v2146 = vld [vmem:[#allocation8 + $0x380] sm:$0xff]
    %v2147 = vld [vmem:[#allocation8 + $0x388] sm:$0xff]
    %v2148 = vld [vmem:[#allocation8 + $0x390] sm:$0xff]
    %v2149 = vld [vmem:[#allocation8 + $0x398] sm:$0xff]
    %v2150 = vld [vmem:[#allocation8 + $0x3a0] sm:$0xff]
    %v2151 = vld [vmem:[#allocation8 + $0x3a8] sm:$0xff]
    %v2152 = vld [vmem:[#allocation8 + $0x3b0] sm:$0xff]
    %v2153 = vld [vmem:[#allocation8 + $0x3b8] sm:$0xff]
    %v2154 = vld [vmem:[#allocation8 + $0x3c0] sm:$0xff]
    %v2155 = vld [vmem:[#allocation8 + $0x3c8] sm:$0xff]
    %v2156 = vld [vmem:[#allocation8 + $0x3d0] sm:$0xff]
    %v2157 = vld [vmem:[#allocation8 + $0x3d8] sm:$0xff]
    %v2158 = vld [vmem:[#allocation8 + $0x3e0] sm:$0xff]
    %v2159 = vld [vmem:[#allocation8 + $0x3e8] sm:$0xff]
    %v2160 = vld [vmem:[#allocation8 + $0x3f0] sm:$0xff]
    %v2161 = vld [vmem:[#allocation8 + $0x3f8] sm:$0xff]
    %s2162 = scalar_lea.vmem [#allocation10], 2
    %v2163 = vld [vmem:[%s2162] ss:$4 sm:$0xf]
    %v2165 = vlaneseq
    %v2166 = vshrl.u32 %v2165, 7
    %v2167 = vsub.s32 0, %v2166
    %v2168 = vrot.slane %v2163, %v2167
    %v2169 = vlaneseq
    %v2170 = vshrl.u32 %v2169, 7
    %v2171 = vsub.s32 1, %v2170
    %v2172 = vrot.slane %v2163, %v2171
    %v2173 = vlaneseq
    %v2174 = vshrl.u32 %v2173, 7
    %v2175 = vsub.s32 2, %v2174
    %v2176 = vrot.slane %v2163, %v2175
    %v2177 = vlaneseq
    %v2178 = vshrl.u32 %v2177, 7
    %v2179 = vsub.s32 3, %v2178
    %v2180 = vrot.slane %v2163, %v2179
    %v2313 = vunpack.c.l.b16 %v2034
    %v2314 = vunpack.c.h.b16 %v2034
    %v2315 = vunpack.c.l.b16 %v2035
    %v2316 = vunpack.c.h.b16 %v2035
    %v2317 = vunpack.c.l.b16 %v2036
    %v2318 = vunpack.c.h.b16 %v2036
    %v2319 = vunpack.c.l.b16 %v2037
    %v2320 = vunpack.c.h.b16 %v2037
    %v2321 = vunpack.c.l.b16 %v2038
    %v2322 = vunpack.c.h.b16 %v2038
    %v2323 = vunpack.c.l.b16 %v2039
    %v2324 = vunpack.c.h.b16 %v2039
    %v2325 = vunpack.c.l.b16 %v2040
    %v2326 = vunpack.c.h.b16 %v2040
    %v2327 = vunpack.c.l.b16 %v2041
    %v2328 = vunpack.c.h.b16 %v2041
    %v2329 = vunpack.c.l.b16 %v2042
    %v2330 = vunpack.c.h.b16 %v2042
    %v2331 = vunpack.c.l.b16 %v2043
    %v2332 = vunpack.c.h.b16 %v2043
    %v2333 = vunpack.c.l.b16 %v2044
    %v2334 = vunpack.c.h.b16 %v2044
    %v2335 = vunpack.c.l.b16 %v2045
    %v2336 = vunpack.c.h.b16 %v2045
    %v2337 = vunpack.c.l.b16 %v2046
    %v2338 = vunpack.c.h.b16 %v2046
    %v2339 = vunpack.c.l.b16 %v2047
    %v2340 = vunpack.c.h.b16 %v2047
    %v2341 = vunpack.c.l.b16 %v2048
    %v2342 = vunpack.c.h.b16 %v2048
    %v2343 = vunpack.c.l.b16 %v2049
    %v2344 = vunpack.c.h.b16 %v2049
    %v2345 = vunpack.c.l.b16 %v2050
    %v2346 = vunpack.c.h.b16 %v2050
    %v2347 = vunpack.c.l.b16 %v2051
    %v2348 = vunpack.c.h.b16 %v2051
    %v2349 = vunpack.c.l.b16 %v2052
    %v2350 = vunpack.c.h.b16 %v2052
    %v2351 = vunpack.c.l.b16 %v2053
    %v2352 = vunpack.c.h.b16 %v2053
    %v2353 = vunpack.c.l.b16 %v2054
    %v2354 = vunpack.c.h.b16 %v2054
    %v2355 = vunpack.c.l.b16 %v2055
    %v2356 = vunpack.c.h.b16 %v2055
    %v2357 = vunpack.c.l.b16 %v2056
    %v2358 = vunpack.c.h.b16 %v2056
    %v2359 = vunpack.c.l.b16 %v2057
    %v2360 = vunpack.c.h.b16 %v2057
    %v2361 = vunpack.c.l.b16 %v2058
    %v2362 = vunpack.c.h.b16 %v2058
    %v2363 = vunpack.c.l.b16 %v2059
    %v2364 = vunpack.c.h.b16 %v2059
    %v2365 = vunpack.c.l.b16 %v2060
    %v2366 = vunpack.c.h.b16 %v2060
    %v2367 = vunpack.c.l.b16 %v2061
    %v2368 = vunpack.c.h.b16 %v2061
    %v2369 = vunpack.c.l.b16 %v2062
    %v2370 = vunpack.c.h.b16 %v2062
    %v2371 = vunpack.c.l.b16 %v2063
    %v2372 = vunpack.c.h.b16 %v2063
    %v2373 = vunpack.c.l.b16 %v2064
    %v2374 = vunpack.c.h.b16 %v2064
    %v2375 = vunpack.c.l.b16 %v2065
    %v2376 = vunpack.c.h.b16 %v2065
    %v2377 = vunpack.c.l.b16 %v2066
    %v2378 = vunpack.c.h.b16 %v2066
    %v2379 = vunpack.c.l.b16 %v2067
    %v2380 = vunpack.c.h.b16 %v2067
    %v2381 = vunpack.c.l.b16 %v2068
    %v2382 = vunpack.c.h.b16 %v2068
    %v2383 = vunpack.c.l.b16 %v2069
    %v2384 = vunpack.c.h.b16 %v2069
    %v2385 = vunpack.c.l.b16 %v2070
    %v2386 = vunpack.c.h.b16 %v2070
    %v2387 = vunpack.c.l.b16 %v2071
    %v2388 = vunpack.c.h.b16 %v2071
    %v2389 = vunpack.c.l.b16 %v2072
    %v2390 = vunpack.c.h.b16 %v2072
    %v2391 = vunpack.c.l.b16 %v2073
    %v2392 = vunpack.c.h.b16 %v2073
    %v2393 = vunpack.c.l.b16 %v2074
    %v2394 = vunpack.c.h.b16 %v2074
    %v2395 = vunpack.c.l.b16 %v2075
    %v2396 = vunpack.c.h.b16 %v2075
    %v2397 = vunpack.c.l.b16 %v2076
    %v2398 = vunpack.c.h.b16 %v2076
    %v2399 = vunpack.c.l.b16 %v2077
    %v2400 = vunpack.c.h.b16 %v2077
    %v2401 = vunpack.c.l.b16 %v2078
    %v2402 = vunpack.c.h.b16 %v2078
    %v2403 = vunpack.c.l.b16 %v2079
    %v2404 = vunpack.c.h.b16 %v2079
    %v2405 = vunpack.c.l.b16 %v2080
    %v2406 = vunpack.c.h.b16 %v2080
    %v2407 = vunpack.c.l.b16 %v2081
    %v2408 = vunpack.c.h.b16 %v2081
    %v2409 = vunpack.c.l.b16 %v2082
    %v2410 = vunpack.c.h.b16 %v2082
    %v2411 = vunpack.c.l.b16 %v2083
    %v2412 = vunpack.c.h.b16 %v2083
    %v2413 = vunpack.c.l.b16 %v2084
    %v2414 = vunpack.c.h.b16 %v2084
    %v2415 = vunpack.c.l.b16 %v2085
    %v2416 = vunpack.c.h.b16 %v2085
    %v2417 = vunpack.c.l.b16 %v2086
    %v2418 = vunpack.c.h.b16 %v2086
    %v2419 = vunpack.c.l.b16 %v2087
    %v2420 = vunpack.c.h.b16 %v2087
    %v2421 = vunpack.c.l.b16 %v2088
    %v2422 = vunpack.c.h.b16 %v2088
    %v2423 = vunpack.c.l.b16 %v2089
    %v2424 = vunpack.c.h.b16 %v2089
    %v2425 = vunpack.c.l.b16 %v2090
    %v2426 = vunpack.c.h.b16 %v2090
    %v2427 = vunpack.c.l.b16 %v2091
    %v2428 = vunpack.c.h.b16 %v2091
    %v2429 = vunpack.c.l.b16 %v2092
    %v2430 = vunpack.c.h.b16 %v2092
    %v2431 = vunpack.c.l.b16 %v2093
    %v2432 = vunpack.c.h.b16 %v2093
    %v2433 = vunpack.c.l.b16 %v2094
    %v2434 = vunpack.c.h.b16 %v2094
    %v2435 = vunpack.c.l.b16 %v2095
    %v2436 = vunpack.c.h.b16 %v2095
    %v2437 = vunpack.c.l.b16 %v2096
    %v2438 = vunpack.c.h.b16 %v2096
    %v2439 = vunpack.c.l.b16 %v2097
    %v2440 = vunpack.c.h.b16 %v2097
    %v2441 = vunpack.c.l.b16 %v2098
    %v2442 = vunpack.c.h.b16 %v2098
    %v2443 = vunpack.c.l.b16 %v2099
    %v2444 = vunpack.c.h.b16 %v2099
    %v2445 = vunpack.c.l.b16 %v2100
    %v2446 = vunpack.c.h.b16 %v2100
    %v2447 = vunpack.c.l.b16 %v2101
    %v2448 = vunpack.c.h.b16 %v2101
    %v2449 = vunpack.c.l.b16 %v2102
    %v2450 = vunpack.c.h.b16 %v2102
    %v2451 = vunpack.c.l.b16 %v2103
    %v2452 = vunpack.c.h.b16 %v2103
    %v2453 = vunpack.c.l.b16 %v2104
    %v2454 = vunpack.c.h.b16 %v2104
    %v2455 = vunpack.c.l.b16 %v2105
    %v2456 = vunpack.c.h.b16 %v2105
    %v2457 = vunpack.c.l.b16 %v2106
    %v2458 = vunpack.c.h.b16 %v2106
    %v2459 = vunpack.c.l.b16 %v2107
    %v2460 = vunpack.c.h.b16 %v2107
    %v2461 = vunpack.c.l.b16 %v2108
    %v2462 = vunpack.c.h.b16 %v2108
    %v2463 = vunpack.c.l.b16 %v2109
    %v2464 = vunpack.c.h.b16 %v2109
    %v2465 = vunpack.c.l.b16 %v2110
    %v2466 = vunpack.c.h.b16 %v2110
    %v2467 = vunpack.c.l.b16 %v2111
    %v2468 = vunpack.c.h.b16 %v2111
    %v2469 = vunpack.c.l.b16 %v2112
    %v2470 = vunpack.c.h.b16 %v2112
    %v2471 = vunpack.c.l.b16 %v2113
    %v2472 = vunpack.c.h.b16 %v2113
    %v2473 = vunpack.c.l.b16 %v2114
    %v2474 = vunpack.c.h.b16 %v2114
    %v2475 = vunpack.c.l.b16 %v2115
    %v2476 = vunpack.c.h.b16 %v2115
    %v2477 = vunpack.c.l.b16 %v2116
    %v2478 = vunpack.c.h.b16 %v2116
    %v2479 = vunpack.c.l.b16 %v2117
    %v2480 = vunpack.c.h.b16 %v2117
    %v2481 = vunpack.c.l.b16 %v2118
    %v2482 = vunpack.c.h.b16 %v2118
    %v2483 = vunpack.c.l.b16 %v2119
    %v2484 = vunpack.c.h.b16 %v2119
    %v2485 = vunpack.c.l.b16 %v2120
    %v2486 = vunpack.c.h.b16 %v2120
    %v2487 = vunpack.c.l.b16 %v2121
    %v2488 = vunpack.c.h.b16 %v2121
    %v2489 = vunpack.c.l.b16 %v2122
    %v2490 = vunpack.c.h.b16 %v2122
    %v2491 = vunpack.c.l.b16 %v2123
    %v2492 = vunpack.c.h.b16 %v2123
    %v2493 = vunpack.c.l.b16 %v2124
    %v2494 = vunpack.c.h.b16 %v2124
    %v2495 = vunpack.c.l.b16 %v2125
    %v2496 = vunpack.c.h.b16 %v2125
    %v2497 = vunpack.c.l.b16 %v2126
    %v2498 = vunpack.c.h.b16 %v2126
    %v2499 = vunpack.c.l.b16 %v2127
    %v2500 = vunpack.c.h.b16 %v2127
    %v2501 = vunpack.c.l.b16 %v2128
    %v2502 = vunpack.c.h.b16 %v2128
    %v2503 = vunpack.c.l.b16 %v2129
    %v2504 = vunpack.c.h.b16 %v2129
    %v2505 = vunpack.c.l.b16 %v2130
    %v2506 = vunpack.c.h.b16 %v2130
    %v2507 = vunpack.c.l.b16 %v2131
    %v2508 = vunpack.c.h.b16 %v2131
    %v2509 = vunpack.c.l.b16 %v2132
    %v2510 = vunpack.c.h.b16 %v2132
    %v2511 = vunpack.c.l.b16 %v2133
    %v2512 = vunpack.c.h.b16 %v2133
    %v2513 = vunpack.c.l.b16 %v2134
    %v2514 = vunpack.c.h.b16 %v2134
    %v2515 = vunpack.c.l.b16 %v2135
    %v2516 = vunpack.c.h.b16 %v2135
    %v2517 = vunpack.c.l.b16 %v2136
    %v2518 = vunpack.c.h.b16 %v2136
    %v2519 = vunpack.c.l.b16 %v2137
    %v2520 = vunpack.c.h.b16 %v2137
    %v2521 = vunpack.c.l.b16 %v2138
    %v2522 = vunpack.c.h.b16 %v2138
    %v2523 = vunpack.c.l.b16 %v2139
    %v2524 = vunpack.c.h.b16 %v2139
    %v2525 = vunpack.c.l.b16 %v2140
    %v2526 = vunpack.c.h.b16 %v2140
    %v2527 = vunpack.c.l.b16 %v2141
    %v2528 = vunpack.c.h.b16 %v2141
    %v2529 = vunpack.c.l.b16 %v2142
    %v2530 = vunpack.c.h.b16 %v2142
    %v2531 = vunpack.c.l.b16 %v2143
    %v2532 = vunpack.c.h.b16 %v2143
    %v2533 = vunpack.c.l.b16 %v2144
    %v2534 = vunpack.c.h.b16 %v2144
    %v2535 = vunpack.c.l.b16 %v2145
    %v2536 = vunpack.c.h.b16 %v2145
    %v2537 = vunpack.c.l.b16 %v2146
    %v2538 = vunpack.c.h.b16 %v2146
    %v2539 = vunpack.c.l.b16 %v2147
    %v2540 = vunpack.c.h.b16 %v2147
    %v2541 = vunpack.c.l.b16 %v2148
    %v2542 = vunpack.c.h.b16 %v2148
    %v2543 = vunpack.c.l.b16 %v2149
    %v2544 = vunpack.c.h.b16 %v2149
    %v2545 = vunpack.c.l.b16 %v2150
    %v2546 = vunpack.c.h.b16 %v2150
    %v2547 = vunpack.c.l.b16 %v2151
    %v2548 = vunpack.c.h.b16 %v2151
    %v2549 = vunpack.c.l.b16 %v2152
    %v2550 = vunpack.c.h.b16 %v2152
    %v2551 = vunpack.c.l.b16 %v2153
    %v2552 = vunpack.c.h.b16 %v2153
    %v2553 = vunpack.c.l.b16 %v2154
    %v2554 = vunpack.c.h.b16 %v2154
    %v2555 = vunpack.c.l.b16 %v2155
    %v2556 = vunpack.c.h.b16 %v2155
    %v2557 = vunpack.c.l.b16 %v2156
    %v2558 = vunpack.c.h.b16 %v2156
    %v2559 = vunpack.c.l.b16 %v2157
    %v2560 = vunpack.c.h.b16 %v2157
    %v2561 = vunpack.c.l.b16 %v2158
    %v2562 = vunpack.c.h.b16 %v2158
    %v2563 = vunpack.c.l.b16 %v2159
    %v2564 = vunpack.c.h.b16 %v2159
    %v2565 = vunpack.c.l.b16 %v2160
    %v2566 = vunpack.c.h.b16 %v2160
    %v2567 = vunpack.c.l.b16 %v2161
    %v2568 = vunpack.c.h.b16 %v2161
    %v2569 = vpack.c.b16 %v2317, %v2313
    %v2570 = vpack.c.b16 %v2318, %v2314
    %v2571 = vpack.c.b16 %v2319, %v2315
    %v2572 = vpack.c.b16 %v2320, %v2316
    %v2573 = vpack.c.b16 %v2325, %v2321
    %v2574 = vpack.c.b16 %v2326, %v2322
    %v2575 = vpack.c.b16 %v2327, %v2323
    %v2576 = vpack.c.b16 %v2328, %v2324
    %v2577 = vpack.c.b16 %v2333, %v2329
    %v2578 = vpack.c.b16 %v2334, %v2330
    %v2579 = vpack.c.b16 %v2335, %v2331
    %v2580 = vpack.c.b16 %v2336, %v2332
    %v2581 = vpack.c.b16 %v2341, %v2337
    %v2582 = vpack.c.b16 %v2342, %v2338
    %v2583 = vpack.c.b16 %v2343, %v2339
    %v2584 = vpack.c.b16 %v2344, %v2340
    %v2585 = vpack.c.b16 %v2349, %v2345
    %v2586 = vpack.c.b16 %v2350, %v2346
    %v2587 = vpack.c.b16 %v2351, %v2347
    %v2588 = vpack.c.b16 %v2352, %v2348
    %v2589 = vpack.c.b16 %v2357, %v2353
    %v2590 = vpack.c.b16 %v2358, %v2354
    %v2591 = vpack.c.b16 %v2359, %v2355
    %v2592 = vpack.c.b16 %v2360, %v2356
    %v2593 = vpack.c.b16 %v2365, %v2361
    %v2594 = vpack.c.b16 %v2366, %v2362
    %v2595 = vpack.c.b16 %v2367, %v2363
    %v2596 = vpack.c.b16 %v2368, %v2364
    %v2597 = vpack.c.b16 %v2373, %v2369
    %v2598 = vpack.c.b16 %v2374, %v2370
    %v2599 = vpack.c.b16 %v2375, %v2371
    %v2600 = vpack.c.b16 %v2376, %v2372
    %v2601 = vpack.c.b16 %v2381, %v2377
    %v2602 = vpack.c.b16 %v2382, %v2378
    %v2603 = vpack.c.b16 %v2383, %v2379
    %v2604 = vpack.c.b16 %v2384, %v2380
    %v2605 = vpack.c.b16 %v2389, %v2385
    %v2606 = vpack.c.b16 %v2390, %v2386
    %v2607 = vpack.c.b16 %v2391, %v2387
    %v2608 = vpack.c.b16 %v2392, %v2388
    %v2609 = vpack.c.b16 %v2397, %v2393
    %v2610 = vpack.c.b16 %v2398, %v2394
    %v2611 = vpack.c.b16 %v2399, %v2395
    %v2612 = vpack.c.b16 %v2400, %v2396
    %v2613 = vpack.c.b16 %v2405, %v2401
    %v2614 = vpack.c.b16 %v2406, %v2402
    %v2615 = vpack.c.b16 %v2407, %v2403
    %v2616 = vpack.c.b16 %v2408, %v2404
    %v2617 = vpack.c.b16 %v2413, %v2409
    %v2618 = vpack.c.b16 %v2414, %v2410
    %v2619 = vpack.c.b16 %v2415, %v2411
    %v2620 = vpack.c.b16 %v2416, %v2412
    %v2621 = vpack.c.b16 %v2421, %v2417
    %v2622 = vpack.c.b16 %v2422, %v2418
    %v2623 = vpack.c.b16 %v2423, %v2419
    %v2624 = vpack.c.b16 %v2424, %v2420
    %v2625 = vpack.c.b16 %v2429, %v2425
    %v2626 = vpack.c.b16 %v2430, %v2426
    %v2627 = vpack.c.b16 %v2431, %v2427
    %v2628 = vpack.c.b16 %v2432, %v2428
    %v2629 = vpack.c.b16 %v2437, %v2433
    %v2630 = vpack.c.b16 %v2438, %v2434
    %v2631 = vpack.c.b16 %v2439, %v2435
    %v2632 = vpack.c.b16 %v2440, %v2436
    %v2633 = vpack.c.b16 %v2445, %v2441
    %v2634 = vpack.c.b16 %v2446, %v2442
    %v2635 = vpack.c.b16 %v2447, %v2443
    %v2636 = vpack.c.b16 %v2448, %v2444
    %v2637 = vpack.c.b16 %v2453, %v2449
    %v2638 = vpack.c.b16 %v2454, %v2450
    %v2639 = vpack.c.b16 %v2455, %v2451
    %v2640 = vpack.c.b16 %v2456, %v2452
    %v2641 = vpack.c.b16 %v2461, %v2457
    %v2642 = vpack.c.b16 %v2462, %v2458
    %v2643 = vpack.c.b16 %v2463, %v2459
    %v2644 = vpack.c.b16 %v2464, %v2460
    %v2645 = vpack.c.b16 %v2469, %v2465
    %v2646 = vpack.c.b16 %v2470, %v2466
    %v2647 = vpack.c.b16 %v2471, %v2467
    %v2648 = vpack.c.b16 %v2472, %v2468
    %v2649 = vpack.c.b16 %v2477, %v2473
    %v2650 = vpack.c.b16 %v2478, %v2474
    %v2651 = vpack.c.b16 %v2479, %v2475
    %v2652 = vpack.c.b16 %v2480, %v2476
    %v2653 = vpack.c.b16 %v2485, %v2481
    %v2654 = vpack.c.b16 %v2486, %v2482
    %v2655 = vpack.c.b16 %v2487, %v2483
    %v2656 = vpack.c.b16 %v2488, %v2484
    %v2657 = vpack.c.b16 %v2493, %v2489
    %v2658 = vpack.c.b16 %v2494, %v2490
    %v2659 = vpack.c.b16 %v2495, %v2491
    %v2660 = vpack.c.b16 %v2496, %v2492
    %v2661 = vpack.c.b16 %v2501, %v2497
    %v2662 = vpack.c.b16 %v2502, %v2498
    %v2663 = vpack.c.b16 %v2503, %v2499
    %v2664 = vpack.c.b16 %v2504, %v2500
    %v2665 = vpack.c.b16 %v2509, %v2505
    %v2666 = vpack.c.b16 %v2510, %v2506
    %v2667 = vpack.c.b16 %v2511, %v2507
    %v2668 = vpack.c.b16 %v2512, %v2508
    %v2669 = vpack.c.b16 %v2517, %v2513
    %v2670 = vpack.c.b16 %v2518, %v2514
    %v2671 = vpack.c.b16 %v2519, %v2515
    %v2672 = vpack.c.b16 %v2520, %v2516
    %v2673 = vpack.c.b16 %v2525, %v2521
    %v2674 = vpack.c.b16 %v2526, %v2522
    %v2675 = vpack.c.b16 %v2527, %v2523
    %v2676 = vpack.c.b16 %v2528, %v2524
    %v2677 = vpack.c.b16 %v2533, %v2529
    %v2678 = vpack.c.b16 %v2534, %v2530
    %v2679 = vpack.c.b16 %v2535, %v2531
    %v2680 = vpack.c.b16 %v2536, %v2532
    %v2681 = vpack.c.b16 %v2541, %v2537
    %v2682 = vpack.c.b16 %v2542, %v2538
    %v2683 = vpack.c.b16 %v2543, %v2539
    %v2684 = vpack.c.b16 %v2544, %v2540
    %v2685 = vpack.c.b16 %v2549, %v2545
    %v2686 = vpack.c.b16 %v2550, %v2546
    %v2687 = vpack.c.b16 %v2551, %v2547
    %v2688 = vpack.c.b16 %v2552, %v2548
    %v2689 = vpack.c.b16 %v2557, %v2553
    %v2690 = vpack.c.b16 %v2558, %v2554
    %v2691 = vpack.c.b16 %v2559, %v2555
    %v2692 = vpack.c.b16 %v2560, %v2556
    %v2693 = vpack.c.b16 %v2565, %v2561
    %v2694 = vpack.c.b16 %v2566, %v2562
    %v2695 = vpack.c.b16 %v2567, %v2563
    %v2696 = vpack.c.b16 %v2568, %v2564
    %2825 = vmatprep.subr.bf16.mxu0 %v2598
    %2826 = vmatpush1.bf16.msra.mxu0 %v2597
    %2827 = vmatprep.subr.bf16.mxu0 %v2594
    %2828 = vmatpush1.bf16.msra.mxu0 %v2593
    %2829 = vmatprep.subr.bf16.mxu0 %v2590
    %2830 = vmatpush1.bf16.msra.mxu0 %v2589
    %2831 = vmatprep.subr.bf16.mxu0 %v2586
    %2832 = vmatpush1.bf16.msra.mxu0 %v2585
    %2833 = vmatprep.subr.bf16.mxu0 %v2582
    %2834 = vmatpush1.bf16.msra.mxu0 %v2581
    %2835 = vmatprep.subr.bf16.mxu0 %v2578
    %2836 = vmatpush1.bf16.msra.mxu0 %v2577
    %2837 = vmatprep.subr.bf16.mxu0 %v2574
    %2838 = vmatpush1.bf16.msra.mxu0 %v2573
    %2839 = vmatprep.subr.bf16.mxu0 %v2570
    %2840 = vmatpush1.bf16.msra.mxu0 %v2569
    %2841 = vmatprep.subr.bf16.mxu0 %v2630
    %2842 = vmatpush2.bf16.msra.mxu0 %v2629
    %2843 = vmatprep.subr.bf16.mxu0 %v2626
    %2844 = vmatpush2.bf16.msra.mxu0 %v2625
    %2845 = vmatprep.subr.bf16.mxu0 %v2622
    %2846 = vmatpush2.bf16.msra.mxu0 %v2621
    %2847 = vmatprep.subr.bf16.mxu0 %v2618
    %2848 = vmatpush2.bf16.msra.mxu0 %v2617
    %2849 = vmatprep.subr.bf16.mxu0 %v2614
    %2850 = vmatpush2.bf16.msra.mxu0 %v2613
    %2851 = vmatprep.subr.bf16.mxu0 %v2610
    %2852 = vmatpush2.bf16.msra.mxu0 %v2609
    %2853 = vmatprep.subr.bf16.mxu0 %v2606
    %2854 = vmatpush2.bf16.msra.mxu0 %v2605
    %2855 = vmatprep.subr.bf16.mxu0 %v2602
    %2856 = vmatpush2.bf16.msra.mxu0 %v2601
    %2857 = vmatprep.mubr.bf16.mxu0 %v2031
    %2858 = vmatmul.mubr.bf16.gmra.mxu0 %v2030
    %v2859 = vpop.f32.mrf.mxu0
    %v2860 = vadd.f32 %v2168, %v2859
    %v2861 = vpop.f32.mrf.mxu0
    %v2862 = vadd.f32 %v2172, %v2861
    %v2863 = vpop.f32.mrf.mxu0
    %v2864 = vpop.f32.mrf.mxu0
    %2865 = vdwg.mxu0
    %2866 = vmatprep.subr.bf16.mxu0 %v2662
    %2867 = vmatpush1.bf16.msra.mxu0 %v2661
    %2868 = vmatprep.subr.bf16.mxu0 %v2658
    %2869 = vmatpush1.bf16.msra.mxu0 %v2657
    %2870 = vmatprep.subr.bf16.mxu0 %v2654
    %2871 = vmatpush1.bf16.msra.mxu0 %v2653
    %2872 = vmatprep.subr.bf16.mxu0 %v2650
    %2873 = vmatpush1.bf16.msra.mxu0 %v2649
    %2874 = vmatprep.subr.bf16.mxu0 %v2646
    %2875 = vmatpush1.bf16.msra.mxu0 %v2645
    %2876 = vmatprep.subr.bf16.mxu0 %v2642
    %2877 = vmatpush1.bf16.msra.mxu0 %v2641
    %2878 = vmatprep.subr.bf16.mxu0 %v2638
    %2879 = vmatpush1.bf16.msra.mxu0 %v2637
    %2880 = vmatprep.subr.bf16.mxu0 %v2634
    %2881 = vmatpush1.bf16.msra.mxu0 %v2633
    %2882 = vmatprep.subr.bf16.mxu0 %v2694
    %2883 = vmatpush2.bf16.msra.mxu0 %v2693
    %2884 = vmatprep.subr.bf16.mxu0 %v2690
    %2885 = vmatpush2.bf16.msra.mxu0 %v2689
    %2886 = vmatprep.subr.bf16.mxu0 %v2686
    %2887 = vmatpush2.bf16.msra.mxu0 %v2685
    %2888 = vmatprep.subr.bf16.mxu0 %v2682
    %2889 = vmatpush2.bf16.msra.mxu0 %v2681
    %2890 = vmatprep.subr.bf16.mxu0 %v2678
    %2891 = vmatpush2.bf16.msra.mxu0 %v2677
    %2892 = vmatprep.subr.bf16.mxu0 %v2674
    %2893 = vmatpush2.bf16.msra.mxu0 %v2673
    %2894 = vmatprep.subr.bf16.mxu0 %v2670
    %2895 = vmatpush2.bf16.msra.mxu0 %v2669
    %2896 = vmatprep.subr.bf16.mxu0 %v2666
    %2897 = vmatpush2.bf16.msra.mxu0 %v2665
    %2898 = vmatprep.mubr.bf16.mxu0 %v2033
    %2899 = vmatmul.mubr.bf16.gmra.mxu0 %v2032
    %v2900 = vpop.f32.mrf.mxu0
    %v2901 = vadd.f32 %v2860, %v2900
    %v2902 = vpop.f32.mrf.mxu0
    %v2903 = vadd.f32 %v2862, %v2902
    %v2904 = vpop.f32.mrf.mxu0
    %v2905 = vpop.f32.mrf.mxu0
    %2906 = vdwg.mxu0
    %2907 = vmatprep.subr.bf16.mxu0 %v2600
    %2908 = vmatpush1.bf16.msra.mxu0 %v2599
    %2909 = vmatprep.subr.bf16.mxu0 %v2596
    %2910 = vmatpush1.bf16.msra.mxu0 %v2595
    %2911 = vmatprep.subr.bf16.mxu0 %v2592
    %2912 = vmatpush1.bf16.msra.mxu0 %v2591
    %2913 = vmatprep.subr.bf16.mxu0 %v2588
    %2914 = vmatpush1.bf16.msra.mxu0 %v2587
    %2915 = vmatprep.subr.bf16.mxu0 %v2584
    %2916 = vmatpush1.bf16.msra.mxu0 %v2583
    %2917 = vmatprep.subr.bf16.mxu0 %v2580
    %2918 = vmatpush1.bf16.msra.mxu0 %v2579
    %2919 = vmatprep.subr.bf16.mxu0 %v2576
    %2920 = vmatpush1.bf16.msra.mxu0 %v2575
    %2921 = vmatprep.subr.bf16.mxu0 %v2572
    %2922 = vmatpush1.bf16.msra.mxu0 %v2571
    %2923 = vmatprep.subr.bf16.mxu0 %v2632
    %2924 = vmatpush2.bf16.msra.mxu0 %v2631
    %2925 = vmatprep.subr.bf16.mxu0 %v2628
    %2926 = vmatpush2.bf16.msra.mxu0 %v2627
    %2927 = vmatprep.subr.bf16.mxu0 %v2624
    %2928 = vmatpush2.bf16.msra.mxu0 %v2623
    %2929 = vmatprep.subr.bf16.mxu0 %v2620
    %2930 = vmatpush2.bf16.msra.mxu0 %v2619
    %2931 = vmatprep.subr.bf16.mxu0 %v2616
    %2932 = vmatpush2.bf16.msra.mxu0 %v2615
    %2933 = vmatprep.subr.bf16.mxu0 %v2612
    %2934 = vmatpush2.bf16.msra.mxu0 %v2611
    %2935 = vmatprep.subr.bf16.mxu0 %v2608
    %2936 = vmatpush2.bf16.msra.mxu0 %v2607
    %2937 = vmatprep.subr.bf16.mxu0 %v2604
    %2938 = vmatpush2.bf16.msra.mxu0 %v2603
    %2939 = vmatprep.mubr.bf16.mxu0 %v2031
    %2940 = vmatmul.mubr.bf16.gmra.mxu0 %v2030
    %v2941 = vpop.f32.mrf.mxu0
    %v2942 = vadd.f32 %v2176, %v2941
    %v2943 = vpop.f32.mrf.mxu0
    %v2944 = vadd.f32 %v2180, %v2943
    %v2945 = vpop.f32.mrf.mxu0
    %v2946 = vpop.f32.mrf.mxu0
    %2947 = vdwg.mxu0
    %2948 = vmatprep.subr.bf16.mxu0 %v2664
    %2949 = vmatpush1.bf16.msra.mxu0 %v2663
    %2950 = vmatprep.subr.bf16.mxu0 %v2660
    %2951 = vmatpush1.bf16.msra.mxu0 %v2659
    %2952 = vmatprep.subr.bf16.mxu0 %v2656
    %2953 = vmatpush1.bf16.msra.mxu0 %v2655
    %2954 = vmatprep.subr.bf16.mxu0 %v2652
    %2955 = vmatpush1.bf16.msra.mxu0 %v2651
    %2956 = vmatprep.subr.bf16.mxu0 %v2648
    %2957 = vmatpush1.bf16.msra.mxu0 %v2647
    %2958 = vmatprep.subr.bf16.mxu0 %v2644
    %2959 = vmatpush1.bf16.msra.mxu0 %v2643
    %2960 = vmatprep.subr.bf16.mxu0 %v2640
    %2961 = vmatpush1.bf16.msra.mxu0 %v2639
    %2962 = vmatprep.subr.bf16.mxu0 %v2636
    %2963 = vmatpush1.bf16.msra.mxu0 %v2635
    %2964 = vmatprep.subr.bf16.mxu0 %v2696
    %2965 = vmatpush2.bf16.msra.mxu0 %v2695
    %2966 = vmatprep.subr.bf16.mxu0 %v2692
    %2967 = vmatpush2.bf16.msra.mxu0 %v2691
    %2968 = vmatprep.subr.bf16.mxu0 %v2688
    %2969 = vmatpush2.bf16.msra.mxu0 %v2687
    %2970 = vmatprep.subr.bf16.mxu0 %v2684
    %2971 = vmatpush2.bf16.msra.mxu0 %v2683
    %2972 = vmatprep.subr.bf16.mxu0 %v2680
    %2973 = vmatpush2.bf16.msra.mxu0 %v2679
    %2974 = vmatprep.subr.bf16.mxu0 %v2676
    %2975 = vmatpush2.bf16.msra.mxu0 %v2675
    %2976 = vmatprep.subr.bf16.mxu0 %v2672
    %2977 = vmatpush2.bf16.msra.mxu0 %v2671
    %2978 = vmatprep.subr.bf16.mxu0 %v2668
    %2979 = vmatpush2.bf16.msra.mxu0 %v2667
    %2980 = vmatprep.mubr.bf16.mxu0 %v2033
    %2981 = vmatmul.mubr.bf16.gmra.mxu0 %v2032
    %v2982 = vpop.f32.mrf.mxu0
    %v2983 = vadd.f32 %v2942, %v2982
    %v2984 = vpop.f32.mrf.mxu0
    %v2985 = vadd.f32 %v2944, %v2984
    %v2986 = vpop.f32.mrf.mxu0
    %v2987 = vpop.f32.mrf.mxu0
    %2988 = vdwg.mxu0
    %v2989 = vmax.f32 %v2901, 0.0
    %v2990 = vmax.f32 %v2903, 0.0
    %v2991 = vmax.f32 %v2983, 0.0
    %v2992 = vmax.f32 %v2985, 0.0
    %2993 = vst [vmem:[#allocation11] sm:$0xff] %v2989
    %2994 = vst [vmem:[#allocation11 + $0x8] sm:$0xff] %v2990
    %2995 = vst [vmem:[#allocation11 + $0x10] sm:$0xff] %v2991
    %2996 = vst [vmem:[#allocation11 + $0x18] sm:$0xff] %v2992
    // Predicated region
    $region42: #{tpu_custom_call.1} parent=1 // pred_check
      _
    $region43: #{tpu_custom_call.1} parent=1 // pred_check_branch
      %2998 = sbr.rel (0) target = $region45
    $region44: #{tpu_custom_call.1} parent=1 // pred_region
      %s3000 = ssub.s32 512, 512
      %3001 = vsyncadd [#allocation4], %s3000
      %s3003 = sshll.u32 [#allocation11], 4
      %s3004 = int_to_ptr.vmem [resolvable:$true] %s3003
      %3006 = dma.vmem_to_hbm [thread:$0]  %s3004, 512, %s5, [#allocation4]
    $region45: #{tpu_custom_call.1} parent=1 // pred_fallthru
      _
    // Predicated region
    $region46: #{tpu_custom_call.1} parent=1 // pred_check
      _
    $region47: #{tpu_custom_call.1} parent=1 // pred_check_branch
      %3008 = sbr.rel (0) target = $region49
    $region48: #{tpu_custom_call.1} parent=1 // pred_region
      %3009 = dma.done [#allocation4], 512
    $region49: #{tpu_custom_call.1} parent=1 // pred_fallthru
      _
    %3010 = vsyncpa [#allocation3], 1
    %3011 = vsyncpa [#allocation6], 1
    %3012 = vsyncpa [#allocation9], 1
    %3013 = vsyncpa [#allocation4], 1

// kernel: tpu_custom_call.1
$region0: #{tpu_custom_call.1}
  #allocation0 [shape = 'u32[]', space=smem, size = 0x4, offset = 0x4, fixed_abs, tag = 'smem constant byte address 0x4 - core index']
  #allocation1 [shape = 'u32[144,128]{1,0:T(1,128)}', space=vmem, size = 0x12000, scoped, tag = 'internal scratch']
  %s0 = inlined_call_operand.hbm [shape: f32[8,512], index: 0, kind: input, shape index: {}]
  %s1 = inlined_call_operand.hbm [shape: bf16[512,512], index: 1, kind: input, shape index: {}]
  %s2 = inlined_call_operand.hbm [shape: bf16[512,512], index: 2, kind: input, shape index: {}]
  %s3 = inlined_call_operand.hbm [shape: bf16[512,512], index: 3, kind: input, shape index: {}]
  %s4 = inlined_call_operand.hbm [shape: f32[3,512], index: 4, kind: input, shape index: {}]
  %s5 = inlined_call_operand.hbm [shape: f32[8,512], index: 5, kind: output, shape index: {}]
  %s6 = sld [smem:[#allocation0]]
  $region50: #{tpu_custom_call.1} parent=0
    _
  %s8 = ssub.s32 1, %s6
  %s9 = scalar_select 0, %s8, %s6
  $region1: #{tpu_custom_call.1} parent=0
    #allocation2 [shape = 'u8[16384]{0}', space=vmem, size = 0x4000, scoped, tag = 'input window, operand 0, single buffered']
    #allocation3 [shape = 's32[1]{0}', space=sflag, size = 0x4, scoped, tag = 'scoped memory for tpu_custom_call.1']
    #allocation4 [shape = 's32[1]{0}', space=sflag, size = 0x4, scoped, tag = 'scoped memory for tpu_custom_call.1']
    #allocation5 [shape = 'u8[524288]{0}', space=vmem, size = 0x80000, scoped, tag = 'input window, operand 1, single buffered']
    #allocation6 [shape = 's32[1]{0}', space=sflag, size = 0x4, scoped, tag = 'scoped memory for tpu_custom_call.1']
    #allocation7 [shape = 'u8[524288]{0}', space=vmem, size = 0x80000, scoped, tag = 'input window, operand 2, single buffered']
    #allocation8 [shape = 'u8[524288]{0}', space=vmem, size = 0x80000, scoped, tag = 'input window, operand 3, single buffered']
    #allocation9 [shape = 's32[1]{0}', space=sflag, size = 0x4, scoped, tag = 'scoped memory for tpu_custom_call.1']
    #allocation10 [shape = 'u8[8192]{0}', space=vmem, size = 0x2000, scoped, tag = 'input window, operand 4, single buffered']
    #allocation11 [shape = 'u8[16384]{0}', space=vmem, size = 0x4000, scoped, tag = 'output window, operand 0, single buffered']
    %10 = vsyncpa [#allocation3], 0
    %11 = vsyncpa [#allocation6], 0
    %12 = vsyncpa [#allocation9], 0
    %13 = vsyncpa [#allocation4], 0
    // Predicated region
    $region2: #{tpu_custom_call.1} parent=1 // pred_check
      _
    $region3: #{tpu_custom_call.1} parent=1 // pred_check_branch
      %15 = sbr.rel (0) target = $region5
    $region4: #{tpu_custom_call.1} parent=1 // pred_region
      %s17 = ssub.s32 512, 512
      %18 = vsyncadd [#allocation3], %s17
      %s20 = sshll.u32 [#allocation2], 4
      %s21 = int_to_ptr.vmem [resolvable:$true] %s20
      %23 = dma.hbm_to_vmem [thread:$0]  %s0, 512, %s21, [#allocation3]
    $region5: #{tpu_custom_call.1} parent=1 // pred_fallthru
      _
    // Predicated region
    $region6: #{tpu_custom_call.1} parent=1 // pred_check
      _
    $region7: #{tpu_custom_call.1} parent=1 // pred_check_branch
      %25 = sbr.rel (0) target = $region9
    $region8: #{tpu_custom_call.1} parent=1 // pred_region
      %s27 = ssub.s32 16384, 16384
      %28 = vsyncadd [#allocation6], %s27
      %s29 = sshll.u32 [#allocation5], 4
      %s30 = int_to_ptr.vmem [resolvable:$true] %s29
      %35 = dma.hbm_to_vmem [thread:$0]  %s1, 16384, %s30, [#allocation6], 256, 256, 16
    $region9: #{tpu_custom_call.1} parent=1 // pred_fallthru
      _
    // Predicated region
    $region10: #{tpu_custom_call.1} parent=1 // pred_check
      _
    $region11: #{tpu_custom_call.1} parent=1 // pred_check_branch
      %37 = sbr.rel (0) target = $region13
    $region12: #{tpu_custom_call.1} parent=1 // pred_region
      %s39 = ssub.s32 16384, 16384
      %40 = vsyncadd [#allocation6], %s39
      %s41 = sshll.u32 [#allocation7], 4
      %s42 = int_to_ptr.vmem [resolvable:$true] %s41
      %47 = dma.hbm_to_vmem [thread:$0]  %s2, 16384, %s42, [#allocation6], 256, 256, 16
    $region13: #{tpu_custom_call.1} parent=1 // pred_fallthru
      _
    // Predicated region
    $region14: #{tpu_custom_call.1} parent=1 // pred_check
      _
    $region15: #{tpu_custom_call.1} parent=1 // pred_check_branch
      %49 = sbr.rel (0) target = $region17
    $region16: #{tpu_custom_call.1} parent=1 // pred_region
      %s51 = ssub.s32 16384, 16384
      %52 = vsyncadd [#allocation9], %s51
      %s53 = sshll.u32 [#allocation8], 4
      %s54 = int_to_ptr.vmem [resolvable:$true] %s53
      %59 = dma.hbm_to_vmem [thread:$0]  %s3, 16384, %s54, [#allocation9], 256, 256, 16
    $region17: #{tpu_custom_call.1} parent=1 // pred_fallthru
      _
    // Predicated region
    $region18: #{tpu_custom_call.1} parent=1 // pred_check
      _
    $region19: #{tpu_custom_call.1} parent=1 // pred_check_branch
      %61 = sbr.rel (0) target = $region21
    $region20: #{tpu_custom_call.1} parent=1 // pred_region
      %s63 = ssub.s32 256, 256
      %64 = vsyncadd [#allocation9], %s63
      %s66 = sshll.u32 [#allocation10], 4
      %s67 = int_to_ptr.vmem [resolvable:$true] %s66
      %69 = dma.hbm_to_vmem [thread:$0]  %s4, 256, %s67, [#allocation9]
    $region21: #{tpu_custom_call.1} parent=1 // pred_fallthru
      _
    // Predicated region
    $region22: #{tpu_custom_call.1} parent=1 // pred_check
      _
    $region23: #{tpu_custom_call.1} parent=1 // pred_check_branch
      %71 = sbr.rel (0) target = $region25
    $region24: #{tpu_custom_call.1} parent=1 // pred_region
      %72 = dma.done [#allocation3], 512
    $region25: #{tpu_custom_call.1} parent=1 // pred_fallthru
      _
    // Predicated region
    $region26: #{tpu_custom_call.1} parent=1 // pred_check
      _
    $region27: #{tpu_custom_call.1} parent=1 // pred_check_branch
      %74 = sbr.rel (0) target = $region29
    $region28: #{tpu_custom_call.1} parent=1 // pred_region
      %75 = dma.done [#allocation6], 16384
    $region29: #{tpu_custom_call.1} parent=1 // pred_fallthru
      _
    // Predicated region
    $region30: #{tpu_custom_call.1} parent=1 // pred_check
      _
    $region31: #{tpu_custom_call.1} parent=1 // pred_check_branch
      %77 = sbr.rel (0) target = $region33
    $region32: #{tpu_custom_call.1} parent=1 // pred_region
      %78 = dma.done [#allocation6], 16384
    $region33: #{tpu_custom_call.1} parent=1 // pred_fallthru
      _
    // Predicated region
    $region34: #{tpu_custom_call.1} parent=1 // pred_check
      _
    $region35: #{tpu_custom_call.1} parent=1 // pred_check_branch
      %80 = sbr.rel (0) target = $region37
    $region36: #{tpu_custom_call.1} parent=1 // pred_region
      %81 = dma.done [#allocation9], 16384
    $region37: #{tpu_custom_call.1} parent=1 // pred_fallthru
      _
    // Predicated region
    $region38: #{tpu_custom_call.1} parent=1 // pred_check
      _
    $region39: #{tpu_custom_call.1} parent=1 // pred_check_branch
      %83 = sbr.rel (0) target = $region41
    $region40: #{tpu_custom_call.1} parent=1 // pred_region
      %84 = dma.done [#allocation9], 256
    $region41: #{tpu_custom_call.1} parent=1 // pred_fallthru
      _
    %v85 = vld [vmem:[#allocation2] sm:$0xff]
    %v86 = vld [vmem:[#allocation2 + $0x8] sm:$0xff]
    %v87 = vld [vmem:[#allocation2 + $0x10] sm:$0xff]
    %v88 = vld [vmem:[#allocation2 + $0x18] sm:$0xff]
    %v89 = vpack.c.bf16 %v85, %v85
    %v90 = vpack.c.bf16 %v86, %v86
    %v91 = vpack.c.bf16 %v87, %v87
    %v92 = vpack.c.bf16 %v88, %v88
    %v93 = vld [vmem:[#allocation5] sm:$0xff]
    %v94 = vld [vmem:[#allocation5 + $0x8] sm:$0xff]
    %v95 = vld [vmem:[#allocation5 + $0x10] sm:$0xff]
    %v96 = vld [vmem:[#allocation5 + $0x18] sm:$0xff]
    %v97 = vld [vmem:[#allocation5 + $0x20] sm:$0xff]
    %v98 = vld [vmem:[#allocation5 + $0x28] sm:$0xff]
    %v99 = vld [vmem:[#allocation5 + $0x30] sm:$0xff]
    %v100 = vld [vmem:[#allocation5 + $0x38] sm:$0xff]
    %v101 = vld [vmem:[#allocation5 + $0x40] sm:$0xff]
    %v102 = vld [vmem:[#allocation5 + $0x48] sm:$0xff]
    %v103 = vld [vmem:[#allocation5 + $0x50] sm:$0xff]
    %v104 = vld [vmem:[#allocation5 + $0x58] sm:$0xff]
    %v105 = vld [vmem:[#allocation5 + $0x60] sm:$0xff]
    %v106 = vld [vmem:[#allocation5 + $0x68] sm:$0xff]
    %v107 = vld [vmem:[#allocation5 + $0x70] sm:$0xff]
    %v108 = vld [vmem:[#allocation5 + $0x78] sm:$0xff]
    %v109 = vld [vmem:[#allocation5 + $0x80] sm:$0xff]
    %v110 = vld [vmem:[#allocation5 + $0x88] sm:$0xff]
    %v111 = vld [vmem:[#allocation5 + $0x90] sm:$0xff]
    %v112 = vld [vmem:[#allocation5 + $0x98] sm:$0xff]
    %v113 = vld [vmem:[#allocation5 + $0xa0] sm:$0xff]
    %v114 = vld [vmem:[#allocation5 + $0xa8] sm:$0xff]
    %v115 = vld [vmem:[#allocation5 + $0xb0] sm:$0xff]
    %v116 = vld [vmem:[#allocation5 + $0xb8] sm:$0xff]
    %v117 = vld [vmem:[#allocation5 + $0xc0] sm:$0xff]
    %v118 = vld [vmem:[#allocation5 + $0xc8] sm:$0xff]
    %v119 = vld [vmem:[#allocation5 + $0xd0] sm:$0xff]
    %v120 = vld [vmem:[#allocation5 + $0xd8] sm:$0xff]
    %v121 = vld [vmem:[#allocation5 + $0xe0] sm:$0xff]
    %v122 = vld [vmem:[#allocation5 + $0xe8] sm:$0xff]
    %v123 = vld [vmem:[#allocation5 + $0xf0] sm:$0xff]
    %v124 = vld [vmem:[#allocation5 + $0xf8] sm:$0xff]
    %v125 = vld [vmem:[#allocation5 + $0x100] sm:$0xff]
    %v126 = vld [vmem:[#allocation5 + $0x108] sm:$0xff]
    %v127 = vld [vmem:[#allocation5 + $0x110] sm:$0xff]
    %v128 = vld [vmem:[#allocation5 + $0x118] sm:$0xff]
    %v129 = vld [vmem:[#allocation5 + $0x120] sm:$0xff]
    %v130 = vld [vmem:[#allocation5 + $0x128] sm:$0xff]
    %v131 = vld [vmem:[#allocation5 + $0x130] sm:$0xff]
    %v132 = vld [vmem:[#allocation5 + $0x138] sm:$0xff]
    %v133 = vld [vmem:[#allocation5 + $0x140] sm:$0xff]
    %v134 = vld [vmem:[#allocation5 + $0x148] sm:$0xff]
    %v135 = vld [vmem:[#allocation5 + $0x150] sm:$0xff]
    %v136 = vld [vmem:[#allocation5 + $0x158] sm:$0xff]
    %v137 = vld [vmem:[#allocation5 + $0x160] sm:$0xff]
    %v138 = vld [vmem:[#allocation5 + $0x168] sm:$0xff]
    %v139 = vld [vmem:[#allocation5 + $0x170] sm:$0xff]
    %v140 = vld [vmem:[#allocation5 + $0x178] sm:$0xff]
    %v141 = vld [vmem:[#allocation5 + $0x180] sm:$0xff]
    %v142 = vld [vmem:[#allocation5 + $0x188] sm:$0xff]
    %v143 = vld [vmem:[#allocation5 + $0x190] sm:$0xff]
    %v144 = vld [vmem:[#allocation5 + $0x198] sm:$0xff]
    %v145 = vld [vmem:[#allocation5 + $0x1a0] sm:$0xff]
    %v146 = vld [vmem:[#allocation5 + $0x1a8] sm:$0xff]
    %v147 = vld [vmem:[#allocation5 + $0x1b0] sm:$0xff]
    %v148 = vld [vmem:[#allocation5 + $0x1b8] sm:$0xff]
    %v149 = vld [vmem:[#allocation5 + $0x1c0] sm:$0xff]
    %v150 = vld [vmem:[#allocation5 + $0x1c8] sm:$0xff]
    %v151 = vld [vmem:[#allocation5 + $0x1d0] sm:$0xff]
    %v152 = vld [vmem:[#allocation5 + $0x1d8] sm:$0xff]
    %v153 = vld [vmem:[#allocation5 + $0x1e0] sm:$0xff]
    %v154 = vld [vmem:[#allocation5 + $0x1e8] sm:$0xff]
    %v155 = vld [vmem:[#allocation5 + $0x1f0] sm:$0xff]
    %v156 = vld [vmem:[#allocation5 + $0x1f8] sm:$0xff]
    %v157 = vld [vmem:[#allocation5 + $0x200] sm:$0xff]
    %v158 = vld [vmem:[#allocation5 + $0x208] sm:$0xff]
    %v159 = vld [vmem:[#allocation5 + $0x210] sm:$0xff]
    %v160 = vld [vmem:[#allocation5 + $0x218] sm:$0xff]
    %v161 = vld [vmem:[#allocation5 + $0x220] sm:$0xff]
    %v162 = vld [vmem:[#allocation5 + $0x228] sm:$0xff]
    %v163 = vld [vmem:[#allocation5 + $0x230] sm:$0xff]
    %v164 = vld [vmem:[#allocation5 + $0x238] sm:$0xff]
    %v165 = vld [vmem:[#allocation5 + $0x240] sm:$0xff]
    %v166 = vld [vmem:[#allocation5 + $0x248] sm:$0xff]
    %v167 = vld [vmem:[#allocation5 + $0x250] sm:$0xff]
    %v168 = vld [vmem:[#allocation5 + $0x258] sm:$0xff]
    %v169 = vld [vmem:[#allocation5 + $0x260] sm:$0xff]
    %v170 = vld [vmem:[#allocation5 + $0x268] sm:$0xff]
    %v171 = vld [vmem:[#allocation5 + $0x270] sm:$0xff]
    %v172 = vld [vmem:[#allocation5 + $0x278] sm:$0xff]
    %v173 = vld [vmem:[#allocation5 + $0x280] sm:$0xff]
    %v174 = vld [vmem:[#allocation5 + $0x288] sm:$0xff]
    %v175 = vld [vmem:[#allocation5 + $0x290] sm:$0xff]
    %v176 = vld [vmem:[#allocation5 + $0x298] sm:$0xff]
    %v177 = vld [vmem:[#allocation5 + $0x2a0] sm:$0xff]
    %v178 = vld [vmem:[#allocation5 + $0x2a8] sm:$0xff]
    %v179 = vld [vmem:[#allocation5 + $0x2b0] sm:$0xff]
    %v180 = vld [vmem:[#allocation5 + $0x2b8] sm:$0xff]
    %v181 = vld [vmem:[#allocation5 + $0x2c0] sm:$0xff]
    %v182 = vld [vmem:[#allocation5 + $0x2c8] sm:$0xff]
    %v183 = vld [vmem:[#allocation5 + $0x2d0] sm:$0xff]
    %v184 = vld [vmem:[#allocation5 + $0x2d8] sm:$0xff]
    %v185 = vld [vmem:[#allocation5 + $0x2e0] sm:$0xff]
    %v186 = vld [vmem:[#allocation5 + $0x2e8] sm:$0xff]
    %v187 = vld [vmem:[#allocation5 + $0x2f0] sm:$0xff]
    %v188 = vld [vmem:[#allocation5 + $0x2f8] sm:$0xff]
    %v189 = vld [vmem:[#allocation5 + $0x300] sm:$0xff]
    %v190 = vld [vmem:[#allocation5 + $0x308] sm:$0xff]
    %v191 = vld [vmem:[#allocation5 + $0x310] sm:$0xff]
    %v192 = vld [vmem:[#allocation5 + $0x318] sm:$0xff]
    %v193 = vld [vmem:[#allocation5 + $0x320] sm:$0xff]
    %v194 = vld [vmem:[#allocation5 + $0x328] sm:$0xff]
    %v195 = vld [vmem:[#allocation5 + $0x330] sm:$0xff]
    %v196 = vld [vmem:[#allocation5 + $0x338] sm:$0xff]
    %v197 = vld [vmem:[#allocation5 + $0x340] sm:$0xff]
    %v198 = vld [vmem:[#allocation5 + $0x348] sm:$0xff]
    %v199 = vld [vmem:[#allocation5 + $0x350] sm:$0xff]
    %v200 = vld [vmem:[#allocation5 + $0x358] sm:$0xff]
    %v201 = vld [vmem:[#allocation5 + $0x360] sm:$0xff]
    %v202 = vld [vmem:[#allocation5 + $0x368] sm:$0xff]
    %v203 = vld [vmem:[#allocation5 + $0x370] sm:$0xff]
    %v204 = vld [vmem:[#allocation5 + $0x378] sm:$0xff]
    %v205 = vld [vmem:[#allocation5 + $0x380] sm:$0xff]
    %v206 = vld [vmem:[#allocation5 + $0x388] sm:$0xff]
    %v207 = vld [vmem:[#allocation5 + $0x390] sm:$0xff]
    %v208 = vld [vmem:[#allocation5 + $0x398] sm:$0xff]
    %v209 = vld [vmem:[#allocation5 + $0x3a0] sm:$0xff]
    %v210 = vld [vmem:[#allocation5 + $0x3a8] sm:$0xff]
    %v211 = vld [vmem:[#allocation5 + $0x3b0] sm:$0xff]
    %v212 = vld [vmem:[#allocation5 + $0x3b8] sm:$0xff]
    %v213 = vld [vmem:[#allocation5 + $0x3c0] sm:$0xff]
    %v214 = vld [vmem:[#allocation5 + $0x3c8] sm:$0xff]
    %v215 = vld [vmem:[#allocation5 + $0x3d0] sm:$0xff]
    %v216 = vld [vmem:[#allocation5 + $0x3d8] sm:$0xff]
    %v217 = vld [vmem:[#allocation5 + $0x3e0] sm:$0xff]
    %v218 = vld [vmem:[#allocation5 + $0x3e8] sm:$0xff]
    %v219 = vld [vmem:[#allocation5 + $0x3f0] sm:$0xff]
    %v220 = vld [vmem:[#allocation5 + $0x3f8] sm:$0xff]
    %v221 = vld [vmem:[#allocation10] ss:$4 sm:$0xf]
    %v223 = vlaneseq
    %v224 = vshrl.u32 %v223, 7
    %v225 = vsub.s32 0, %v224
    %v226 = vrot.slane %v221, %v225
    %v227 = vlaneseq
    %v228 = vshrl.u32 %v227, 7
    %v229 = vsub.s32 1, %v228
    %v230 = vrot.slane %v221, %v229
    %v231 = vlaneseq
    %v232 = vshrl.u32 %v231, 7
    %v233 = vsub.s32 2, %v232
    %v234 = vrot.slane %v221, %v233
    %v235 = vlaneseq
    %v236 = vshrl.u32 %v235, 7
    %v237 = vsub.s32 3, %v236
    %v238 = vrot.slane %v221, %v237
    %v371 = vunpack.c.l.b16 %v93
    %v372 = vunpack.c.h.b16 %v93
    %v373 = vunpack.c.l.b16 %v94
    %v374 = vunpack.c.h.b16 %v94
    %v375 = vunpack.c.l.b16 %v95
    %v376 = vunpack.c.h.b16 %v95
    %v377 = vunpack.c.l.b16 %v96
    %v378 = vunpack.c.h.b16 %v96
    %v379 = vunpack.c.l.b16 %v97
    %v380 = vunpack.c.h.b16 %v97
    %v381 = vunpack.c.l.b16 %v98
    %v382 = vunpack.c.h.b16 %v98
    %v383 = vunpack.c.l.b16 %v99
    %v384 = vunpack.c.h.b16 %v99
    %v385 = vunpack.c.l.b16 %v100
    %v386 = vunpack.c.h.b16 %v100
    %v387 = vunpack.c.l.b16 %v101
    %v388 = vunpack.c.h.b16 %v101
    %v389 = vunpack.c.l.b16 %v102
    %v390 = vunpack.c.h.b16 %v102
    %v391 = vunpack.c.l.b16 %v103
    %v392 = vunpack.c.h.b16 %v103
    %v393 = vunpack.c.l.b16 %v104
    %v394 = vunpack.c.h.b16 %v104
    %v395 = vunpack.c.l.b16 %v105
    %v396 = vunpack.c.h.b16 %v105
    %v397 = vunpack.c.l.b16 %v106
    %v398 = vunpack.c.h.b16 %v106
    %v399 = vunpack.c.l.b16 %v107
    %v400 = vunpack.c.h.b16 %v107
    %v401 = vunpack.c.l.b16 %v108
    %v402 = vunpack.c.h.b16 %v108
    %v403 = vunpack.c.l.b16 %v109
    %v404 = vunpack.c.h.b16 %v109
    %v405 = vunpack.c.l.b16 %v110
    %v406 = vunpack.c.h.b16 %v110
    %v407 = vunpack.c.l.b16 %v111
    %v408 = vunpack.c.h.b16 %v111
    %v409 = vunpack.c.l.b16 %v112
    %v410 = vunpack.c.h.b16 %v112
    %v411 = vunpack.c.l.b16 %v113
    %v412 = vunpack.c.h.b16 %v113
    %v413 = vunpack.c.l.b16 %v114
    %v414 = vunpack.c.h.b16 %v114
    %v415 = vunpack.c.l.b16 %v115
    %v416 = vunpack.c.h.b16 %v115
    %v417 = vunpack.c.l.b16 %v116
    %v418 = vunpack.c.h.b16 %v116
    %v419 = vunpack.c.l.b16 %v117
    %v420 = vunpack.c.h.b16 %v117
    %v421 = vunpack.c.l.b16 %v118
    %v422 = vunpack.c.h.b16 %v118
    %v423 = vunpack.c.l.b16 %v119
    %v424 = vunpack.c.h.b16 %v119
    %v425 = vunpack.c.l.b16 %v120
    %v426 = vunpack.c.h.b16 %v120
    %v427 = vunpack.c.l.b16 %v121
    %v428 = vunpack.c.h.b16 %v121
    %v429 = vunpack.c.l.b16 %v122
    %v430 = vunpack.c.h.b16 %v122
    %v431 = vunpack.c.l.b16 %v123
    %v432 = vunpack.c.h.b16 %v123
    %v433 = vunpack.c.l.b16 %v124
    %v434 = vunpack.c.h.b16 %v124
    %v435 = vunpack.c.l.b16 %v125
    %v436 = vunpack.c.h.b16 %v125
    %v437 = vunpack.c.l.b16 %v126
    %v438 = vunpack.c.h.b16 %v126
    %v439 = vunpack.c.l.b16 %v127
    %v440 = vunpack.c.h.b16 %v127
    %v441 = vunpack.c.l.b16 %v128
    %v442 = vunpack.c.h.b16 %v128
    %v443 = vunpack.c.l.b16 %v129
    %v444 = vunpack.c.h.b16 %v129
    %v445 = vunpack.c.l.b16 %v130
    %v446 = vunpack.c.h.b16 %v130
    %v447 = vunpack.c.l.b16 %v131
    %v448 = vunpack.c.h.b16 %v131
    %v449 = vunpack.c.l.b16 %v132
    %v450 = vunpack.c.h.b16 %v132
    %v451 = vunpack.c.l.b16 %v133
    %v452 = vunpack.c.h.b16 %v133
    %v453 = vunpack.c.l.b16 %v134
    %v454 = vunpack.c.h.b16 %v134
    %v455 = vunpack.c.l.b16 %v135
    %v456 = vunpack.c.h.b16 %v135
    %v457 = vunpack.c.l.b16 %v136
    %v458 = vunpack.c.h.b16 %v136
    %v459 = vunpack.c.l.b16 %v137
    %v460 = vunpack.c.h.b16 %v137
    %v461 = vunpack.c.l.b16 %v138
    %v462 = vunpack.c.h.b16 %v138
    %v463 = vunpack.c.l.b16 %v139
    %v464 = vunpack.c.h.b16 %v139
    %v465 = vunpack.c.l.b16 %v140
    %v466 = vunpack.c.h.b16 %v140
    %v467 = vunpack.c.l.b16 %v141
    %v468 = vunpack.c.h.b16 %v141
    %v469 = vunpack.c.l.b16 %v142
    %v470 = vunpack.c.h.b16 %v142
    %v471 = vunpack.c.l.b16 %v143
    %v472 = vunpack.c.h.b16 %v143
    %v473 = vunpack.c.l.b16 %v144
    %v474 = vunpack.c.h.b16 %v144
    %v475 = vunpack.c.l.b16 %v145
    %v476 = vunpack.c.h.b16 %v145
    %v477 = vunpack.c.l.b16 %v146
    %v478 = vunpack.c.h.b16 %v146
    %v479 = vunpack.c.l.b16 %v147
    %v480 = vunpack.c.h.b16 %v147
    %v481 = vunpack.c.l.b16 %v148
    %v482 = vunpack.c.h.b16 %v148
    %v483 = vunpack.c.l.b16 %v149
    %v484 = vunpack.c.h.b16 %v149
    %v485 = vunpack.c.l.b16 %v150
    %v486 = vunpack.c.h.b16 %v150
    %v487 = vunpack.c.l.b16 %v151
    %v488 = vunpack.c.h.b16 %v151
    %v489 = vunpack.c.l.b16 %v152
    %v490 = vunpack.c.h.b16 %v152
    %v491 = vunpack.c.l.b16 %v153
    %v492 = vunpack.c.h.b16 %v153
    %v493 = vunpack.c.l.b16 %v154
    %v494 = vunpack.c.h.b16 %v154
    %v495 = vunpack.c.l.b16 %v155
    %v496 = vunpack.c.h.b16 %v155
    %v497 = vunpack.c.l.b16 %v156
    %v498 = vunpack.c.h.b16 %v156
    %v499 = vunpack.c.l.b16 %v157
    %v500 = vunpack.c.h.b16 %v157
    %v501 = vunpack.c.l.b16 %v158
    %v502 = vunpack.c.h.b16 %v158
    %v503 = vunpack.c.l.b16 %v159
    %v504 = vunpack.c.h.b16 %v159
    %v505 = vunpack.c.l.b16 %v160
    %v506 = vunpack.c.h.b16 %v160
    %v507 = vunpack.c.l.b16 %v161
    %v508 = vunpack.c.h.b16 %v161
    %v509 = vunpack.c.l.b16 %v162
    %v510 = vunpack.c.h.b16 %v162
    %v511 = vunpack.c.l.b16 %v163
    %v512 = vunpack.c.h.b16 %v163
    %v513 = vunpack.c.l.b16 %v164
    %v514 = vunpack.c.h.b16 %v164
    %v515 = vunpack.c.l.b16 %v165
    %v516 = vunpack.c.h.b16 %v165
    %v517 = vunpack.c.l.b16 %v166
    %v518 = vunpack.c.h.b16 %v166
    %v519 = vunpack.c.l.b16 %v167
    %v520 = vunpack.c.h.b16 %v167
    %v521 = vunpack.c.l.b16 %v168
    %v522 = vunpack.c.h.b16 %v168
    %v523 = vunpack.c.l.b16 %v169
    %v524 = vunpack.c.h.b16 %v169
    %v525 = vunpack.c.l.b16 %v170
    %v526 = vunpack.c.h.b16 %v170
    %v527 = vunpack.c.l.b16 %v171
    %v528 = vunpack.c.h.b16 %v171
    %v529 = vunpack.c.l.b16 %v172
    %v530 = vunpack.c.h.b16 %v172
    %v531 = vunpack.c.l.b16 %v173
    %v532 = vunpack.c.h.b16 %v173
    %v533 = vunpack.c.l.b16 %v174
    %v534 = vunpack.c.h.b16 %v174
    %v535 = vunpack.c.l.b16 %v175
    %v536 = vunpack.c.h.b16 %v175
    %v537 = vunpack.c.l.b16 %v176
    %v538 = vunpack.c.h.b16 %v176
    %v539 = vunpack.c.l.b16 %v177
    %v540 = vunpack.c.h.b16 %v177
    %v541 = vunpack.c.l.b16 %v178
    %v542 = vunpack.c.h.b16 %v178
    %v543 = vunpack.c.l.b16 %v179
    %v544 = vunpack.c.h.b16 %v179
    %v545 = vunpack.c.l.b16 %v180
    %v546 = vunpack.c.h.b16 %v180
    %v547 = vunpack.c.l.b16 %v181
    %v548 = vunpack.c.h.b16 %v181
    %v549 = vunpack.c.l.b16 %v182
    %v550 = vunpack.c.h.b16 %v182
    %v551 = vunpack.c.l.b16 %v183
    %v552 = vunpack.c.h.b16 %v183
    %v553 = vunpack.c.l.b16 %v184
    %v554 = vunpack.c.h.b16 %v184
    %v555 = vunpack.c.l.b16 %v185
    %v556 = vunpack.c.h.b16 %v185
    %v557 = vunpack.c.l.b16 %v186
    %v558 = vunpack.c.h.b16 %v186
    %v559 = vunpack.c.l.b16 %v187
    %v560 = vunpack.c.h.b16 %v187
    %v561 = vunpack.c.l.b16 %v188
    %v562 = vunpack.c.h.b16 %v188
    %v563 = vunpack.c.l.b16 %v189
    %v564 = vunpack.c.h.b16 %v189
    %v565 = vunpack.c.l.b16 %v190
    %v566 = vunpack.c.h.b16 %v190
    %v567 = vunpack.c.l.b16 %v191
    %v568 = vunpack.c.h.b16 %v191
    %v569 = vunpack.c.l.b16 %v192
    %v570 = vunpack.c.h.b16 %v192
    %v571 = vunpack.c.l.b16 %v193
    %v572 = vunpack.c.h.b16 %v193
    %v573 = vunpack.c.l.b16 %v194
    %v574 = vunpack.c.h.b16 %v194
    %v575 = vunpack.c.l.b16 %v195
    %v576 = vunpack.c.h.b16 %v195
    %v577 = vunpack.c.l.b16 %v196
    %v578 = vunpack.c.h.b16 %v196
    %v579 = vunpack.c.l.b16 %v197
    %v580 = vunpack.c.h.b16 %v197
    %v581 = vunpack.c.l.b16 %v198
    %v582 = vunpack.c.h.b16 %v198
    %v583 = vunpack.c.l.b16 %v199
    %v584 = vunpack.c.h.b16 %v199
    %v585 = vunpack.c.l.b16 %v200
    %v586 = vunpack.c.h.b16 %v200
    %v587 = vunpack.c.l.b16 %v201
    %v588 = vunpack.c.h.b16 %v201
    %v589 = vunpack.c.l.b16 %v202
    %v590 = vunpack.c.h.b16 %v202
    %v591 = vunpack.c.l.b16 %v203
    %v592 = vunpack.c.h.b16 %v203
    %v593 = vunpack.c.l.b16 %v204
    %v594 = vunpack.c.h.b16 %v204
    %v595 = vunpack.c.l.b16 %v205
    %v596 = vunpack.c.h.b16 %v205
    %v597 = vunpack.c.l.b16 %v206
    %v598 = vunpack.c.h.b16 %v206
    %v599 = vunpack.c.l.b16 %v207
    %v600 = vunpack.c.h.b16 %v207
    %v601 = vunpack.c.l.b16 %v208
    %v602 = vunpack.c.h.b16 %v208
    %v603 = vunpack.c.l.b16 %v209
    %v604 = vunpack.c.h.b16 %v209
    %v605 = vunpack.c.l.b16 %v210
    %v606 = vunpack.c.h.b16 %v210
    %v607 = vunpack.c.l.b16 %v211
    %v608 = vunpack.c.h.b16 %v211
    %v609 = vunpack.c.l.b16 %v212
    %v610 = vunpack.c.h.b16 %v212
    %v611 = vunpack.c.l.b16 %v213
    %v612 = vunpack.c.h.b16 %v213
    %v613 = vunpack.c.l.b16 %v214
    %v614 = vunpack.c.h.b16 %v214
    %v615 = vunpack.c.l.b16 %v215
    %v616 = vunpack.c.h.b16 %v215
    %v617 = vunpack.c.l.b16 %v216
    %v618 = vunpack.c.h.b16 %v216
    %v619 = vunpack.c.l.b16 %v217
    %v620 = vunpack.c.h.b16 %v217
    %v621 = vunpack.c.l.b16 %v218
    %v622 = vunpack.c.h.b16 %v218
    %v623 = vunpack.c.l.b16 %v219
    %v624 = vunpack.c.h.b16 %v219
    %v625 = vunpack.c.l.b16 %v220
    %v626 = vunpack.c.h.b16 %v220
    %v627 = vpack.c.b16 %v375, %v371
    %v628 = vpack.c.b16 %v376, %v372
    %v629 = vpack.c.b16 %v377, %v373
    %v630 = vpack.c.b16 %v378, %v374
    %v631 = vpack.c.b16 %v383, %v379
    %v632 = vpack.c.b16 %v384, %v380
    %v633 = vpack.c.b16 %v385, %v381
    %v634 = vpack.c.b16 %v386, %v382
    %v635 = vpack.c.b16 %v391, %v387
    %v636 = vpack.c.b16 %v392, %v388
    %v637 = vpack.c.b16 %v393, %v389
    %v638 = vpack.c.b16 %v394, %v390
    %v639 = vpack.c.b16 %v399, %v395
    %v640 = vpack.c.b16 %v400, %v396
    %v641 = vpack.c.b16 %v401, %v397
    %v642 = vpack.c.b16 %v402, %v398
    %v643 = vpack.c.b16 %v407, %v403
    %v644 = vpack.c.b16 %v408, %v404
    %v645 = vpack.c.b16 %v409, %v405
    %v646 = vpack.c.b16 %v410, %v406
    %v647 = vpack.c.b16 %v415, %v411
    %v648 = vpack.c.b16 %v416, %v412
    %v649 = vpack.c.b16 %v417, %v413
    %v650 = vpack.c.b16 %v418, %v414
    %v651 = vpack.c.b16 %v423, %v419
    %v652 = vpack.c.b16 %v424, %v420
    %v653 = vpack.c.b16 %v425, %v421
    %v654 = vpack.c.b16 %v426, %v422
    %v655 = vpack.c.b16 %v431, %v427
    %v656 = vpack.c.b16 %v432, %v428
    %v657 = vpack.c.b16 %v433, %v429
    %v658 = vpack.c.b16 %v434, %v430
    %v659 = vpack.c.b16 %v439, %v435
    %v660 = vpack.c.b16 %v440, %v436
    %v661 = vpack.c.b16 %v441, %v437
    %v662 = vpack.c.b16 %v442, %v438
    %v663 = vpack.c.b16 %v447, %v443
    %v664 = vpack.c.b16 %v448, %v444
    %v665 = vpack.c.b16 %v449, %v445
    %v666 = vpack.c.b16 %v450, %v446
    %v667 = vpack.c.b16 %v455, %v451
    %v668 = vpack.c.b16 %v456, %v452
    %v669 = vpack.c.b16 %v457, %v453
    %v670 = vpack.c.b16 %v458, %v454
    %v671 = vpack.c.b16 %v463, %v459
    %v672 = vpack.c.b16 %v464, %v460
    %v673 = vpack.c.b16 %v465, %v461
    %v674 = vpack.c.b16 %v466, %v462
    %v675 = vpack.c.b16 %v471, %v467
    %v676 = vpack.c.b16 %v472, %v468
    %v677 = vpack.c.b16 %v473, %v469
    %v678 = vpack.c.b16 %v474, %v470
    %v679 = vpack.c.b16 %v479, %v475
    %v680 = vpack.c.b16 %v480, %v476
    %v681 = vpack.c.b16 %v481, %v477
    %v682 = vpack.c.b16 %v482, %v478
    %v683 = vpack.c.b16 %v487, %v483
    %v684 = vpack.c.b16 %v488, %v484
    %v685 = vpack.c.b16 %v489, %v485
    %v686 = vpack.c.b16 %v490, %v486
    %v687 = vpack.c.b16 %v495, %v491
    %v688 = vpack.c.b16 %v496, %v492
    %v689 = vpack.c.b16 %v497, %v493
    %v690 = vpack.c.b16 %v498, %v494
    %v691 = vpack.c.b16 %v503, %v499
    %v692 = vpack.c.b16 %v504, %v500
    %v693 = vpack.c.b16 %v505, %v501
    %v694 = vpack.c.b16 %v506, %v502
    %v695 = vpack.c.b16 %v511, %v507
    %v696 = vpack.c.b16 %v512, %v508
    %v697 = vpack.c.b16 %v513, %v509
    %v698 = vpack.c.b16 %v514, %v510
    %v699 = vpack.c.b16 %v519, %v515
    %v700 = vpack.c.b16 %v520, %v516
    %v701 = vpack.c.b16 %v521, %v517
    %v702 = vpack.c.b16 %v522, %v518
    %v703 = vpack.c.b16 %v527, %v523
    %v704 = vpack.c.b16 %v528, %v524
    %v705 = vpack.c.b16 %v529, %v525
    %v706 = vpack.c.b16 %v530, %v526
    %v707 = vpack.c.b16 %v535, %v531
    %v708 = vpack.c.b16 %v536, %v532
    %v709 = vpack.c.b16 %v537, %v533
    %v710 = vpack.c.b16 %v538, %v534
    %v711 = vpack.c.b16 %v543, %v539
    %v712 = vpack.c.b16 %v544, %v540
    %v713 = vpack.c.b16 %v545, %v541
    %v714 = vpack.c.b16 %v546, %v542
    %v715 = vpack.c.b16 %v551, %v547
    %v716 = vpack.c.b16 %v552, %v548
    %v717 = vpack.c.b16 %v553, %v549
    %v718 = vpack.c.b16 %v554, %v550
    %v719 = vpack.c.b16 %v559, %v555
    %v720 = vpack.c.b16 %v560, %v556
    %v721 = vpack.c.b16 %v561, %v557
    %v722 = vpack.c.b16 %v562, %v558
    %v723 = vpack.c.b16 %v567, %v563
    %v724 = vpack.c.b16 %v568, %v564
    %v725 = vpack.c.b16 %v569, %v565
    %v726 = vpack.c.b16 %v570, %v566
    %v727 = vpack.c.b16 %v575, %v571
    %v728 = vpack.c.b16 %v576, %v572
    %v729 = vpack.c.b16 %v577, %v573
    %v730 = vpack.c.b16 %v578, %v574
    %v731 = vpack.c.b16 %v583, %v579
    %v732 = vpack.c.b16 %v584, %v580
    %v733 = vpack.c.b16 %v585, %v581
    %v734 = vpack.c.b16 %v586, %v582
    %v735 = vpack.c.b16 %v591, %v587
    %v736 = vpack.c.b16 %v592, %v588
    %v737 = vpack.c.b16 %v593, %v589
    %v738 = vpack.c.b16 %v594, %v590
    %v739 = vpack.c.b16 %v599, %v595
    %v740 = vpack.c.b16 %v600, %v596
    %v741 = vpack.c.b16 %v601, %v597
    %v742 = vpack.c.b16 %v602, %v598
    %v743 = vpack.c.b16 %v607, %v603
    %v744 = vpack.c.b16 %v608, %v604
    %v745 = vpack.c.b16 %v609, %v605
    %v746 = vpack.c.b16 %v610, %v606
    %v747 = vpack.c.b16 %v615, %v611
    %v748 = vpack.c.b16 %v616, %v612
    %v749 = vpack.c.b16 %v617, %v613
    %v750 = vpack.c.b16 %v618, %v614
    %v751 = vpack.c.b16 %v623, %v619
    %v752 = vpack.c.b16 %v624, %v620
    %v753 = vpack.c.b16 %v625, %v621
    %v754 = vpack.c.b16 %v626, %v622
    %883 = vmatprep.subr.bf16.mxu0 %v656
    %884 = vmatpush1.bf16.msra.mxu0 %v655
    %885 = vmatprep.subr.bf16.mxu0 %v652
    %886 = vmatpush1.bf16.msra.mxu0 %v651
    %887 = vmatprep.subr.bf16.mxu0 %v648
    %888 = vmatpush1.bf16.msra.mxu0 %v647
    %889 = vmatprep.subr.bf16.mxu0 %v644
    %890 = vmatpush1.bf16.msra.mxu0 %v643
    %891 = vmatprep.subr.bf16.mxu0 %v640
    %892 = vmatpush1.bf16.msra.mxu0 %v639
    %893 = vmatprep.subr.bf16.mxu0 %v636
    %894 = vmatpush1.bf16.msra.mxu0 %v635
    %895 = vmatprep.subr.bf16.mxu0 %v632
    %896 = vmatpush1.bf16.msra.mxu0 %v631
    %897 = vmatprep.subr.bf16.mxu0 %v628
    %898 = vmatpush1.bf16.msra.mxu0 %v627
    %899 = vmatprep.subr.bf16.mxu0 %v688
    %900 = vmatpush2.bf16.msra.mxu0 %v687
    %901 = vmatprep.subr.bf16.mxu0 %v684
    %902 = vmatpush2.bf16.msra.mxu0 %v683
    %903 = vmatprep.subr.bf16.mxu0 %v680
    %904 = vmatpush2.bf16.msra.mxu0 %v679
    %905 = vmatprep.subr.bf16.mxu0 %v676
    %906 = vmatpush2.bf16.msra.mxu0 %v675
    %907 = vmatprep.subr.bf16.mxu0 %v672
    %908 = vmatpush2.bf16.msra.mxu0 %v671
    %909 = vmatprep.subr.bf16.mxu0 %v668
    %910 = vmatpush2.bf16.msra.mxu0 %v667
    %911 = vmatprep.subr.bf16.mxu0 %v664
    %912 = vmatpush2.bf16.msra.mxu0 %v663
    %913 = vmatprep.subr.bf16.mxu0 %v660
    %914 = vmatpush2.bf16.msra.mxu0 %v659
    %915 = vmatprep.mubr.bf16.mxu0 %v90
    %916 = vmatmul.mubr.bf16.gmra.mxu0 %v89
    %v917 = vpop.f32.mrf.mxu0
    %v918 = vadd.f32 %v226, %v917
    %v919 = vpop.f32.mrf.mxu0
    %v920 = vadd.f32 %v230, %v919
    %v921 = vpop.f32.mrf.mxu0
    %v922 = vpop.f32.mrf.mxu0
    %923 = vdwg.mxu0
    %924 = vmatprep.subr.bf16.mxu0 %v720
    %925 = vmatpush1.bf16.msra.mxu0 %v719
    %926 = vmatprep.subr.bf16.mxu0 %v716
    %927 = vmatpush1.bf16.msra.mxu0 %v715
    %928 = vmatprep.subr.bf16.mxu0 %v712
    %929 = vmatpush1.bf16.msra.mxu0 %v711
    %930 = vmatprep.subr.bf16.mxu0 %v708
    %931 = vmatpush1.bf16.msra.mxu0 %v707
    %932 = vmatprep.subr.bf16.mxu0 %v704
    %933 = vmatpush1.bf16.msra.mxu0 %v703
    %934 = vmatprep.subr.bf16.mxu0 %v700
    %935 = vmatpush1.bf16.msra.mxu0 %v699
    %936 = vmatprep.subr.bf16.mxu0 %v696
    %937 = vmatpush1.bf16.msra.mxu0 %v695
    %938 = vmatprep.subr.bf16.mxu0 %v692
    %939 = vmatpush1.bf16.msra.mxu0 %v691
    %940 = vmatprep.subr.bf16.mxu0 %v752
    %941 = vmatpush2.bf16.msra.mxu0 %v751
    %942 = vmatprep.subr.bf16.mxu0 %v748
    %943 = vmatpush2.bf16.msra.mxu0 %v747
    %944 = vmatprep.subr.bf16.mxu0 %v744
    %945 = vmatpush2.bf16.msra.mxu0 %v743
    %946 = vmatprep.subr.bf16.mxu0 %v740
    %947 = vmatpush2.bf16.msra.mxu0 %v739
    %948 = vmatprep.subr.bf16.mxu0 %v736
    %949 = vmatpush2.bf16.msra.mxu0 %v735
    %950 = vmatprep.subr.bf16.mxu0 %v732
    %951 = vmatpush2.bf16.msra.mxu0 %v731
    %952 = vmatprep.subr.bf16.mxu0 %v728
    %953 = vmatpush2.bf16.msra.mxu0 %v727
    %954 = vmatprep.subr.bf16.mxu0 %v724
    %955 = vmatpush2.bf16.msra.mxu0 %v723
    %956 = vmatprep.mubr.bf16.mxu0 %v92
    %957 = vmatmul.mubr.bf16.gmra.mxu0 %v91
    %v958 = vpop.f32.mrf.mxu0
    %v959 = vadd.f32 %v918, %v958
    %v960 = vpop.f32.mrf.mxu0
    %v961 = vadd.f32 %v920, %v960
    %v962 = vpop.f32.mrf.mxu0
    %v963 = vpop.f32.mrf.mxu0
    %964 = vdwg.mxu0
    %965 = vmatprep.subr.bf16.mxu0 %v658
    %966 = vmatpush1.bf16.msra.mxu0 %v657
    %967 = vmatprep.subr.bf16.mxu0 %v654
    %968 = vmatpush1.bf16.msra.mxu0 %v653
    %969 = vmatprep.subr.bf16.mxu0 %v650
    %970 = vmatpush1.bf16.msra.mxu0 %v649
    %971 = vmatprep.subr.bf16.mxu0 %v646
    %972 = vmatpush1.bf16.msra.mxu0 %v645
    %973 = vmatprep.subr.bf16.mxu0 %v642
    %974 = vmatpush1.bf16.msra.mxu0 %v641
    %975 = vmatprep.subr.bf16.mxu0 %v638
    %976 = vmatpush1.bf16.msra.mxu0 %v637
    %977 = vmatprep.subr.bf16.mxu0 %v634
    %978 = vmatpush1.bf16.msra.mxu0 %v633
    %979 = vmatprep.subr.bf16.mxu0 %v630
    %980 = vmatpush1.bf16.msra.mxu0 %v629
    %981 = vmatprep.subr.bf16.mxu0 %v690
    %982 = vmatpush2.bf16.msra.mxu0 %v689
    %983 = vmatprep.subr.bf16.mxu0 %v686
    %984 = vmatpush2.bf16.msra.mxu0 %v685
    %985 = vmatprep.subr.bf16.mxu0 %v682
    %986 = vmatpush2.bf16.msra.mxu0 %v681
    %987 = vmatprep.subr.bf16.mxu0 %v678
    %988 = vmatpush2.bf16.msra.mxu0 %v677
    %989 = vmatprep.subr.bf16.mxu0 %v674
    %990 = vmatpush2.bf16.msra.mxu0 %v673
    %991 = vmatprep.subr.bf16.mxu0 %v670
    %992 = vmatpush2.bf16.msra.mxu0 %v669
    %993 = vmatprep.subr.bf16.mxu0 %v666
    %994 = vmatpush2.bf16.msra.mxu0 %v665
    %995 = vmatprep.subr.bf16.mxu0 %v662
    %996 = vmatpush2.bf16.msra.mxu0 %v661
    %997 = vmatprep.mubr.bf16.mxu0 %v90
    %998 = vmatmul.mubr.bf16.gmra.mxu0 %v89
    %v999 = vpop.f32.mrf.mxu0
    %v1000 = vadd.f32 %v234, %v999
    %v1001 = vpop.f32.mrf.mxu0
    %v1002 = vadd.f32 %v238, %v1001
    %v1003 = vpop.f32.mrf.mxu0
    %v1004 = vpop.f32.mrf.mxu0
    %1005 = vdwg.mxu0
    %1006 = vmatprep.subr.bf16.mxu0 %v722
    %1007 = vmatpush1.bf16.msra.mxu0 %v721
    %1008 = vmatprep.subr.bf16.mxu0 %v718
    %1009 = vmatpush1.bf16.msra.mxu0 %v717
    %1010 = vmatprep.subr.bf16.mxu0 %v714
    %1011 = vmatpush1.bf16.msra.mxu0 %v713
    %1012 = vmatprep.subr.bf16.mxu0 %v710
    %1013 = vmatpush1.bf16.msra.mxu0 %v709
    %1014 = vmatprep.subr.bf16.mxu0 %v706
    %1015 = vmatpush1.bf16.msra.mxu0 %v705
    %1016 = vmatprep.subr.bf16.mxu0 %v702
    %1017 = vmatpush1.bf16.msra.mxu0 %v701
    %1018 = vmatprep.subr.bf16.mxu0 %v698
    %1019 = vmatpush1.bf16.msra.mxu0 %v697
    %1020 = vmatprep.subr.bf16.mxu0 %v694
    %1021 = vmatpush1.bf16.msra.mxu0 %v693
    %1022 = vmatprep.subr.bf16.mxu0 %v754
    %1023 = vmatpush2.bf16.msra.mxu0 %v753
    %1024 = vmatprep.subr.bf16.mxu0 %v750
    %1025 = vmatpush2.bf16.msra.mxu0 %v749
    %1026 = vmatprep.subr.bf16.mxu0 %v746
    %1027 = vmatpush2.bf16.msra.mxu0 %v745
    %1028 = vmatprep.subr.bf16.mxu0 %v742
    %1029 = vmatpush2.bf16.msra.mxu0 %v741
    %1030 = vmatprep.subr.bf16.mxu0 %v738
    %1031 = vmatpush2.bf16.msra.mxu0 %v737
    %1032 = vmatprep.subr.bf16.mxu0 %v734
    %1033 = vmatpush2.bf16.msra.mxu0 %v733
    %1034 = vmatprep.subr.bf16.mxu0 %v730
    %1035 = vmatpush2.bf16.msra.mxu0 %v729
    %1036 = vmatprep.subr.bf16.mxu0 %v726
    %1037 = vmatpush2.bf16.msra.mxu0 %v725
    %1038 = vmatprep.mubr.bf16.mxu0 %v92
    %1039 = vmatmul.mubr.bf16.gmra.mxu0 %v91
    %v1040 = vpop.f32.mrf.mxu0
    %v1041 = vadd.f32 %v1000, %v1040
    %v1042 = vpop.f32.mrf.mxu0
    %v1043 = vadd.f32 %v1002, %v1042
    %v1044 = vpop.f32.mrf.mxu0
    %v1045 = vpop.f32.mrf.mxu0
    %1046 = vdwg.mxu0
    %vm1047 = vcmp.ge.f32.partialorder %v959, 0.0
    %vm1048 = vcmp.ge.f32.partialorder %v961, 0.0
    %vm1049 = vcmp.ge.f32.partialorder %v1041, 0.0
    %vm1050 = vcmp.ge.f32.partialorder %v1043, 0.0
    %v1051 = vmul.f32 %v959, 0.2
    %v1052 = vmul.f32 %v961, 0.2
    %v1053 = vmul.f32 %v1041, 0.2
    %v1054 = vmul.f32 %v1043, 0.2
    %v1055 = vsel %vm1047, %v959, %v1051
    %v1056 = vsel %vm1048, %v961, %v1052
    %v1057 = vsel %vm1049, %v1041, %v1053
    %v1058 = vsel %vm1050, %v1043, %v1054
    %v1059 = vpack.c.bf16 %v1055, %v1055
    %v1060 = vpack.c.bf16 %v1056, %v1056
    %v1061 = vpack.c.bf16 %v1057, %v1057
    %v1062 = vpack.c.bf16 %v1058, %v1058
    %v1063 = vld [vmem:[#allocation7] sm:$0xff]
    %v1064 = vld [vmem:[#allocation7 + $0x8] sm:$0xff]
    %v1065 = vld [vmem:[#allocation7 + $0x10] sm:$0xff]
    %v1066 = vld [vmem:[#allocation7 + $0x18] sm:$0xff]
    %v1067 = vld [vmem:[#allocation7 + $0x20] sm:$0xff]
    %v1068 = vld [vmem:[#allocation7 + $0x28] sm:$0xff]
    %v1069 = vld [vmem:[#allocation7 + $0x30] sm:$0xff]
    %v1070 = vld [vmem:[#allocation7 + $0x38] sm:$0xff]
    %v1071 = vld [vmem:[#allocation7 + $0x40] sm:$0xff]
    %v1072 = vld [vmem:[#allocation7 + $0x48] sm:$0xff]
    %v1073 = vld [vmem:[#allocation7 + $0x50] sm:$0xff]
    %v1074 = vld [vmem:[#allocation7 + $0x58] sm:$0xff]
    %v1075 = vld [vmem:[#allocation7 + $0x60] sm:$0xff]
    %v1076 = vld [vmem:[#allocation7 + $0x68] sm:$0xff]
    %v1077 = vld [vmem:[#allocation7 + $0x70] sm:$0xff]
    %v1078 = vld [vmem:[#allocation7 + $0x78] sm:$0xff]
    %v1079 = vld [vmem:[#allocation7 + $0x80] sm:$0xff]
    %v1080 = vld [vmem:[#allocation7 + $0x88] sm:$0xff]
    %v1081 = vld [vmem:[#allocation7 + $0x90] sm:$0xff]
    %v1082 = vld [vmem:[#allocation7 + $0x98] sm:$0xff]
    %v1083 = vld [vmem:[#allocation7 + $0xa0] sm:$0xff]
    %v1084 = vld [vmem:[#allocation7 + $0xa8] sm:$0xff]
    %v1085 = vld [vmem:[#allocation7 + $0xb0] sm:$0xff]
    %v1086 = vld [vmem:[#allocation7 + $0xb8] sm:$0xff]
    %v1087 = vld [vmem:[#allocation7 + $0xc0] sm:$0xff]
    %v1088 = vld [vmem:[#allocation7 + $0xc8] sm:$0xff]
    %v1089 = vld [vmem:[#allocation7 + $0xd0] sm:$0xff]
    %v1090 = vld [vmem:[#allocation7 + $0xd8] sm:$0xff]
    %v1091 = vld [vmem:[#allocation7 + $0xe0] sm:$0xff]
    %v1092 = vld [vmem:[#allocation7 + $0xe8] sm:$0xff]
    %v1093 = vld [vmem:[#allocation7 + $0xf0] sm:$0xff]
    %v1094 = vld [vmem:[#allocation7 + $0xf8] sm:$0xff]
    %v1095 = vld [vmem:[#allocation7 + $0x100] sm:$0xff]
    %v1096 = vld [vmem:[#allocation7 + $0x108] sm:$0xff]
    %v1097 = vld [vmem:[#allocation7 + $0x110] sm:$0xff]
    %v1098 = vld [vmem:[#allocation7 + $0x118] sm:$0xff]
    %v1099 = vld [vmem:[#allocation7 + $0x120] sm:$0xff]
    %v1100 = vld [vmem:[#allocation7 + $0x128] sm:$0xff]
    %v1101 = vld [vmem:[#allocation7 + $0x130] sm:$0xff]
    %v1102 = vld [vmem:[#allocation7 + $0x138] sm:$0xff]
    %v1103 = vld [vmem:[#allocation7 + $0x140] sm:$0xff]
    %v1104 = vld [vmem:[#allocation7 + $0x148] sm:$0xff]
    %v1105 = vld [vmem:[#allocation7 + $0x150] sm:$0xff]
    %v1106 = vld [vmem:[#allocation7 + $0x158] sm:$0xff]
    %v1107 = vld [vmem:[#allocation7 + $0x160] sm:$0xff]
    %v1108 = vld [vmem:[#allocation7 + $0x168] sm:$0xff]
    %v1109 = vld [vmem:[#allocation7 + $0x170] sm:$0xff]
    %v1110 = vld [vmem:[#allocation7 + $0x178] sm:$0xff]
    %v1111 = vld [vmem:[#allocation7 + $0x180] sm:$0xff]
    %v1112 = vld [vmem:[#allocation7 + $0x188] sm:$0xff]
    %v1113 = vld [vmem:[#allocation7 + $0x190] sm:$0xff]
    %v1114 = vld [vmem:[#allocation7 + $0x198] sm:$0xff]
    %v1115 = vld [vmem:[#allocation7 + $0x1a0] sm:$0xff]
    %v1116 = vld [vmem:[#allocation7 + $0x1a8] sm:$0xff]
    %v1117 = vld [vmem:[#allocation7 + $0x1b0] sm:$0xff]
    %v1118 = vld [vmem:[#allocation7 + $0x1b8] sm:$0xff]
    %v1119 = vld [vmem:[#allocation7 + $0x1c0] sm:$0xff]
    %v1120 = vld [vmem:[#allocation7 + $0x1c8] sm:$0xff]
    %v1121 = vld [vmem:[#allocation7 + $0x1d0] sm:$0xff]
    %v1122 = vld [vmem:[#allocation7 + $0x1d8] sm:$0xff]
    %v1123 = vld [vmem:[#allocation7 + $0x1e0] sm:$0xff]
    %v1124 = vld [vmem:[#allocation7 + $0x1e8] sm:$0xff]
    %v1125 = vld [vmem:[#allocation7 + $0x1f0] sm:$0xff]
    %v1126 = vld [vmem:[#allocation7 + $0x1f8] sm:$0xff]
    %v1127 = vld [vmem:[#allocation7 + $0x200] sm:$0xff]
    %v1128 = vld [vmem:[#allocation7 + $0x208] sm:$0xff]
    %v1129 = vld [vmem:[#allocation7 + $0x210] sm:$0xff]
    %v1130 = vld [vmem:[#allocation7 + $0x218] sm:$0xff]
    %v1131 = vld [vmem:[#allocation7 + $0x220] sm:$0xff]
    %v1132 = vld [vmem:[#allocation7 + $0x228] sm:$0xff]
    %v1133 = vld [vmem:[#allocation7 + $0x230] sm:$0xff]
    %v1134 = vld [vmem:[#allocation7 + $0x238] sm:$0xff]
    %v1135 = vld [vmem:[#allocation7 + $0x240] sm:$0xff]
    %v1136 = vld [vmem:[#allocation7 + $0x248] sm:$0xff]
    %v1137 = vld [vmem:[#allocation7 + $0x250] sm:$0xff]
    %v1138 = vld [vmem:[#allocation7 + $0x258] sm:$0xff]
    %v1139 = vld [vmem:[#allocation7 + $0x260] sm:$0xff]
    %v1140 = vld [vmem:[#allocation7 + $0x268] sm:$0xff]
    %v1141 = vld [vmem:[#allocation7 + $0x270] sm:$0xff]
    %v1142 = vld [vmem:[#allocation7 + $0x278] sm:$0xff]
    %v1143 = vld [vmem:[#allocation7 + $0x280] sm:$0xff]
    %v1144 = vld [vmem:[#allocation7 + $0x288] sm:$0xff]
    %v1145 = vld [vmem:[#allocation7 + $0x290] sm:$0xff]
    %v1146 = vld [vmem:[#allocation7 + $0x298] sm:$0xff]
    %v1147 = vld [vmem:[#allocation7 + $0x2a0] sm:$0xff]
    %v1148 = vld [vmem:[#allocation7 + $0x2a8] sm:$0xff]
    %v1149 = vld [vmem:[#allocation7 + $0x2b0] sm:$0xff]
    %v1150 = vld [vmem:[#allocation7 + $0x2b8] sm:$0xff]
    %v1151 = vld [vmem:[#allocation7 + $0x2c0] sm:$0xff]
    %v1152 = vld [vmem:[#allocation7 + $0x2c8] sm:$0xff]
    %v1153 = vld [vmem:[#allocation7 + $0x2d0] sm:$0xff]
    %v1154 = vld [vmem:[#allocation7 + $0x2d8] sm:$0xff]
    %v1155 = vld [vmem:[#allocation7 + $0x2e0] sm:$0xff]
    %v1156 = vld [vmem:[#allocation7 + $0x2e8] sm:$0xff]
    %v1157 = vld [vmem:[#allocation7 + $0x2f0] sm:$0xff]
    %v1158 = vld [vmem:[#allocation7 + $0x2f8] sm:$0xff]
    %v1159 = vld [vmem:[#allocation7 + $0x300] sm:$0xff]
    %v1160 = vld [vmem:[#allocation7 + $0x308] sm:$0xff]
    %v1161 = vld [vmem:[#allocation7 + $0x310] sm:$0xff]
    %v1162 = vld [vmem:[#allocation7 + $0x318] sm:$0xff]
    %v1163 = vld [vmem:[#allocation7 + $0x320] sm:$0xff]
    %v1164 = vld [vmem:[#allocation7 + $0x328] sm:$0xff]
    %v1165 = vld [vmem:[#allocation7 + $0x330] sm:$0xff]
    %v1166 = vld [vmem:[#allocation7 + $0x338] sm:$0xff]
    %v1167 = vld [vmem:[#allocation7 + $0x340] sm:$0xff]
    %v1168 = vld [vmem:[#allocation7 + $0x348] sm:$0xff]
    %v1169 = vld [vmem:[#allocation7 + $0x350] sm:$0xff]
    %v1170 = vld [vmem:[#allocation7 + $0x358] sm:$0xff]
    %v1171 = vld [vmem:[#allocation7 + $0x360] sm:$0xff]
    %v1172 = vld [vmem:[#allocation7 + $0x368] sm:$0xff]
    %v1173 = vld [vmem:[#allocation7 + $0x370] sm:$0xff]
    %v1174 = vld [vmem:[#allocation7 + $0x378] sm:$0xff]
    %v1175 = vld [vmem:[#allocation7 + $0x380] sm:$0xff]
    %v1176 = vld [vmem:[#allocation7 + $0x388] sm:$0xff]
    %v1177 = vld [vmem:[#allocation7 + $0x390] sm:$0xff]
    %v1178 = vld [vmem:[#allocation7 + $0x398] sm:$0xff]
    %v1179 = vld [vmem:[#allocation7 + $0x3a0] sm:$0xff]
    %v1180 = vld [vmem:[#allocation7 + $0x3a8] sm:$0xff]
    %v1181 = vld [vmem:[#allocation7 + $0x3b0] sm:$0xff]
    %v1182 = vld [vmem:[#allocation7 + $0x3b8] sm:$0xff]
    %v1183 = vld [vmem:[#allocation7 + $0x3c0] sm:$0xff]
    %v1184 = vld [vmem:[#allocation7 + $0x3c8] sm:$0xff]
    %v1185 = vld [vmem:[#allocation7 + $0x3d0] sm:$0xff]
    %v1186 = vld [vmem:[#allocation7 + $0x3d8] sm:$0xff]
    %v1187 = vld [vmem:[#allocation7 + $0x3e0] sm:$0xff]
    %v1188 = vld [vmem:[#allocation7 + $0x3e8] sm:$0xff]
    %v1189 = vld [vmem:[#allocation7 + $0x3f0] sm:$0xff]
    %v1190 = vld [vmem:[#allocation7 + $0x3f8] sm:$0xff]
    %s1191 = scalar_lea.vmem [#allocation10], 1
    %v1192 = vld [vmem:[%s1191] ss:$4 sm:$0xf]
    %v1194 = vlaneseq
    %v1195 = vshrl.u32 %v1194, 7
    %v1196 = vsub.s32 0, %v1195
    %v1197 = vrot.slane %v1192, %v1196
    %v1198 = vlaneseq
    %v1199 = vshrl.u32 %v1198, 7
    %v1200 = vsub.s32 1, %v1199
    %v1201 = vrot.slane %v1192, %v1200
    %v1202 = vlaneseq
    %v1203 = vshrl.u32 %v1202, 7
    %v1204 = vsub.s32 2, %v1203
    %v1205 = vrot.slane %v1192, %v1204
    %v1206 = vlaneseq
    %v1207 = vshrl.u32 %v1206, 7
    %v1208 = vsub.s32 3, %v1207
    %v1209 = vrot.slane %v1192, %v1208
    %v1342 = vunpack.c.l.b16 %v1063
    %v1343 = vunpack.c.h.b16 %v1063
    %v1344 = vunpack.c.l.b16 %v1064
    %v1345 = vunpack.c.h.b16 %v1064
    %v1346 = vunpack.c.l.b16 %v1065
    %v1347 = vunpack.c.h.b16 %v1065
    %v1348 = vunpack.c.l.b16 %v1066
    %v1349 = vunpack.c.h.b16 %v1066
    %v1350 = vunpack.c.l.b16 %v1067
    %v1351 = vunpack.c.h.b16 %v1067
    %v1352 = vunpack.c.l.b16 %v1068
    %v1353 = vunpack.c.h.b16 %v1068
    %v1354 = vunpack.c.l.b16 %v1069
    %v1355 = vunpack.c.h.b16 %v1069
    %v1356 = vunpack.c.l.b16 %v1070
    %v1357 = vunpack.c.h.b16 %v1070
    %v1358 = vunpack.c.l.b16 %v1071
    %v1359 = vunpack.c.h.b16 %v1071
    %v1360 = vunpack.c.l.b16 %v1072
    %v1361 = vunpack.c.h.b16 %v1072
    %v1362 = vunpack.c.l.b16 %v1073
    %v1363 = vunpack.c.h.b16 %v1073
    %v1364 = vunpack.c.l.b16 %v1074
    %v1365 = vunpack.c.h.b16 %v1074
    %v1366 = vunpack.c.l.b16 %v1075
    %v1367 = vunpack.c.h.b16 %v1075
    %v1368 = vunpack.c.l.b16 %v1076
    %v1369 = vunpack.c.h.b16 %v1076
    %v1370 = vunpack.c.l.b16 %v1077
    %v1371 = vunpack.c.h.b16 %v1077
    %v1372 = vunpack.c.l.b16 %v1078
    %v1373 = vunpack.c.h.b16 %v1078
    %v1374 = vunpack.c.l.b16 %v1079
    %v1375 = vunpack.c.h.b16 %v1079
    %v1376 = vunpack.c.l.b16 %v1080
    %v1377 = vunpack.c.h.b16 %v1080
    %v1378 = vunpack.c.l.b16 %v1081
    %v1379 = vunpack.c.h.b16 %v1081
    %v1380 = vunpack.c.l.b16 %v1082
    %v1381 = vunpack.c.h.b16 %v1082
    %v1382 = vunpack.c.l.b16 %v1083
    %v1383 = vunpack.c.h.b16 %v1083
    %v1384 = vunpack.c.l.b16 %v1084
    %v1385 = vunpack.c.h.b16 %v1084
    %v1386 = vunpack.c.l.b16 %v1085
    %v1387 = vunpack.c.h.b16 %v1085
    %v1388 = vunpack.c.l.b16 %v1086
    %v1389 = vunpack.c.h.b16 %v1086
    %v1390 = vunpack.c.l.b16 %v1087
    %v1391 = vunpack.c.h.b16 %v1087
    %v1392 = vunpack.c.l.b16 %v1088
    %v1393 = vunpack.c.h.b16 %v1088
    %v1394 = vunpack.c.l.b16 %v1089
    %v1395 = vunpack.c.h.b16 %v1089
    %v1396 = vunpack.c.l.b16 %v1090
    %v1397 = vunpack.c.h.b16 %v1090
    %v1398 = vunpack.c.l.b16 %v1091
    %v1399 = vunpack.c.h.b16 %v1091
    %v1400 = vunpack.c.l.b16 %v1092
    %v1401 = vunpack.c.h.b16 %v1092
    %v1402 = vunpack.c.l.b16 %v1093
    %v1403 = vunpack.c.h.b16 %v1093
    %v1404 = vunpack.c.l.b16 %v1094
    %v1405 = vunpack.c.h.b16 %v1094
    %v1406 = vunpack.c.l.b16 %v1095
    %v1407 = vunpack.c.h.b16 %v1095
    %v1408 = vunpack.c.l.b16 %v1096
    %v1409 = vunpack.c.h.b16 %v1096
    %v1410 = vunpack.c.l.b16 %v1097
    %v1411 = vunpack.c.h.b16 %v1097
    %v1412 = vunpack.c.l.b16 %v1098
    %v1413 = vunpack.c.h.b16 %v1098
    %v1414 = vunpack.c.l.b16 %v1099
    %v1415 = vunpack.c.h.b16 %v1099
    %v1416 = vunpack.c.l.b16 %v1100
    %v1417 = vunpack.c.h.b16 %v1100
    %v1418 = vunpack.c.l.b16 %v1101
    %v1419 = vunpack.c.h.b16 %v1101
    %v1420 = vunpack.c.l.b16 %v1102
    %v1421 = vunpack.c.h.b16 %v1102
    %v1422 = vunpack.c.l.b16 %v1103
    %v1423 = vunpack.c.h.b16 %v1103
    %v1424 = vunpack.c.l.b16 %v1104
    %v1425 = vunpack.c.h.b16 %v1104
    %v1426 = vunpack.c.l.b16 %v1105
    %v1427 = vunpack.c.h.b16 %v1105
    %v1428 = vunpack.c.l.b16 %v1106
    %v1429 = vunpack.c.h.b16 %v1106
    %v1430 = vunpack.c.l.b16 %v1107
    %v1431 = vunpack.c.h.b16 %v1107
    %v1432 = vunpack.c.l.b16 %v1108
    %v1433 = vunpack.c.h.b16 %v1108
    %v1434 = vunpack.c.l.b16 %v1109
    %v1435 = vunpack.c.h.b16 %v1109
    %v1436 = vunpack.c.l.b16 %v1110
    %v1437 = vunpack.c.h.b16 %v1110
    %v1438 = vunpack.c.l.b16 %v1111
    %v1439 = vunpack.c.h.b16 %v1111
    %v1440 = vunpack.c.l.b16 %v1112
    %v1441 = vunpack.c.h.b16 %v1112
    %v1442 = vunpack.c.l.b16 %v1113
    %v1443 = vunpack.c.h.b16 %v1113
    %v1444 = vunpack.c.l.b16 %v1114
    %v1445 = vunpack.c.h.b16 %v1114
    %v1446 = vunpack.c.l.b16 %v1115
    %v1447 = vunpack.c.h.b16 %v1115
    %v1448 = vunpack.c.l.b16 %v1116
    %v1449 = vunpack.c.h.b16 %v1116
    %v1450 = vunpack.c.l.b16 %v1117
    %v1451 = vunpack.c.h.b16 %v1117
    %v1452 = vunpack.c.l.b16 %v1118
    %v1453 = vunpack.c.h.b16 %v1118
    %v1454 = vunpack.c.l.b16 %v1119
    %v1455 = vunpack.c.h.b16 %v1119
    %v1456 = vunpack.c.l.b16 %v1120
    %v1457 = vunpack.c.h.b16 %v1120
    %v1458 = vunpack.c.l.b16 %v1121
    %v1459 = vunpack.c.h.b16 %v1121
    %v1460 = vunpack.c.l.b16 %v1122
    %v1461 = vunpack.c.h.b16 %v1122
    %v1462 = vunpack.c.l.b16 %v1123
    %v1463 = vunpack.c.h.b16 %v1123
    %v1464 = vunpack.c.l.b16 %v1124
    %v1465 = vunpack.c.h.b16 %v1124
    %v1466 = vunpack.c.l.b16 %v1125
    %v1467 = vunpack.c.h.b16 %v1125
    %v1468 = vunpack.c.l.b16 %v1126
    %v1469 = vunpack.c.h.b16 %v1126
    %v1470 = vunpack.c.l.b16 %v1127
    %v1471 = vunpack.c.h.b16 %v1127
    %v1472 = vunpack.c.l.b16 %v1128
    %v1473 = vunpack.c.h.b16 %v1128
    %v1474 = vunpack.c.l.b16 %v1129
    %v1475 = vunpack.c.h.b16 %v1129
    %v1476 = vunpack.c.l.b16 %v1130
    %v1477 = vunpack.c.h.b16 %v1130
    %v1478 = vunpack.c.l.b16 %v1131
    %v1479 = vunpack.c.h.b16 %v1131
    %v1480 = vunpack.c.l.b16 %v1132
    %v1481 = vunpack.c.h.b16 %v1132
    %v1482 = vunpack.c.l.b16 %v1133
    %v1483 = vunpack.c.h.b16 %v1133
    %v1484 = vunpack.c.l.b16 %v1134
    %v1485 = vunpack.c.h.b16 %v1134
    %v1486 = vunpack.c.l.b16 %v1135
    %v1487 = vunpack.c.h.b16 %v1135
    %v1488 = vunpack.c.l.b16 %v1136
    %v1489 = vunpack.c.h.b16 %v1136
    %v1490 = vunpack.c.l.b16 %v1137
    %v1491 = vunpack.c.h.b16 %v1137
    %v1492 = vunpack.c.l.b16 %v1138
    %v1493 = vunpack.c.h.b16 %v1138
    %v1494 = vunpack.c.l.b16 %v1139
    %v1495 = vunpack.c.h.b16 %v1139
    %v1496 = vunpack.c.l.b16 %v1140
    %v1497 = vunpack.c.h.b16 %v1140
    %v1498 = vunpack.c.l.b16 %v1141
    %v1499 = vunpack.c.h.b16 %v1141
    %v1500 = vunpack.c.l.b16 %v1142
    %v1501 = vunpack.c.h.b16 %v1142
    %v1502 = vunpack.c.l.b16 %v1143
    %v1503 = vunpack.c.h.b16 %v1143
    %v1504 = vunpack.c.l.b16 %v1144
    %v1505 = vunpack.c.h.b16 %v1144
    %v1506 = vunpack.c.l.b16 %v1145
    %v1507 = vunpack.c.h.b16 %v1145
    %v1508 = vunpack.c.l.b16 %v1146
    %v1509 = vunpack.c.h.b16 %v1146
    %v1510 = vunpack.c.l.b16 %v1147
    %v1511 = vunpack.c.h.b16 %v1147
    %v1512 = vunpack.c.l.b16 %v1148
    %v1513 = vunpack.c.h.b16 %v1148
    %v1514 = vunpack.c.l.b16 %v1149
    %v1515 = vunpack.c.h.b16 %v1149
    %v1516 = vunpack.c.l.b16 %v1150
    %v1517 = vunpack.c.h.b16 %v1150
    %v1518 = vunpack.c.l.b16 %v1151
    %v1519 = vunpack.c.h.b16 %v1151
    %v1520 = vunpack.c.l.b16 %v1152
    %v1521 = vunpack.c.h.b16 %v1152
    %v1522 = vunpack.c.l.b16 %v1153
    %v1523 = vunpack.c.h.b16 %v1153
    %v1524 = vunpack.c.l.b16 %v1154
    %v1525 = vunpack.c.h.b16 %v1154
    %v1526 = vunpack.c.l.b16 %v1155
    %v1527 = vunpack.c.h.b16 %v1155
    %v1528 = vunpack.c.l.b16 %v1156
    %v1529 = vunpack.c.h.b16 %v1156
    %v1530 = vunpack.c.l.b16 %v1157
    %v1531 = vunpack.c.h.b16 %v1157
    %v1532 = vunpack.c.l.b16 %v1158
    %v1533 = vunpack.c.h.b16 %v1158
    %v1534 = vunpack.c.l.b16 %v1159
    %v1535 = vunpack.c.h.b16 %v1159
    %v1536 = vunpack.c.l.b16 %v1160
    %v1537 = vunpack.c.h.b16 %v1160
    %v1538 = vunpack.c.l.b16 %v1161
    %v1539 = vunpack.c.h.b16 %v1161
    %v1540 = vunpack.c.l.b16 %v1162
    %v1541 = vunpack.c.h.b16 %v1162
    %v1542 = vunpack.c.l.b16 %v1163
    %v1543 = vunpack.c.h.b16 %v1163
    %v1544 = vunpack.c.l.b16 %v1164
    %v1545 = vunpack.c.h.b16 %v1164
    %v1546 = vunpack.c.l.b16 %v1165
    %v1547 = vunpack.c.h.b16 %v1165
    %v1548 = vunpack.c.l.b16 %v1166
    %v1549 = vunpack.c.h.b16 %v1166
    %v1550 = vunpack.c.l.b16 %v1167
    %v1551 = vunpack.c.h.b16 %v1167
    %v1552 = vunpack.c.l.b16 %v1168
    %v1553 = vunpack.c.h.b16 %v1168
    %v1554 = vunpack.c.l.b16 %v1169
    %v1555 = vunpack.c.h.b16 %v1169
    %v1556 = vunpack.c.l.b16 %v1170
    %v1557 = vunpack.c.h.b16 %v1170
    %v1558 = vunpack.c.l.b16 %v1171
    %v1559 = vunpack.c.h.b16 %v1171
    %v1560 = vunpack.c.l.b16 %v1172
    %v1561 = vunpack.c.h.b16 %v1172
    %v1562 = vunpack.c.l.b16 %v1173
    %v1563 = vunpack.c.h.b16 %v1173
    %v1564 = vunpack.c.l.b16 %v1174
    %v1565 = vunpack.c.h.b16 %v1174
    %v1566 = vunpack.c.l.b16 %v1175
    %v1567 = vunpack.c.h.b16 %v1175
    %v1568 = vunpack.c.l.b16 %v1176
    %v1569 = vunpack.c.h.b16 %v1176
    %v1570 = vunpack.c.l.b16 %v1177
    %v1571 = vunpack.c.h.b16 %v1177
    %v1572 = vunpack.c.l.b16 %v1178
    %v1573 = vunpack.c.h.b16 %v1178
    %v1574 = vunpack.c.l.b16 %v1179
    %v1575 = vunpack.c.h.b16 %v1179
    %v1576 = vunpack.c.l.b16 %v1180
    %v1577 = vunpack.c.h.b16 %v1180
    %v1578 = vunpack.c.l.b16 %v1181
    %v1579 = vunpack.c.h.b16 %v1181
    %v1580 = vunpack.c.l.b16 %v1182
    %v1581 = vunpack.c.h.b16 %v1182
    %v1582 = vunpack.c.l.b16 %v1183
    %v1583 = vunpack.c.h.b16 %v1183
    %v1584 = vunpack.c.l.b16 %v1184
    %v1585 = vunpack.c.h.b16 %v1184
    %v1586 = vunpack.c.l.b16 %v1185
    %v1587 = vunpack.c.h.b16 %v1185
    %v1588 = vunpack.c.l.b16 %v1186
    %v1589 = vunpack.c.h.b16 %v1186
    %v1590 = vunpack.c.l.b16 %v1187
    %v1591 = vunpack.c.h.b16 %v1187
    %v1592 = vunpack.c.l.b16 %v1188
    %v1593 = vunpack.c.h.b16 %v1188
    %v1594 = vunpack.c.l.b16 %v1189
    %v1595 = vunpack.c.h.b16 %v1189
    %v1596 = vunpack.c.l.b16 %v1190
    %v1597 = vunpack.c.h.b16 %v1190
    %v1598 = vpack.c.b16 %v1346, %v1342
    %v1599 = vpack.c.b16 %v1347, %v1343
    %v1600 = vpack.c.b16 %v1348, %v1344
    %v1601 = vpack.c.b16 %v1349, %v1345
    %v1602 = vpack.c.b16 %v1354, %v1350
    %v1603 = vpack.c.b16 %v1355, %v1351
    %v1604 = vpack.c.b16 %v1356, %v1352
    %v1605 = vpack.c.b16 %v1357, %v1353
    %v1606 = vpack.c.b16 %v1362, %v1358
    %v1607 = vpack.c.b16 %v1363, %v1359
    %v1608 = vpack.c.b16 %v1364, %v1360
    %v1609 = vpack.c.b16 %v1365, %v1361
    %v1610 = vpack.c.b16 %v1370, %v1366
    %v1611 = vpack.c.b16 %v1371, %v1367
    %v1612 = vpack.c.b16 %v1372, %v1368
    %v1613 = vpack.c.b16 %v1373, %v1369
    %v1614 = vpack.c.b16 %v1378, %v1374
    %v1615 = vpack.c.b16 %v1379, %v1375
    %v1616 = vpack.c.b16 %v1380, %v1376
    %v1617 = vpack.c.b16 %v1381, %v1377
    %v1618 = vpack.c.b16 %v1386, %v1382
    %v1619 = vpack.c.b16 %v1387, %v1383
    %v1620 = vpack.c.b16 %v1388, %v1384
    %v1621 = vpack.c.b16 %v1389, %v1385
    %v1622 = vpack.c.b16 %v1394, %v1390
    %v1623 = vpack.c.b16 %v1395, %v1391
    %v1624 = vpack.c.b16 %v1396, %v1392
    %v1625 = vpack.c.b16 %v1397, %v1393
    %v1626 = vpack.c.b16 %v1402, %v1398
    %v1627 = vpack.c.b16 %v1403, %v1399
    %v1628 = vpack.c.b16 %v1404, %v1400
    %v1629 = vpack.c.b16 %v1405, %v1401
    %v1630 = vpack.c.b16 %v1410, %v1406
    %v1631 = vpack.c.b16 %v1411, %v1407
    %v1632 = vpack.c.b16 %v1412, %v1408
    %v1633 = vpack.c.b16 %v1413, %v1409
    %v1634 = vpack.c.b16 %v1418, %v1414
    %v1635 = vpack.c.b16 %v1419, %v1415
    %v1636 = vpack.c.b16 %v1420, %v1416
    %v1637 = vpack.c.b16 %v1421, %v1417
    %v1638 = vpack.c.b16 %v1426, %v1422
    %v1639 = vpack.c.b16 %v1427, %v1423
    %v1640 = vpack.c.b16 %v1428, %v1424
    %v1641 = vpack.c.b16 %v1429, %v1425
    %v1642 = vpack.c.b16 %v1434, %v1430
    %v1643 = vpack.c.b16 %v1435, %v1431
    %v1644 = vpack.c.b16 %v1436, %v1432
    %v1645 = vpack.c.b16 %v1437, %v1433
    %v1646 = vpack.c.b16 %v1442, %v1438
    %v1647 = vpack.c.b16 %v1443, %v1439
    %v1648 = vpack.c.b16 %v1444, %v1440
    %v1649 = vpack.c.b16 %v1445, %v1441
    %v1650 = vpack.c.b16 %v1450, %v1446
    %v1651 = vpack.c.b16 %v1451, %v1447
    %v1652 = vpack.c.b16 %v1452, %v1448
    %v1653 = vpack.c.b16 %v1453, %v1449
    %v1654 = vpack.c.b16 %v1458, %v1454
    %v1655 = vpack.c.b16 %v1459, %v1455
    %v1656 = vpack.c.b16 %v1460, %v1456
    %v1657 = vpack.c.b16 %v1461, %v1457
    %v1658 = vpack.c.b16 %v1466, %v1462
    %v1659 = vpack.c.b16 %v1467, %v1463
    %v1660 = vpack.c.b16 %v1468, %v1464
    %v1661 = vpack.c.b16 %v1469, %v1465
    %v1662 = vpack.c.b16 %v1474, %v1470
    %v1663 = vpack.c.b16 %v1475, %v1471
    %v1664 = vpack.c.b16 %v1476, %v1472
    %v1665 = vpack.c.b16 %v1477, %v1473
    %v1666 = vpack.c.b16 %v1482, %v1478
    %v1667 = vpack.c.b16 %v1483, %v1479
    %v1668 = vpack.c.b16 %v1484, %v1480
    %v1669 = vpack.c.b16 %v1485, %v1481
    %v1670 = vpack.c.b16 %v1490, %v1486
    %v1671 = vpack.c.b16 %v1491, %v1487
    %v1672 = vpack.c.b16 %v1492, %v1488
    %v1673 = vpack.c.b16 %v1493, %v1489
    %v1674 = vpack.c.b16 %v1498, %v1494
    %v1675 = vpack.c.b16 %v1499, %v1495
    %v1676 = vpack.c.b16 %v1500, %v1496
    %v1677 = vpack.c.b16 %v1501, %v1497
    %v1678 = vpack.c.b16 %v1506, %v1502
    %v1679 = vpack.c.b16 %v1507, %v1503
    %v1680 = vpack.c.b16 %v1508, %v1504
    %v1681 = vpack.c.b16 %v1509, %v1505
    %v1682 = vpack.c.b16 %v1514, %v1510
    %v1683 = vpack.c.b16 %v1515, %v1511
    %v1684 = vpack.c.b16 %v1516, %v1512
    %v1685 = vpack.c.b16 %v1517, %v1513
    %v1686 = vpack.c.b16 %v1522, %v1518
    %v1687 = vpack.c.b16 %v1523, %v1519
    %v1688 = vpack.c.b16 %v1524, %v1520
    %v1689 = vpack.c.b16 %v1525, %v1521
    %v1690 = vpack.c.b16 %v1530, %v1526
    %v1691 = vpack.c.b16 %v1531, %v1527
    %v1692 = vpack.c.b16 %v1532, %v1528
    %v1693 = vpack.c.b16 %v1533, %v1529
    %v1694 = vpack.c.b16 %v1538, %v1534
    %v1695 = vpack.c.b16 %v1539, %v1535
    %v1696 = vpack.c.b16 %v1540, %v1536
    %v1697 = vpack.c.b16 %v1541, %v1537
    %v1698 = vpack.c.b16 %v1546, %v1542
    %v1699 = vpack.c.b16 %v1547, %v1543
    %v1700 = vpack.c.b16 %v1548, %v1544
    %v1701 = vpack.c.b16 %v1549, %v1545
    %v1702 = vpack.c.b16 %v1554, %v1550
    %v1703 = vpack.c.b16 %v1555, %v1551
    %v1704 = vpack.c.b16 %v1556, %v1552
    %v1705 = vpack.c.b16 %v1557, %v1553
    %v1706 = vpack.c.b16 %v1562, %v1558
    %v1707 = vpack.c.b16 %v1563, %v1559
    %v1708 = vpack.c.b16 %v1564, %v1560
    %v1709 = vpack.c.b16 %v1565, %v1561
    %v1710 = vpack.c.b16 %v1570, %v1566
    %v1711 = vpack.c.b16 %v1571, %v1567
    %v1712 = vpack.c.b16 %v1572, %v1568
    %v1713 = vpack.c.b16 %v1573, %v1569
    %v1714 = vpack.c.b16 %v1578, %v1574
    %v1715 = vpack.c.b16 %v1579, %v1575
    %v1716 = vpack.c.b16 %v1580, %v1576
    %v1717 = vpack.c.b16 %v1581, %v1577
    %v1718 = vpack.c.b16 %v1586, %v1582
    %v1719 = vpack.c.b16 %v1587, %v1583
    %v1720 = vpack.c.b16 %v1588, %v1584
    %v1721 = vpack.c.b16 %v1589, %v1585
    %v1722 = vpack.c.b16 %v1594, %v1590
    %v1723 = vpack.c.b16 %v1595, %v1591
    %v1724 = vpack.c.b16 %v1596, %v1592
    %v1725 = vpack.c.b16 %v1597, %v1593
    %1854 = vmatprep.subr.bf16.mxu0 %v1627
    %1855 = vmatpush1.bf16.msra.mxu0 %v1626
    %1856 = vmatprep.subr.bf16.mxu0 %v1623
    %1857 = vmatpush1.bf16.msra.mxu0 %v1622
    %1858 = vmatprep.subr.bf16.mxu0 %v1619
    %1859 = vmatpush1.bf16.msra.mxu0 %v1618
    %1860 = vmatprep.subr.bf16.mxu0 %v1615
    %1861 = vmatpush1.bf16.msra.mxu0 %v1614
    %1862 = vmatprep.subr.bf16.mxu0 %v1611
    %1863 = vmatpush1.bf16.msra.mxu0 %v1610
    %1864 = vmatprep.subr.bf16.mxu0 %v1607
    %1865 = vmatpush1.bf16.msra.mxu0 %v1606
    %1866 = vmatprep.subr.bf16.mxu0 %v1603
    %1867 = vmatpush1.bf16.msra.mxu0 %v1602
    %1868 = vmatprep.subr.bf16.mxu0 %v1599
    %1869 = vmatpush1.bf16.msra.mxu0 %v1598
    %1870 = vmatprep.subr.bf16.mxu0 %v1659
    %1871 = vmatpush2.bf16.msra.mxu0 %v1658
    %1872 = vmatprep.subr.bf16.mxu0 %v1655
    %1873 = vmatpush2.bf16.msra.mxu0 %v1654
    %1874 = vmatprep.subr.bf16.mxu0 %v1651
    %1875 = vmatpush2.bf16.msra.mxu0 %v1650
    %1876 = vmatprep.subr.bf16.mxu0 %v1647
    %1877 = vmatpush2.bf16.msra.mxu0 %v1646
    %1878 = vmatprep.subr.bf16.mxu0 %v1643
    %1879 = vmatpush2.bf16.msra.mxu0 %v1642
    %1880 = vmatprep.subr.bf16.mxu0 %v1639
    %1881 = vmatpush2.bf16.msra.mxu0 %v1638
    %1882 = vmatprep.subr.bf16.mxu0 %v1635
    %1883 = vmatpush2.bf16.msra.mxu0 %v1634
    %1884 = vmatprep.subr.bf16.mxu0 %v1631
    %1885 = vmatpush2.bf16.msra.mxu0 %v1630
    %1886 = vmatprep.mubr.bf16.mxu0 %v1060
    %1887 = vmatmul.mubr.bf16.gmra.mxu0 %v1059
    %v1888 = vpop.f32.mrf.mxu0
    %v1889 = vadd.f32 %v1197, %v1888
    %v1890 = vpop.f32.mrf.mxu0
    %v1891 = vadd.f32 %v1201, %v1890
    %v1892 = vpop.f32.mrf.mxu0
    %v1893 = vpop.f32.mrf.mxu0
    %1894 = vdwg.mxu0
    %1895 = vmatprep.subr.bf16.mxu0 %v1691
    %1896 = vmatpush1.bf16.msra.mxu0 %v1690
    %1897 = vmatprep.subr.bf16.mxu0 %v1687
    %1898 = vmatpush1.bf16.msra.mxu0 %v1686
    %1899 = vmatprep.subr.bf16.mxu0 %v1683
    %1900 = vmatpush1.bf16.msra.mxu0 %v1682
    %1901 = vmatprep.subr.bf16.mxu0 %v1679
    %1902 = vmatpush1.bf16.msra.mxu0 %v1678
    %1903 = vmatprep.subr.bf16.mxu0 %v1675
    %1904 = vmatpush1.bf16.msra.mxu0 %v1674
    %1905 = vmatprep.subr.bf16.mxu0 %v1671
    %1906 = vmatpush1.bf16.msra.mxu0 %v1670
    %1907 = vmatprep.subr.bf16.mxu0 %v1667
    %1908 = vmatpush1.bf16.msra.mxu0 %v1666
    %1909 = vmatprep.subr.bf16.mxu0 %v1663
    %1910 = vmatpush1.bf16.msra.mxu0 %v1662
    %1911 = vmatprep.subr.bf16.mxu0 %v1723
    %1912 = vmatpush2.bf16.msra.mxu0 %v1722
    %1913 = vmatprep.subr.bf16.mxu0 %v1719
    %1914 = vmatpush2.bf16.msra.mxu0 %v1718
    %1915 = vmatprep.subr.bf16.mxu0 %v1715
    %1916 = vmatpush2.bf16.msra.mxu0 %v1714
    %1917 = vmatprep.subr.bf16.mxu0 %v1711
    %1918 = vmatpush2.bf16.msra.mxu0 %v1710
    %1919 = vmatprep.subr.bf16.mxu0 %v1707
    %1920 = vmatpush2.bf16.msra.mxu0 %v1706
    %1921 = vmatprep.subr.bf16.mxu0 %v1703
    %1922 = vmatpush2.bf16.msra.mxu0 %v1702
    %1923 = vmatprep.subr.bf16.mxu0 %v1699
    %1924 = vmatpush2.bf16.msra.mxu0 %v1698
    %1925 = vmatprep.subr.bf16.mxu0 %v1695
    %1926 = vmatpush2.bf16.msra.mxu0 %v1694
    %1927 = vmatprep.mubr.bf16.mxu0 %v1062
    %1928 = vmatmul.mubr.bf16.gmra.mxu0 %v1061
    %v1929 = vpop.f32.mrf.mxu0
    %v1930 = vadd.f32 %v1889, %v1929
    %v1931 = vpop.f32.mrf.mxu0
    %v1932 = vadd.f32 %v1891, %v1931
    %v1933 = vpop.f32.mrf.mxu0
    %v1934 = vpop.f32.mrf.mxu0
    %1935 = vdwg.mxu0
    %1936 = vmatprep.subr.bf16.mxu0 %v1629
    %1937 = vmatpush1.bf16.msra.mxu0 %v1628
    %1938 = vmatprep.subr.bf16.mxu0 %v1625
    %1939 = vmatpush1.bf16.msra.mxu0 %v1624
    %1940 = vmatprep.subr.bf16.mxu0 %v1621
    %1941 = vmatpush1.bf16.msra.mxu0 %v1620
    %1942 = vmatprep.subr.bf16.mxu0 %v1617
    %1943 = vmatpush1.bf16.msra.mxu0 %v1616
    %1944 = vmatprep.subr.bf16.mxu0 %v1613
    %1945 = vmatpush1.bf16.msra.mxu0 %v1612
    %1946 = vmatprep.subr.bf16.mxu0 %v1609
    %1947 = vmatpush1.bf16.msra.mxu0 %v1608
    %1948 = vmatprep.subr.bf16.mxu0 %v1605
    %1949 = vmatpush1.bf16.msra.mxu0 %v1604
    %1950 = vmatprep.subr.bf16.mxu0 %v1601
    %1951 = vmatpush1.bf16.msra.mxu0 %v1600
    %1952 = vmatprep.subr.bf16.mxu0 %v1661
    %1953 = vmatpush2.bf16.msra.mxu0 %v1660
    %1954 = vmatprep.subr.bf16.mxu0 %v1657
    %1955 = vmatpush2.bf16.msra.mxu0 %v1656
    %1956 = vmatprep.subr.bf16.mxu0 %v1653
    %1957 = vmatpush2.bf16.msra.mxu0 %v1652
    %1958 = vmatprep.subr.bf16.mxu0 %v1649
    %1959 = vmatpush2.bf16.msra.mxu0 %v1648
    %1960 = vmatprep.subr.bf16.mxu0 %v1645
    %1961 = vmatpush2.bf16.msra.mxu0 %v1644
    %1962 = vmatprep.subr.bf16.mxu0 %v1641
    %1963 = vmatpush2.bf16.msra.mxu0 %v1640
    %1964 = vmatprep.subr.bf16.mxu0 %v1637
    %1965 = vmatpush2.bf16.msra.mxu0 %v1636
    %1966 = vmatprep.subr.bf16.mxu0 %v1633
    %1967 = vmatpush2.bf16.msra.mxu0 %v1632
    %1968 = vmatprep.mubr.bf16.mxu0 %v1060
    %1969 = vmatmul.mubr.bf16.gmra.mxu0 %v1059
    %v1970 = vpop.f32.mrf.mxu0
    %v1971 = vadd.f32 %v1205, %v1970
    %v1972 = vpop.f32.mrf.mxu0
    %v1973 = vadd.f32 %v1209, %v1972
    %v1974 = vpop.f32.mrf.mxu0
    %v1975 = vpop.f32.mrf.mxu0
    %1976 = vdwg.mxu0
    %1977 = vmatprep.subr.bf16.mxu0 %v1693
    %1978 = vmatpush1.bf16.msra.mxu0 %v1692
    %1979 = vmatprep.subr.bf16.mxu0 %v1689
    %1980 = vmatpush1.bf16.msra.mxu0 %v1688
    %1981 = vmatprep.subr.bf16.mxu0 %v1685
    %1982 = vmatpush1.bf16.msra.mxu0 %v1684
    %1983 = vmatprep.subr.bf16.mxu0 %v1681
    %1984 = vmatpush1.bf16.msra.mxu0 %v1680
    %1985 = vmatprep.subr.bf16.mxu0 %v1677
    %1986 = vmatpush1.bf16.msra.mxu0 %v1676
    %1987 = vmatprep.subr.bf16.mxu0 %v1673
    %1988 = vmatpush1.bf16.msra.mxu0 %v1672
    %1989 = vmatprep.subr.bf16.mxu0 %v1669
    %1990 = vmatpush1.bf16.msra.mxu0 %v1668
    %1991 = vmatprep.subr.bf16.mxu0 %v1665
    %1992 = vmatpush1.bf16.msra.mxu0 %v1664
    %1993 = vmatprep.subr.bf16.mxu0 %v1725
    %1994 = vmatpush2.bf16.msra.mxu0 %v1724
    %1995 = vmatprep.subr.bf16.mxu0 %v1721
    %1996 = vmatpush2.bf16.msra.mxu0 %v1720
    %1997 = vmatprep.subr.bf16.mxu0 %v1717
    %1998 = vmatpush2.bf16.msra.mxu0 %v1716
    %1999 = vmatprep.subr.bf16.mxu0 %v1713
    %2000 = vmatpush2.bf16.msra.mxu0 %v1712
    %2001 = vmatprep.subr.bf16.mxu0 %v1709
    %2002 = vmatpush2.bf16.msra.mxu0 %v1708
    %2003 = vmatprep.subr.bf16.mxu0 %v1705
    %2004 = vmatpush2.bf16.msra.mxu0 %v1704
    %2005 = vmatprep.subr.bf16.mxu0 %v1701
    %2006 = vmatpush2.bf16.msra.mxu0 %v1700
    %2007 = vmatprep.subr.bf16.mxu0 %v1697
    %2008 = vmatpush2.bf16.msra.mxu0 %v1696
    %2009 = vmatprep.mubr.bf16.mxu0 %v1062
    %2010 = vmatmul.mubr.bf16.gmra.mxu0 %v1061
    %v2011 = vpop.f32.mrf.mxu0
    %v2012 = vadd.f32 %v1971, %v2011
    %v2013 = vpop.f32.mrf.mxu0
    %v2014 = vadd.f32 %v1973, %v2013
    %v2015 = vpop.f32.mrf.mxu0
    %v2016 = vpop.f32.mrf.mxu0
    %2017 = vdwg.mxu0
    %vm2018 = vcmp.ge.f32.partialorder %v1930, 0.0
    %vm2019 = vcmp.ge.f32.partialorder %v1932, 0.0
    %vm2020 = vcmp.ge.f32.partialorder %v2012, 0.0
    %vm2021 = vcmp.ge.f32.partialorder %v2014, 0.0
    %v2022 = vmul.f32 %v1930, 0.2
    %v2023 = vmul.f32 %v1932, 0.2
    %v2024 = vmul.f32 %v2012, 0.2
    %v2025 = vmul.f32 %v2014, 0.2
    %v2026 = vsel %vm2018, %v1930, %v2022
    %v2027 = vsel %vm2019, %v1932, %v2023
    %v2028 = vsel %vm2020, %v2012, %v2024
    %v2029 = vsel %vm2021, %v2014, %v2025
    %v2030 = vpack.c.bf16 %v2026, %v2026
    %v2031 = vpack.c.bf16 %v2027, %v2027
    %v2032 = vpack.c.bf16 %v2028, %v2028
    %v2033 = vpack.c.bf16 %v2029, %v2029
    %v2034 = vld [vmem:[#allocation8] sm:$0xff]
    %v2035 = vld [vmem:[#allocation8 + $0x8] sm:$0xff]
    %v2036 = vld [vmem:[#allocation8 + $0x10] sm:$0xff]
    %v2037 = vld [vmem:[#allocation8 + $0x18] sm:$0xff]
    %v2038 = vld [vmem:[#allocation8 + $0x20] sm:$0xff]
    %v2039 = vld [vmem:[#allocation8 + $0x28] sm:$0xff]
    %v2040 = vld [vmem:[#allocation8 + $0x30] sm:$0xff]
    %v2041 = vld [vmem:[#allocation8 + $0x38] sm:$0xff]
    %v2042 = vld [vmem:[#allocation8 + $0x40] sm:$0xff]
    %v2043 = vld [vmem:[#allocation8 + $0x48] sm:$0xff]
    %v2044 = vld [vmem:[#allocation8 + $0x50] sm:$0xff]
    %v2045 = vld [vmem:[#allocation8 + $0x58] sm:$0xff]
    %v2046 = vld [vmem:[#allocation8 + $0x60] sm:$0xff]
    %v2047 = vld [vmem:[#allocation8 + $0x68] sm:$0xff]
    %v2048 = vld [vmem:[#allocation8 + $0x70] sm:$0xff]
    %v2049 = vld [vmem:[#allocation8 + $0x78] sm:$0xff]
    %v2050 = vld [vmem:[#allocation8 + $0x80] sm:$0xff]
    %v2051 = vld [vmem:[#allocation8 + $0x88] sm:$0xff]
    %v2052 = vld [vmem:[#allocation8 + $0x90] sm:$0xff]
    %v2053 = vld [vmem:[#allocation8 + $0x98] sm:$0xff]
    %v2054 = vld [vmem:[#allocation8 + $0xa0] sm:$0xff]
    %v2055 = vld [vmem:[#allocation8 + $0xa8] sm:$0xff]
    %v2056 = vld [vmem:[#allocation8 + $0xb0] sm:$0xff]
    %v2057 = vld [vmem:[#allocation8 + $0xb8] sm:$0xff]
    %v2058 = vld [vmem:[#allocation8 + $0xc0] sm:$0xff]
    %v2059 = vld [vmem:[#allocation8 + $0xc8] sm:$0xff]
    %v2060 = vld [vmem:[#allocation8 + $0xd0] sm:$0xff]
    %v2061 = vld [vmem:[#allocation8 + $0xd8] sm:$0xff]
    %v2062 = vld [vmem:[#allocation8 + $0xe0] sm:$0xff]
    %v2063 = vld [vmem:[#allocation8 + $0xe8] sm:$0xff]
    %v2064 = vld [vmem:[#allocation8 + $0xf0] sm:$0xff]
    %v2065 = vld [vmem:[#allocation8 + $0xf8] sm:$0xff]
    %v2066 = vld [vmem:[#allocation8 + $0x100] sm:$0xff]
    %v2067 = vld [vmem:[#allocation8 + $0x108] sm:$0xff]
    %v2068 = vld [vmem:[#allocation8 + $0x110] sm:$0xff]
    %v2069 = vld [vmem:[#allocation8 + $0x118] sm:$0xff]
    %v2070 = vld [vmem:[#allocation8 + $0x120] sm:$0xff]
    %v2071 = vld [vmem:[#allocation8 + $0x128] sm:$0xff]
    %v2072 = vld [vmem:[#allocation8 + $0x130] sm:$0xff]
    %v2073 = vld [vmem:[#allocation8 + $0x138] sm:$0xff]
    %v2074 = vld [vmem:[#allocation8 + $0x140] sm:$0xff]
    %v2075 = vld [vmem:[#allocation8 + $0x148] sm:$0xff]
    %v2076 = vld [vmem:[#allocation8 + $0x150] sm:$0xff]
    %v2077 = vld [vmem:[#allocation8 + $0x158] sm:$0xff]
    %v2078 = vld [vmem:[#allocation8 + $0x160] sm:$0xff]
    %v2079 = vld [vmem:[#allocation8 + $0x168] sm:$0xff]
    %v2080 = vld [vmem:[#allocation8 + $0x170] sm:$0xff]
    %v2081 = vld [vmem:[#allocation8 + $0x178] sm:$0xff]
    %v2082 = vld [vmem:[#allocation8 + $0x180] sm:$0xff]
    %v2083 = vld [vmem:[#allocation8 + $0x188] sm:$0xff]
    %v2084 = vld [vmem:[#allocation8 + $0x190] sm:$0xff]
    %v2085 = vld [vmem:[#allocation8 + $0x198] sm:$0xff]
    %v2086 = vld [vmem:[#allocation8 + $0x1a0] sm:$0xff]
    %v2087 = vld [vmem:[#allocation8 + $0x1a8] sm:$0xff]
    %v2088 = vld [vmem:[#allocation8 + $0x1b0] sm:$0xff]
    %v2089 = vld [vmem:[#allocation8 + $0x1b8] sm:$0xff]
    %v2090 = vld [vmem:[#allocation8 + $0x1c0] sm:$0xff]
    %v2091 = vld [vmem:[#allocation8 + $0x1c8] sm:$0xff]
    %v2092 = vld [vmem:[#allocation8 + $0x1d0] sm:$0xff]
    %v2093 = vld [vmem:[#allocation8 + $0x1d8] sm:$0xff]
    %v2094 = vld [vmem:[#allocation8 + $0x1e0] sm:$0xff]
    %v2095 = vld [vmem:[#allocation8 + $0x1e8] sm:$0xff]
    %v2096 = vld [vmem:[#allocation8 + $0x1f0] sm:$0xff]
    %v2097 = vld [vmem:[#allocation8 + $0x1f8] sm:$0xff]
    %v2098 = vld [vmem:[#allocation8 + $0x200] sm:$0xff]
    %v2099 = vld [vmem:[#allocation8 + $0x208] sm:$0xff]
    %v2100 = vld [vmem:[#allocation8 + $0x210] sm:$0xff]
    %v2101 = vld [vmem:[#allocation8 + $0x218] sm:$0xff]
    %v2102 = vld [vmem:[#allocation8 + $0x220] sm:$0xff]
    %v2103 = vld [vmem:[#allocation8 + $0x228] sm:$0xff]
    %v2104 = vld [vmem:[#allocation8 + $0x230] sm:$0xff]
    %v2105 = vld [vmem:[#allocation8 + $0x238] sm:$0xff]
    %v2106 = vld [vmem:[#allocation8 + $0x240] sm:$0xff]
    %v2107 = vld [vmem:[#allocation8 + $0x248] sm:$0xff]
    %v2108 = vld [vmem:[#allocation8 + $0x250] sm:$0xff]
    %v2109 = vld [vmem:[#allocation8 + $0x258] sm:$0xff]
    %v2110 = vld [vmem:[#allocation8 + $0x260] sm:$0xff]
    %v2111 = vld [vmem:[#allocation8 + $0x268] sm:$0xff]
    %v2112 = vld [vmem:[#allocation8 + $0x270] sm:$0xff]
    %v2113 = vld [vmem:[#allocation8 + $0x278] sm:$0xff]
    %v2114 = vld [vmem:[#allocation8 + $0x280] sm:$0xff]
    %v2115 = vld [vmem:[#allocation8 + $0x288] sm:$0xff]
    %v2116 = vld [vmem:[#allocation8 + $0x290] sm:$0xff]
    %v2117 = vld [vmem:[#allocation8 + $0x298] sm:$0xff]
    %v2118 = vld [vmem:[#allocation8 + $0x2a0] sm:$0xff]
    %v2119 = vld [vmem:[#allocation8 + $0x2a8] sm:$0xff]
    %v2120 = vld [vmem:[#allocation8 + $0x2b0] sm:$0xff]
    %v2121 = vld [vmem:[#allocation8 + $0x2b8] sm:$0xff]
    %v2122 = vld [vmem:[#allocation8 + $0x2c0] sm:$0xff]
    %v2123 = vld [vmem:[#allocation8 + $0x2c8] sm:$0xff]
    %v2124 = vld [vmem:[#allocation8 + $0x2d0] sm:$0xff]
    %v2125 = vld [vmem:[#allocation8 + $0x2d8] sm:$0xff]
    %v2126 = vld [vmem:[#allocation8 + $0x2e0] sm:$0xff]
    %v2127 = vld [vmem:[#allocation8 + $0x2e8] sm:$0xff]
    %v2128 = vld [vmem:[#allocation8 + $0x2f0] sm:$0xff]
    %v2129 = vld [vmem:[#allocation8 + $0x2f8] sm:$0xff]
    %v2130 = vld [vmem:[#allocation8 + $0x300] sm:$0xff]
    %v2131 = vld [vmem:[#allocation8 + $0x308] sm:$0xff]
    %v2132 = vld [vmem:[#allocation8 + $0x310] sm:$0xff]
    %v2133 = vld [vmem:[#allocation8 + $0x318] sm:$0xff]
    %v2134 = vld [vmem:[#allocation8 + $0x320] sm:$0xff]
    %v2135 = vld [vmem:[#allocation8 + $0x328] sm:$0xff]
    %v2136 = vld [vmem:[#allocation8 + $0x330] sm:$0xff]
    %v2137 = vld [vmem:[#allocation8 + $0x338] sm:$0xff]
    %v2138 = vld [vmem:[#allocation8 + $0x340] sm:$0xff]
    %v2139 = vld [vmem:[#allocation8 + $0x348] sm:$0xff]
    %v2140 = vld [vmem:[#allocation8 + $0x350] sm:$0xff]
    %v2141 = vld [vmem:[#allocation8 + $0x358] sm:$0xff]
    %v2142 = vld [vmem:[#allocation8 + $0x360] sm:$0xff]
    %v2143 = vld [vmem:[#allocation8 + $0x368] sm:$0xff]
    %v2144 = vld [vmem:[#allocation8 + $0x370] sm:$0xff]
    %v2145 = vld [vmem:[#allocation8 + $0x378] sm:$0xff]
    %v2146 = vld [vmem:[#allocation8 + $0x380] sm:$0xff]
    %v2147 = vld [vmem:[#allocation8 + $0x388] sm:$0xff]
    %v2148 = vld [vmem:[#allocation8 + $0x390] sm:$0xff]
    %v2149 = vld [vmem:[#allocation8 + $0x398] sm:$0xff]
    %v2150 = vld [vmem:[#allocation8 + $0x3a0] sm:$0xff]
    %v2151 = vld [vmem:[#allocation8 + $0x3a8] sm:$0xff]
    %v2152 = vld [vmem:[#allocation8 + $0x3b0] sm:$0xff]
    %v2153 = vld [vmem:[#allocation8 + $0x3b8] sm:$0xff]
    %v2154 = vld [vmem:[#allocation8 + $0x3c0] sm:$0xff]
    %v2155 = vld [vmem:[#allocation8 + $0x3c8] sm:$0xff]
    %v2156 = vld [vmem:[#allocation8 + $0x3d0] sm:$0xff]
    %v2157 = vld [vmem:[#allocation8 + $0x3d8] sm:$0xff]
    %v2158 = vld [vmem:[#allocation8 + $0x3e0] sm:$0xff]
    %v2159 = vld [vmem:[#allocation8 + $0x3e8] sm:$0xff]
    %v2160 = vld [vmem:[#allocation8 + $0x3f0] sm:$0xff]
    %v2161 = vld [vmem:[#allocation8 + $0x3f8] sm:$0xff]
    %s2162 = scalar_lea.vmem [#allocation10], 2
    %v2163 = vld [vmem:[%s2162] ss:$4 sm:$0xf]
    %v2165 = vlaneseq
    %v2166 = vshrl.u32 %v2165, 7
    %v2167 = vsub.s32 0, %v2166
    %v2168 = vrot.slane %v2163, %v2167
    %v2169 = vlaneseq
    %v2170 = vshrl.u32 %v2169, 7
    %v2171 = vsub.s32 1, %v2170
    %v2172 = vrot.slane %v2163, %v2171
    %v2173 = vlaneseq
    %v2174 = vshrl.u32 %v2173, 7
    %v2175 = vsub.s32 2, %v2174
    %v2176 = vrot.slane %v2163, %v2175
    %v2177 = vlaneseq
    %v2178 = vshrl.u32 %v2177, 7
    %v2179 = vsub.s32 3, %v2178
    %v2180 = vrot.slane %v2163, %v2179
    %v2313 = vunpack.c.l.b16 %v2034
    %v2314 = vunpack.c.h.b16 %v2034
    %v2315 = vunpack.c.l.b16 %v2035
    %v2316 = vunpack.c.h.b16 %v2035
    %v2317 = vunpack.c.l.b16 %v2036
    %v2318 = vunpack.c.h.b16 %v2036
    %v2319 = vunpack.c.l.b16 %v2037
    %v2320 = vunpack.c.h.b16 %v2037
    %v2321 = vunpack.c.l.b16 %v2038
    %v2322 = vunpack.c.h.b16 %v2038
    %v2323 = vunpack.c.l.b16 %v2039
    %v2324 = vunpack.c.h.b16 %v2039
    %v2325 = vunpack.c.l.b16 %v2040
    %v2326 = vunpack.c.h.b16 %v2040
    %v2327 = vunpack.c.l.b16 %v2041
    %v2328 = vunpack.c.h.b16 %v2041
    %v2329 = vunpack.c.l.b16 %v2042
    %v2330 = vunpack.c.h.b16 %v2042
    %v2331 = vunpack.c.l.b16 %v2043
    %v2332 = vunpack.c.h.b16 %v2043
    %v2333 = vunpack.c.l.b16 %v2044
    %v2334 = vunpack.c.h.b16 %v2044
    %v2335 = vunpack.c.l.b16 %v2045
    %v2336 = vunpack.c.h.b16 %v2045
    %v2337 = vunpack.c.l.b16 %v2046
    %v2338 = vunpack.c.h.b16 %v2046
    %v2339 = vunpack.c.l.b16 %v2047
    %v2340 = vunpack.c.h.b16 %v2047
    %v2341 = vunpack.c.l.b16 %v2048
    %v2342 = vunpack.c.h.b16 %v2048
    %v2343 = vunpack.c.l.b16 %v2049
    %v2344 = vunpack.c.h.b16 %v2049
    %v2345 = vunpack.c.l.b16 %v2050
    %v2346 = vunpack.c.h.b16 %v2050
    %v2347 = vunpack.c.l.b16 %v2051
    %v2348 = vunpack.c.h.b16 %v2051
    %v2349 = vunpack.c.l.b16 %v2052
    %v2350 = vunpack.c.h.b16 %v2052
    %v2351 = vunpack.c.l.b16 %v2053
    %v2352 = vunpack.c.h.b16 %v2053
    %v2353 = vunpack.c.l.b16 %v2054
    %v2354 = vunpack.c.h.b16 %v2054
    %v2355 = vunpack.c.l.b16 %v2055
    %v2356 = vunpack.c.h.b16 %v2055
    %v2357 = vunpack.c.l.b16 %v2056
    %v2358 = vunpack.c.h.b16 %v2056
    %v2359 = vunpack.c.l.b16 %v2057
    %v2360 = vunpack.c.h.b16 %v2057
    %v2361 = vunpack.c.l.b16 %v2058
    %v2362 = vunpack.c.h.b16 %v2058
    %v2363 = vunpack.c.l.b16 %v2059
    %v2364 = vunpack.c.h.b16 %v2059
    %v2365 = vunpack.c.l.b16 %v2060
    %v2366 = vunpack.c.h.b16 %v2060
    %v2367 = vunpack.c.l.b16 %v2061
    %v2368 = vunpack.c.h.b16 %v2061
    %v2369 = vunpack.c.l.b16 %v2062
    %v2370 = vunpack.c.h.b16 %v2062
    %v2371 = vunpack.c.l.b16 %v2063
    %v2372 = vunpack.c.h.b16 %v2063
    %v2373 = vunpack.c.l.b16 %v2064
    %v2374 = vunpack.c.h.b16 %v2064
    %v2375 = vunpack.c.l.b16 %v2065
    %v2376 = vunpack.c.h.b16 %v2065
    %v2377 = vunpack.c.l.b16 %v2066
    %v2378 = vunpack.c.h.b16 %v2066
    %v2379 = vunpack.c.l.b16 %v2067
    %v2380 = vunpack.c.h.b16 %v2067
    %v2381 = vunpack.c.l.b16 %v2068
    %v2382 = vunpack.c.h.b16 %v2068
    %v2383 = vunpack.c.l.b16 %v2069
    %v2384 = vunpack.c.h.b16 %v2069
    %v2385 = vunpack.c.l.b16 %v2070
    %v2386 = vunpack.c.h.b16 %v2070
    %v2387 = vunpack.c.l.b16 %v2071
    %v2388 = vunpack.c.h.b16 %v2071
    %v2389 = vunpack.c.l.b16 %v2072
    %v2390 = vunpack.c.h.b16 %v2072
    %v2391 = vunpack.c.l.b16 %v2073
    %v2392 = vunpack.c.h.b16 %v2073
    %v2393 = vunpack.c.l.b16 %v2074
    %v2394 = vunpack.c.h.b16 %v2074
    %v2395 = vunpack.c.l.b16 %v2075
    %v2396 = vunpack.c.h.b16 %v2075
    %v2397 = vunpack.c.l.b16 %v2076
    %v2398 = vunpack.c.h.b16 %v2076
    %v2399 = vunpack.c.l.b16 %v2077
    %v2400 = vunpack.c.h.b16 %v2077
    %v2401 = vunpack.c.l.b16 %v2078
    %v2402 = vunpack.c.h.b16 %v2078
    %v2403 = vunpack.c.l.b16 %v2079
    %v2404 = vunpack.c.h.b16 %v2079
    %v2405 = vunpack.c.l.b16 %v2080
    %v2406 = vunpack.c.h.b16 %v2080
    %v2407 = vunpack.c.l.b16 %v2081
    %v2408 = vunpack.c.h.b16 %v2081
    %v2409 = vunpack.c.l.b16 %v2082
    %v2410 = vunpack.c.h.b16 %v2082
    %v2411 = vunpack.c.l.b16 %v2083
    %v2412 = vunpack.c.h.b16 %v2083
    %v2413 = vunpack.c.l.b16 %v2084
    %v2414 = vunpack.c.h.b16 %v2084
    %v2415 = vunpack.c.l.b16 %v2085
    %v2416 = vunpack.c.h.b16 %v2085
    %v2417 = vunpack.c.l.b16 %v2086
    %v2418 = vunpack.c.h.b16 %v2086
    %v2419 = vunpack.c.l.b16 %v2087
    %v2420 = vunpack.c.h.b16 %v2087
    %v2421 = vunpack.c.l.b16 %v2088
    %v2422 = vunpack.c.h.b16 %v2088
    %v2423 = vunpack.c.l.b16 %v2089
    %v2424 = vunpack.c.h.b16 %v2089
    %v2425 = vunpack.c.l.b16 %v2090
    %v2426 = vunpack.c.h.b16 %v2090
    %v2427 = vunpack.c.l.b16 %v2091
    %v2428 = vunpack.c.h.b16 %v2091
    %v2429 = vunpack.c.l.b16 %v2092
    %v2430 = vunpack.c.h.b16 %v2092
    %v2431 = vunpack.c.l.b16 %v2093
    %v2432 = vunpack.c.h.b16 %v2093
    %v2433 = vunpack.c.l.b16 %v2094
    %v2434 = vunpack.c.h.b16 %v2094
    %v2435 = vunpack.c.l.b16 %v2095
    %v2436 = vunpack.c.h.b16 %v2095
    %v2437 = vunpack.c.l.b16 %v2096
    %v2438 = vunpack.c.h.b16 %v2096
    %v2439 = vunpack.c.l.b16 %v2097
    %v2440 = vunpack.c.h.b16 %v2097
    %v2441 = vunpack.c.l.b16 %v2098
    %v2442 = vunpack.c.h.b16 %v2098
    %v2443 = vunpack.c.l.b16 %v2099
    %v2444 = vunpack.c.h.b16 %v2099
    %v2445 = vunpack.c.l.b16 %v2100
    %v2446 = vunpack.c.h.b16 %v2100
    %v2447 = vunpack.c.l.b16 %v2101
    %v2448 = vunpack.c.h.b16 %v2101
    %v2449 = vunpack.c.l.b16 %v2102
    %v2450 = vunpack.c.h.b16 %v2102
    %v2451 = vunpack.c.l.b16 %v2103
    %v2452 = vunpack.c.h.b16 %v2103
    %v2453 = vunpack.c.l.b16 %v2104
    %v2454 = vunpack.c.h.b16 %v2104
    %v2455 = vunpack.c.l.b16 %v2105
    %v2456 = vunpack.c.h.b16 %v2105
    %v2457 = vunpack.c.l.b16 %v2106
    %v2458 = vunpack.c.h.b16 %v2106
    %v2459 = vunpack.c.l.b16 %v2107
    %v2460 = vunpack.c.h.b16 %v2107
    %v2461 = vunpack.c.l.b16 %v2108
    %v2462 = vunpack.c.h.b16 %v2108
    %v2463 = vunpack.c.l.b16 %v2109
    %v2464 = vunpack.c.h.b16 %v2109
    %v2465 = vunpack.c.l.b16 %v2110
    %v2466 = vunpack.c.h.b16 %v2110
    %v2467 = vunpack.c.l.b16 %v2111
    %v2468 = vunpack.c.h.b16 %v2111
    %v2469 = vunpack.c.l.b16 %v2112
    %v2470 = vunpack.c.h.b16 %v2112
    %v2471 = vunpack.c.l.b16 %v2113
    %v2472 = vunpack.c.h.b16 %v2113
    %v2473 = vunpack.c.l.b16 %v2114
    %v2474 = vunpack.c.h.b16 %v2114
    %v2475 = vunpack.c.l.b16 %v2115
    %v2476 = vunpack.c.h.b16 %v2115
    %v2477 = vunpack.c.l.b16 %v2116
    %v2478 = vunpack.c.h.b16 %v2116
    %v2479 = vunpack.c.l.b16 %v2117
    %v2480 = vunpack.c.h.b16 %v2117
    %v2481 = vunpack.c.l.b16 %v2118
    %v2482 = vunpack.c.h.b16 %v2118
    %v2483 = vunpack.c.l.b16 %v2119
    %v2484 = vunpack.c.h.b16 %v2119
    %v2485 = vunpack.c.l.b16 %v2120
    %v2486 = vunpack.c.h.b16 %v2120
    %v2487 = vunpack.c.l.b16 %v2121
    %v2488 = vunpack.c.h.b16 %v2121
    %v2489 = vunpack.c.l.b16 %v2122
    %v2490 = vunpack.c.h.b16 %v2122
    %v2491 = vunpack.c.l.b16 %v2123
    %v2492 = vunpack.c.h.b16 %v2123
    %v2493 = vunpack.c.l.b16 %v2124
    %v2494 = vunpack.c.h.b16 %v2124
    %v2495 = vunpack.c.l.b16 %v2125
    %v2496 = vunpack.c.h.b16 %v2125
    %v2497 = vunpack.c.l.b16 %v2126
    %v2498 = vunpack.c.h.b16 %v2126
    %v2499 = vunpack.c.l.b16 %v2127
    %v2500 = vunpack.c.h.b16 %v2127
    %v2501 = vunpack.c.l.b16 %v2128
    %v2502 = vunpack.c.h.b16 %v2128
    %v2503 = vunpack.c.l.b16 %v2129
    %v2504 = vunpack.c.h.b16 %v2129
    %v2505 = vunpack.c.l.b16 %v2130
    %v2506 = vunpack.c.h.b16 %v2130
    %v2507 = vunpack.c.l.b16 %v2131
    %v2508 = vunpack.c.h.b16 %v2131
    %v2509 = vunpack.c.l.b16 %v2132
    %v2510 = vunpack.c.h.b16 %v2132
    %v2511 = vunpack.c.l.b16 %v2133
    %v2512 = vunpack.c.h.b16 %v2133
    %v2513 = vunpack.c.l.b16 %v2134
    %v2514 = vunpack.c.h.b16 %v2134
    %v2515 = vunpack.c.l.b16 %v2135
    %v2516 = vunpack.c.h.b16 %v2135
    %v2517 = vunpack.c.l.b16 %v2136
    %v2518 = vunpack.c.h.b16 %v2136
    %v2519 = vunpack.c.l.b16 %v2137
    %v2520 = vunpack.c.h.b16 %v2137
    %v2521 = vunpack.c.l.b16 %v2138
    %v2522 = vunpack.c.h.b16 %v2138
    %v2523 = vunpack.c.l.b16 %v2139
    %v2524 = vunpack.c.h.b16 %v2139
    %v2525 = vunpack.c.l.b16 %v2140
    %v2526 = vunpack.c.h.b16 %v2140
    %v2527 = vunpack.c.l.b16 %v2141
    %v2528 = vunpack.c.h.b16 %v2141
    %v2529 = vunpack.c.l.b16 %v2142
    %v2530 = vunpack.c.h.b16 %v2142
    %v2531 = vunpack.c.l.b16 %v2143
    %v2532 = vunpack.c.h.b16 %v2143
    %v2533 = vunpack.c.l.b16 %v2144
    %v2534 = vunpack.c.h.b16 %v2144
    %v2535 = vunpack.c.l.b16 %v2145
    %v2536 = vunpack.c.h.b16 %v2145
    %v2537 = vunpack.c.l.b16 %v2146
    %v2538 = vunpack.c.h.b16 %v2146
    %v2539 = vunpack.c.l.b16 %v2147
    %v2540 = vunpack.c.h.b16 %v2147
    %v2541 = vunpack.c.l.b16 %v2148
    %v2542 = vunpack.c.h.b16 %v2148
    %v2543 = vunpack.c.l.b16 %v2149
    %v2544 = vunpack.c.h.b16 %v2149
    %v2545 = vunpack.c.l.b16 %v2150
    %v2546 = vunpack.c.h.b16 %v2150
    %v2547 = vunpack.c.l.b16 %v2151
    %v2548 = vunpack.c.h.b16 %v2151
    %v2549 = vunpack.c.l.b16 %v2152
    %v2550 = vunpack.c.h.b16 %v2152
    %v2551 = vunpack.c.l.b16 %v2153
    %v2552 = vunpack.c.h.b16 %v2153
    %v2553 = vunpack.c.l.b16 %v2154
    %v2554 = vunpack.c.h.b16 %v2154
    %v2555 = vunpack.c.l.b16 %v2155
    %v2556 = vunpack.c.h.b16 %v2155
    %v2557 = vunpack.c.l.b16 %v2156
    %v2558 = vunpack.c.h.b16 %v2156
    %v2559 = vunpack.c.l.b16 %v2157
    %v2560 = vunpack.c.h.b16 %v2157
    %v2561 = vunpack.c.l.b16 %v2158
    %v2562 = vunpack.c.h.b16 %v2158
    %v2563 = vunpack.c.l.b16 %v2159
    %v2564 = vunpack.c.h.b16 %v2159
    %v2565 = vunpack.c.l.b16 %v2160
    %v2566 = vunpack.c.h.b16 %v2160
    %v2567 = vunpack.c.l.b16 %v2161
    %v2568 = vunpack.c.h.b16 %v2161
    %v2569 = vpack.c.b16 %v2317, %v2313
    %v2570 = vpack.c.b16 %v2318, %v2314
    %v2571 = vpack.c.b16 %v2319, %v2315
    %v2572 = vpack.c.b16 %v2320, %v2316
    %v2573 = vpack.c.b16 %v2325, %v2321
    %v2574 = vpack.c.b16 %v2326, %v2322
    %v2575 = vpack.c.b16 %v2327, %v2323
    %v2576 = vpack.c.b16 %v2328, %v2324
    %v2577 = vpack.c.b16 %v2333, %v2329
    %v2578 = vpack.c.b16 %v2334, %v2330
    %v2579 = vpack.c.b16 %v2335, %v2331
    %v2580 = vpack.c.b16 %v2336, %v2332
    %v2581 = vpack.c.b16 %v2341, %v2337
    %v2582 = vpack.c.b16 %v2342, %v2338
    %v2583 = vpack.c.b16 %v2343, %v2339
    %v2584 = vpack.c.b16 %v2344, %v2340
    %v2585 = vpack.c.b16 %v2349, %v2345
    %v2586 = vpack.c.b16 %v2350, %v2346
    %v2587 = vpack.c.b16 %v2351, %v2347
    %v2588 = vpack.c.b16 %v2352, %v2348
    %v2589 = vpack.c.b16 %v2357, %v2353
    %v2590 = vpack.c.b16 %v2358, %v2354
    %v2591 = vpack.c.b16 %v2359, %v2355
    %v2592 = vpack.c.b16 %v2360, %v2356
    %v2593 = vpack.c.b16 %v2365, %v2361
    %v2594 = vpack.c.b16 %v2366, %v2362
    %v2595 = vpack.c.b16 %v2367, %v2363
    %v2596 = vpack.c.b16 %v2368, %v2364
    %v2597 = vpack.c.b16 %v2373, %v2369
    %v2598 = vpack.c.b16 %v2374, %v2370
    %v2599 = vpack.c.b16 %v2375, %v2371
    %v2600 = vpack.c.b16 %v2376, %v2372
    %v2601 = vpack.c.b16 %v2381, %v2377
    %v2602 = vpack.c.b16 %v2382, %v2378
    %v2603 = vpack.c.b16 %v2383, %v2379
    %v2604 = vpack.c.b16 %v2384, %v2380
    %v2605 = vpack.c.b16 %v2389, %v2385
    %v2606 = vpack.c.b16 %v2390, %v2386
    %v2607 = vpack.c.b16 %v2391, %v2387
    %v2608 = vpack.c.b16 %v2392, %v2388
    %v2609 = vpack.c.b16 %v2397, %v2393
    %v2610 = vpack.c.b16 %v2398, %v2394
    %v2611 = vpack.c.b16 %v2399, %v2395
    %v2612 = vpack.c.b16 %v2400, %v2396
    %v2613 = vpack.c.b16 %v2405, %v2401
    %v2614 = vpack.c.b16 %v2406, %v2402
    %v2615 = vpack.c.b16 %v2407, %v2403
    %v2616 = vpack.c.b16 %v2408, %v2404
    %v2617 = vpack.c.b16 %v2413, %v2409
    %v2618 = vpack.c.b16 %v2414, %v2410
    %v2619 = vpack.c.b16 %v2415, %v2411
    %v2620 = vpack.c.b16 %v2416, %v2412
    %v2621 = vpack.c.b16 %v2421, %v2417
    %v2622 = vpack.c.b16 %v2422, %v2418
    %v2623 = vpack.c.b16 %v2423, %v2419
    %v2624 = vpack.c.b16 %v2424, %v2420
    %v2625 = vpack.c.b16 %v2429, %v2425
    %v2626 = vpack.c.b16 %v2430, %v2426
    %v2627 = vpack.c.b16 %v2431, %v2427
    %v2628 = vpack.c.b16 %v2432, %v2428
    %v2629 = vpack.c.b16 %v2437, %v2433
    %v2630 = vpack.c.b16 %v2438, %v2434
    %v2631 = vpack.c.b16 %v2439, %v2435
    %v2632 = vpack.c.b16 %v2440, %v2436
    %v2633 = vpack.c.b16 %v2445, %v2441
    %v2634 = vpack.c.b16 %v2446, %v2442
    %v2635 = vpack.c.b16 %v2447, %v2443
    %v2636 = vpack.c.b16 %v2448, %v2444
    %v2637 = vpack.c.b16 %v2453, %v2449
    %v2638 = vpack.c.b16 %v2454, %v2450
    %v2639 = vpack.c.b16 %v2455, %v2451
    %v2640 = vpack.c.b16 %v2456, %v2452
    %v2641 = vpack.c.b16 %v2461, %v2457
    %v2642 = vpack.c.b16 %v2462, %v2458
    %v2643 = vpack.c.b16 %v2463, %v2459
    %v2644 = vpack.c.b16 %v2464, %v2460
    %v2645 = vpack.c.b16 %v2469, %v2465
    %v2646 = vpack.c.b16 %v2470, %v2466
    %v2647 = vpack.c.b16 %v2471, %v2467
    %v2648 = vpack.c.b16 %v2472, %v2468
    %v2649 = vpack.c.b16 %v2477, %v2473
    %v2650 = vpack.c.b16 %v2478, %v2474
    %v2651 = vpack.c.b16 %v2479, %v2475
    %v2652 = vpack.c.b16 %v2480, %v2476
    %v2653 = vpack.c.b16 %v2485, %v2481
    %v2654 = vpack.c.b16 %v2486, %v2482
    %v2655 = vpack.c.b16 %v2487, %v2483
    %v2656 = vpack.c.b16 %v2488, %v2484
    %v2657 = vpack.c.b16 %v2493, %v2489
    %v2658 = vpack.c.b16 %v2494, %v2490
    %v2659 = vpack.c.b16 %v2495, %v2491
    %v2660 = vpack.c.b16 %v2496, %v2492
    %v2661 = vpack.c.b16 %v2501, %v2497
    %v2662 = vpack.c.b16 %v2502, %v2498
    %v2663 = vpack.c.b16 %v2503, %v2499
    %v2664 = vpack.c.b16 %v2504, %v2500
    %v2665 = vpack.c.b16 %v2509, %v2505
    %v2666 = vpack.c.b16 %v2510, %v2506
    %v2667 = vpack.c.b16 %v2511, %v2507
    %v2668 = vpack.c.b16 %v2512, %v2508
    %v2669 = vpack.c.b16 %v2517, %v2513
    %v2670 = vpack.c.b16 %v2518, %v2514
    %v2671 = vpack.c.b16 %v2519, %v2515
    %v2672 = vpack.c.b16 %v2520, %v2516
    %v2673 = vpack.c.b16 %v2525, %v2521
    %v2674 = vpack.c.b16 %v2526, %v2522
    %v2675 = vpack.c.b16 %v2527, %v2523
    %v2676 = vpack.c.b16 %v2528, %v2524
    %v2677 = vpack.c.b16 %v2533, %v2529
    %v2678 = vpack.c.b16 %v2534, %v2530
    %v2679 = vpack.c.b16 %v2535, %v2531
    %v2680 = vpack.c.b16 %v2536, %v2532
    %v2681 = vpack.c.b16 %v2541, %v2537
    %v2682 = vpack.c.b16 %v2542, %v2538
    %v2683 = vpack.c.b16 %v2543, %v2539
    %v2684 = vpack.c.b16 %v2544, %v2540
    %v2685 = vpack.c.b16 %v2549, %v2545
    %v2686 = vpack.c.b16 %v2550, %v2546
    %v2687 = vpack.c.b16 %v2551, %v2547
    %v2688 = vpack.c.b16 %v2552, %v2548
    %v2689 = vpack.c.b16 %v2557, %v2553
    %v2690 = vpack.c.b16 %v2558, %v2554
    %v2691 = vpack.c.b16 %v2559, %v2555
    %v2692 = vpack.c.b16 %v2560, %v2556
    %v2693 = vpack.c.b16 %v2565, %v2561
    %v2694 = vpack.c.b16 %v2566, %v2562
    %v2695 = vpack.c.b16 %v2567, %v2563
    %v2696 = vpack.c.b16 %v2568, %v2564
    %2825 = vmatprep.subr.bf16.mxu0 %v2598
    %2826 = vmatpush1.bf16.msra.mxu0 %v2597
    %2827 = vmatprep.subr.bf16.mxu0 %v2594
    %2828 = vmatpush1.bf16.msra.mxu0 %v2593
    %2829 = vmatprep.subr.bf16.mxu0 %v2590
    %2830 = vmatpush1.bf16.msra.mxu0 %v2589
    %2831 = vmatprep.subr.bf16.mxu0 %v2586
    %2832 = vmatpush1.bf16.msra.mxu0 %v2585
    %2833 = vmatprep.subr.bf16.mxu0 %v2582
    %2834 = vmatpush1.bf16.msra.mxu0 %v2581
    %2835 = vmatprep.subr.bf16.mxu0 %v2578
    %2836 = vmatpush1.bf16.msra.mxu0 %v2577
    %2837 = vmatprep.subr.bf16.mxu0 %v2574
    %2838 = vmatpush1.bf16.msra.mxu0 %v2573
    %2839 = vmatprep.subr.bf16.mxu0 %v2570
    %2840 = vmatpush1.bf16.msra.mxu0 %v2569
    %2841 = vmatprep.subr.bf16.mxu0 %v2630
    %2842 = vmatpush2.bf16.msra.mxu0 %v2629
    %2843 = vmatprep.subr.bf16.mxu0 %v2626
    %2844 = vmatpush2.bf16.msra.mxu0 %v2625
    %2845 = vmatprep.subr.bf16.mxu0 %v2622
    %2846 = vmatpush2.bf16.msra.mxu0 %v2621
    %2847 = vmatprep.subr.bf16.mxu0 %v2618
    %2848 = vmatpush2.bf16.msra.mxu0 %v2617
    %2849 = vmatprep.subr.bf16.mxu0 %v2614
    %2850 = vmatpush2.bf16.msra.mxu0 %v2613
    %2851 = vmatprep.subr.bf16.mxu0 %v2610
    %2852 = vmatpush2.bf16.msra.mxu0 %v2609
    %2853 = vmatprep.subr.bf16.mxu0 %v2606
    %2854 = vmatpush2.bf16.msra.mxu0 %v2605
    %2855 = vmatprep.subr.bf16.mxu0 %v2602
    %2856 = vmatpush2.bf16.msra.mxu0 %v2601
    %2857 = vmatprep.mubr.bf16.mxu0 %v2031
    %2858 = vmatmul.mubr.bf16.gmra.mxu0 %v2030
    %v2859 = vpop.f32.mrf.mxu0
    %v2860 = vadd.f32 %v2168, %v2859
    %v2861 = vpop.f32.mrf.mxu0
    %v2862 = vadd.f32 %v2172, %v2861
    %v2863 = vpop.f32.mrf.mxu0
    %v2864 = vpop.f32.mrf.mxu0
    %2865 = vdwg.mxu0
    %2866 = vmatprep.subr.bf16.mxu0 %v2662
    %2867 = vmatpush1.bf16.msra.mxu0 %v2661
    %2868 = vmatprep.subr.bf16.mxu0 %v2658
    %2869 = vmatpush1.bf16.msra.mxu0 %v2657
    %2870 = vmatprep.subr.bf16.mxu0 %v2654
    %2871 = vmatpush1.bf16.msra.mxu0 %v2653
    %2872 = vmatprep.subr.bf16.mxu0 %v2650
    %2873 = vmatpush1.bf16.msra.mxu0 %v2649
    %2874 = vmatprep.subr.bf16.mxu0 %v2646
    %2875 = vmatpush1.bf16.msra.mxu0 %v2645
    %2876 = vmatprep.subr.bf16.mxu0 %v2642
    %2877 = vmatpush1.bf16.msra.mxu0 %v2641
    %2878 = vmatprep.subr.bf16.mxu0 %v2638
    %2879 = vmatpush1.bf16.msra.mxu0 %v2637
    %2880 = vmatprep.subr.bf16.mxu0 %v2634
    %2881 = vmatpush1.bf16.msra.mxu0 %v2633
    %2882 = vmatprep.subr.bf16.mxu0 %v2694
    %2883 = vmatpush2.bf16.msra.mxu0 %v2693
    %2884 = vmatprep.subr.bf16.mxu0 %v2690
    %2885 = vmatpush2.bf16.msra.mxu0 %v2689
    %2886 = vmatprep.subr.bf16.mxu0 %v2686
    %2887 = vmatpush2.bf16.msra.mxu0 %v2685
    %2888 = vmatprep.subr.bf16.mxu0 %v2682
    %2889 = vmatpush2.bf16.msra.mxu0 %v2681
    %2890 = vmatprep.subr.bf16.mxu0 %v2678
    %2891 = vmatpush2.bf16.msra.mxu0 %v2677
    %2892 = vmatprep.subr.bf16.mxu0 %v2674
    %2893 = vmatpush2.bf16.msra.mxu0 %v2673
    %2894 = vmatprep.subr.bf16.mxu0 %v2670
    %2895 = vmatpush2.bf16.msra.mxu0 %v2669
    %2896 = vmatprep.subr.bf16.mxu0 %v2666
    %2897 = vmatpush2.bf16.msra.mxu0 %v2665
    %2898 = vmatprep.mubr.bf16.mxu0 %v2033
    %2899 = vmatmul.mubr.bf16.gmra.mxu0 %v2032
    %v2900 = vpop.f32.mrf.mxu0
    %v2901 = vadd.f32 %v2860, %v2900
    %v2902 = vpop.f32.mrf.mxu0
    %v2903 = vadd.f32 %v2862, %v2902
    %v2904 = vpop.f32.mrf.mxu0
    %v2905 = vpop.f32.mrf.mxu0
    %2906 = vdwg.mxu0
    %2907 = vmatprep.subr.bf16.mxu0 %v2600
    %2908 = vmatpush1.bf16.msra.mxu0 %v2599
    %2909 = vmatprep.subr.bf16.mxu0 %v2596
    %2910 = vmatpush1.bf16.msra.mxu0 %v2595
    %2911 = vmatprep.subr.bf16.mxu0 %v2592
    %2912 = vmatpush1.bf16.msra.mxu0 %v2591
    %2913 = vmatprep.subr.bf16.mxu0 %v2588
    %2914 = vmatpush1.bf16.msra.mxu0 %v2587
    %2915 = vmatprep.subr.bf16.mxu0 %v2584
    %2916 = vmatpush1.bf16.msra.mxu0 %v2583
    %2917 = vmatprep.subr.bf16.mxu0 %v2580
    %2918 = vmatpush1.bf16.msra.mxu0 %v2579
    %2919 = vmatprep.subr.bf16.mxu0 %v2576
    %2920 = vmatpush1.bf16.msra.mxu0 %v2575
    %2921 = vmatprep.subr.bf16.mxu0 %v2572
    %2922 = vmatpush1.bf16.msra.mxu0 %v2571
    %2923 = vmatprep.subr.bf16.mxu0 %v2632
    %2924 = vmatpush2.bf16.msra.mxu0 %v2631
    %2925 = vmatprep.subr.bf16.mxu0 %v2628
    %2926 = vmatpush2.bf16.msra.mxu0 %v2627
    %2927 = vmatprep.subr.bf16.mxu0 %v2624
    %2928 = vmatpush2.bf16.msra.mxu0 %v2623
    %2929 = vmatprep.subr.bf16.mxu0 %v2620
    %2930 = vmatpush2.bf16.msra.mxu0 %v2619
    %2931 = vmatprep.subr.bf16.mxu0 %v2616
    %2932 = vmatpush2.bf16.msra.mxu0 %v2615
    %2933 = vmatprep.subr.bf16.mxu0 %v2612
    %2934 = vmatpush2.bf16.msra.mxu0 %v2611
    %2935 = vmatprep.subr.bf16.mxu0 %v2608
    %2936 = vmatpush2.bf16.msra.mxu0 %v2607
    %2937 = vmatprep.subr.bf16.mxu0 %v2604
    %2938 = vmatpush2.bf16.msra.mxu0 %v2603
    %2939 = vmatprep.mubr.bf16.mxu0 %v2031
    %2940 = vmatmul.mubr.bf16.gmra.mxu0 %v2030
    %v2941 = vpop.f32.mrf.mxu0
    %v2942 = vadd.f32 %v2176, %v2941
    %v2943 = vpop.f32.mrf.mxu0
    %v2944 = vadd.f32 %v2180, %v2943
    %v2945 = vpop.f32.mrf.mxu0
    %v2946 = vpop.f32.mrf.mxu0
    %2947 = vdwg.mxu0
    %2948 = vmatprep.subr.bf16.mxu0 %v2664
    %2949 = vmatpush1.bf16.msra.mxu0 %v2663
    %2950 = vmatprep.subr.bf16.mxu0 %v2660
    %2951 = vmatpush1.bf16.msra.mxu0 %v2659
    %2952 = vmatprep.subr.bf16.mxu0 %v2656
    %2953 = vmatpush1.bf16.msra.mxu0 %v2655
    %2954 = vmatprep.subr.bf16.mxu0 %v2652
    %2955 = vmatpush1.bf16.msra.mxu0 %v2651
    %2956 = vmatprep.subr.bf16.mxu0 %v2648
    %2957 = vmatpush1.bf16.msra.mxu0 %v2647
    %2958 = vmatprep.subr.bf16.mxu0 %v2644
    %2959 = vmatpush1.bf16.msra.mxu0 %v2643
    %2960 = vmatprep.subr.bf16.mxu0 %v2640
    %2961 = vmatpush1.bf16.msra.mxu0 %v2639
    %2962 = vmatprep.subr.bf16.mxu0 %v2636
    %2963 = vmatpush1.bf16.msra.mxu0 %v2635
    %2964 = vmatprep.subr.bf16.mxu0 %v2696
    %2965 = vmatpush2.bf16.msra.mxu0 %v2695
    %2966 = vmatprep.subr.bf16.mxu0 %v2692
    %2967 = vmatpush2.bf16.msra.mxu0 %v2691
    %2968 = vmatprep.subr.bf16.mxu0 %v2688
    %2969 = vmatpush2.bf16.msra.mxu0 %v2687
    %2970 = vmatprep.subr.bf16.mxu0 %v2684
    %2971 = vmatpush2.bf16.msra.mxu0 %v2683
    %2972 = vmatprep.subr.bf16.mxu0 %v2680
    %2973 = vmatpush2.bf16.msra.mxu0 %v2679
    %2974 = vmatprep.subr.bf16.mxu0 %v2676
    %2975 = vmatpush2.bf16.msra.mxu0 %v2675
    %2976 = vmatprep.subr.bf16.mxu0 %v2672
    %2977 = vmatpush2.bf16.msra.mxu0 %v2671
    %2978 = vmatprep.subr.bf16.mxu0 %v2668
    %2979 = vmatpush2.bf16.msra.mxu0 %v2667
    %2980 = vmatprep.mubr.bf16.mxu0 %v2033
    %2981 = vmatmul.mubr.bf16.gmra.mxu0 %v2032
    %v2982 = vpop.f32.mrf.mxu0
    %v2983 = vadd.f32 %v2942, %v2982
    %v2984 = vpop.f32.mrf.mxu0
    %v2985 = vadd.f32 %v2944, %v2984
    %v2986 = vpop.f32.mrf.mxu0
    %v2987 = vpop.f32.mrf.mxu0
    %2988 = vdwg.mxu0
    %v2989 = vmax.f32 %v2901, 0.0
    %v2990 = vmax.f32 %v2903, 0.0
    %v2991 = vmax.f32 %v2983, 0.0
    %v2992 = vmax.f32 %v2985, 0.0
    %2993 = vst [vmem:[#allocation11] sm:$0xff] %v2989
    %2994 = vst [vmem:[#allocation11 + $0x8] sm:$0xff] %v2990
    %2995 = vst [vmem:[#allocation11 + $0x10] sm:$0xff] %v2991
    %2996 = vst [vmem:[#allocation11 + $0x18] sm:$0xff] %v2992
    // Predicated region
    $region42: #{tpu_custom_call.1} parent=1 // pred_check
      _
    $region43: #{tpu_custom_call.1} parent=1 // pred_check_branch
      %2998 = sbr.rel (0) target = $region45
    $region44: #{tpu_custom_call.1} parent=1 // pred_region
      %s3000 = ssub.s32 512, 512
      %3001 = vsyncadd [#allocation4], %s3000
      %s3003 = sshll.u32 [#allocation11], 4
      %s3004 = int_to_ptr.vmem [resolvable:$true] %s3003
      %3006 = dma.vmem_to_hbm [thread:$0]  %s3004, 512, %s5, [#allocation4]
    $region45: #{tpu_custom_call.1} parent=1 // pred_fallthru
      _
    // Predicated region
    $region46: #{tpu_custom_call.1} parent=1 // pred_check
      _
    $region47: #{tpu_custom_call.1} parent=1 // pred_check_branch
      %3008 = sbr.rel (0) target = $region49
    $region48: #{tpu_custom_call.1} parent=1 // pred_region
      %3009 = dma.done [#allocation4], 512
    $region49: #{tpu_custom_call.1} parent=1 // pred_fallthru
      _
    %3010 = vsyncpa [#allocation3], 1
    %3011 = vsyncpa [#allocation6], 1
    %3012 = vsyncpa [#allocation9], 1
    %3013 = vsyncpa [#allocation4], 1

</llo_original>
